<compile_context>
chip_gen: v6e
topology: v6e:2x2x1
jax: 0.10.0
libtpu: 0.0.40
codegen_flags: <defaults>
</compile_context>

<pallas_src>
import math
import jax
import jax.numpy as jnp
from jax.experimental import pallas as pl
from jax.experimental.pallas import tpu as pltpu


def _round_up(v, m):
    return ((v + m - 1) // m) * m


# ----------------------------- Pallas kernel -----------------------------

def _make_mlp_kernel(n_layers, compute_dtype):
    """Kernel refs: (x, w0, b0, ..., w{n-1}, b{n-1}, outnorms, out)."""

    def kernel(*refs):
        x_ref = refs[0]
        on_ref = refs[1 + 2 * n_layers]
        o_ref = refs[2 + 2 * n_layers]

        h = x_ref[...]                                    # compute_dtype (bf16)
        for l in range(n_layers):
            w_ref = refs[1 + 2 * l]
            b_ref = refs[2 + 2 * l]
            # MXU matmul, f32 accumulation; bias add in f32.
            h = jnp.dot(h, w_ref[...], preferred_element_type=jnp.float32)
            h = h + b_ref[...]
            if l < n_layers - 1:
                h = jnp.maximum(h, 0.0).astype(compute_dtype)
        o_ref[...] = (on_ref[...] * h).astype(o_ref.dtype)

    return kernel


# ----------------------- one-time parameter preparation -------------------

def prepare_mlp_normed_params(weights, biases, outnorms, *,
                              lane=128, compute_dtype=jnp.bfloat16):
    """Hoisted glue: transpose weights to [D_in, D_out], zero-pad hidden and
    output feature dims to multiples of 128 (lane-dense), cast weights to the
    matmul compute dtype.  Biases / outnorms stay f32 and are reshaped to
    [1, D_out] for lane broadcasting.  Do this ONCE, not per forward."""
    d_out_true = int(weights[-1].shape[0])
    wts, bts = [], []
    prev_out_p = None
    for i, (w, b) in enumerate(zip(weights, biases)):
        w = jnp.asarray(w, jnp.float32)
        b = jnp.asarray(b, jnp.float32)
        d_out_i, d_in_i = w.shape
        # layer 0 keeps the raw input width (avoids a per-call pad of x);
        # subsequent layers match the previous layer's padded output width.
        in_p = d_in_i if i == 0 else prev_out_p
        out_p = _round_up(d_out_i, lane)
        wt = jnp.zeros((in_p, out_p), jnp.float32).at[:d_in_i, :d_out_i].set(w.T)
        bt = jnp.zeros((1, out_p), jnp.float32).at[:, :d_out_i].set(b)
        wts.append(wt.astype(compute_dtype))
        bts.append(bt)
        prev_out_p = out_p
    on = jnp.zeros((1, prev_out_p), jnp.float32).at[:, :d_out_true].set(
        jnp.asarray(outnorms, jnp.float32))
    return dict(weights=tuple(wts), biases=tuple(bts), outnorms=on,
                d_out=d_out_true, compute_dtype=compute_dtype)


# ------------------------------- forward ---------------------------------

def mlp_normed_forward(x, params, *, block_b=256):
    """x: [B, D_in] f32 (or bf16).  params: output of prepare_mlp_normed_params."""
    B, d_in = x.shape
    wts, bts = params["weights"], params["biases"]
    on = params["outnorms"]
    d_out_true = params["d_out"]
    cdt = params["compute_dtype"]
    n_layers = len(wts)
    assert wts[0].shape[0] == d_in, "input feature dim mismatch"

    d_out_p = wts[-1].shape[1]
    out_dtype = x.dtype

    # Batch tile: prefer 128-multiples (full MXU rows), never exceed the
    # (rounded) batch, always a multiple of 8 (sublane constraint).
    block_b = max(8, min(int(block_b), _round_up(B, 8)))
    if B >= 128:
        block_b = _round_up(block_b, 128)
    else:
        block_b = _round_up(block_b, 8)

    # Cast once in the wrapper (halves the x DMA volume into the kernel).
    xc = x if x.dtype == cdt else x.astype(cdt)

    grid = (pl.cdiv(B, block_b),)

    in_specs = [pl.BlockSpec((block_b, d_in), lambda i: (i, 0))]
    for w, b in zip(wts, bts):
        in_specs.append(pl.BlockSpec(w.shape, lambda i: (0, 0)))
        in_specs.append(pl.BlockSpec(b.shape, lambda i: (0, 0)))
    in_specs.append(pl.BlockSpec(on.shape, lambda i: (0, 0)))
    out_specs = pl.BlockSpec((block_b, d_out_p), lambda i: (i, 0))

    # Advisory cost estimate for the XLA scheduler.
    flops = 2 * B * sum(int(w.shape[0]) * int(w.shape[1]) for w in wts)
    param_bytes = (sum(int(w.size) * w.dtype.itemsize for w in wts)
                   + sum(int(b.size) * b.dtype.itemsize for b in bts)
                   + int(on.size) * on.dtype.itemsize)
    bytes_accessed = (int(xc.size) * xc.dtype.itemsize
                      + B * d_out_p * jnp.dtype(out_dtype).itemsize
                      + param_bytes)
    cost = pl.CostEstimate(flops=flops, transcendentals=0,
                           bytes_accessed=bytes_accessed)

    # VMEM budget: double-buffered x/out tiles + resident params.  Only raise
    # the scoped limit when the tile actually needs it (keeps v5e/v7x happy).
    vmem_est = (2 * block_b * d_in * xc.dtype.itemsize
                + 2 * block_b * d_out_p * jnp.dtype(out_dtype).itemsize
                + param_bytes)
    vmem_limit = None
    if vmem_est > (12 << 20):
        vmem_limit = min(int(vmem_est * 3 // 2) + (2 << 20), 56 << 20)

    compiler_params = pltpu.CompilerParams(
        dimension_semantics=("parallel",),
        vmem_limit_bytes=vmem_limit,
    )

    args = [xc]
    for w, b in zip(wts, bts):
        args.extend([w, b])
    args.append(on)

    out_padded = pl.pallas_call(
        _make_mlp_kernel(n_layers, cdt),
        out_shape=jax.ShapeDtypeStruct((B, d_out_p), out_dtype),
        grid=grid,
        in_specs=in_specs,
        out_specs=out_specs,
        compiler_params=compiler_params,
        cost_estimate=cost,
    )(*args)

    # Lane-dense kernel output, true width sliced out as free XLA glue.
    return out_padded[:, :d_out_true]


# ----------------------- parameter init (plain JAX glue) -----------------

def init_mlp_normed_params(key, dims, own_norm, outnorm_init=1.0):
    """Replicates MLP_normed.__init__ (bubble=True): nn.Linear-style init,
    then the bubbling normalize() pass (init-time only, not part of forward)."""
    ws, bs = [], []
    for i in range(len(dims) - 1):
        key, kw, kb = jax.random.split(key, 3)
        bound = 1.0 / math.sqrt(dims[i])  # PyTorch nn.Linear default init
        w = jax.random.uniform(kw, (dims[i + 1], dims[i]), jnp.float32, -bound, bound)
        b = jax.random.uniform(kb, (dims[i + 1],), jnp.float32, -bound, bound)
        ws.append(w)
        bs.append(b)

    # normalize(own_norm, bubble=True), as run inside __init__
    old_norms = None
    for i in range(len(ws)):
        w, b = ws[i], bs[i]
        if old_norms is not None:
            w = w * old_norms.T                       # [D_out_prev,1] -> [1, D_in]
        normlist = (1.0 / own_norm[i]) * jnp.linalg.norm(w, axis=-1, keepdims=True) + 1e-10
        w = w / normlist
        b = b / jnp.squeeze(normlist)
        ws[i], bs[i] = w, b
        old_norms = normlist

    outnorms = outnorm_init * jnp.ones((dims[-1],), jnp.float32) * jnp.squeeze(old_norms)
    return ws, bs, outnorms


def mlp_normed_reference(x, weights, biases, outnorms, *, bf16_matmul=False):
    h = x
    n = len(weights)
    for i, (w, b) in enumerate(zip(weights, biases)):
        if bf16_matmul:
            h = jnp.dot(h.astype(jnp.bfloat16), w.T.astype(jnp.bfloat16),
                        preferred_element_type=jnp.float32) + b
        else:
            h = h @ w.T + b
        if i < n - 1:
            h = jnp.maximum(h, 0.0)
    return outnorms * h


# --------------------------------- main -----------------------------------

if __name__ == "__main__":
    dims = [784, 256, 64, 64, 62]
    own_norm = [math.sqrt(3)] + 3 * [math.sqrt(2)]
    batch = 512           # two 256-row grid blocks -> both v7x TCs get work
    block_b = 256

    key = jax.random.PRNGKey(0)
    key, kparam, kx = jax.random.split(key, 3)

    weights, biases, outnorms = init_mlp_normed_params(
        kparam, dims, own_norm, outnorm_init=1.0)
    x = jax.random.normal(kx, (batch, dims[0]), dtype=jnp.float32)

    # Hoisted one-time prep (transpose / pad / bf16-cast of weights).
    params = prepare_mlp_normed_params(weights, biases, outnorms)

    out = mlp_normed_forward(x, params, block_b=block_b)
    out = jax.block_until_ready(out)
    assert out.shape == (batch, dims[-1])

    # Tight check against a reference that mimics the bf16-matmul / f32-acc
    # numerics of the kernel.
    ref_bf16 = mlp_normed_reference(x, weights, biases, outnorms, bf16_matmul=True)
    assert jnp.allclose(out, ref_bf16, atol=2e-3, rtol=2e-3), \
        "mismatch vs. bf16-matmul reference"

    # Loose sanity check against the full-f32 reference (bf16 precision only).
    ref_f32 = mlp_normed_reference(x, weights, biases, outnorms, bf16_matmul=False)
    scale = float(jnp.maximum(jnp.max(jnp.abs(ref_f32)), 1.0))
    assert float(jnp.max(jnp.abs(out - ref_f32))) <= 5e-2 * scale, \
        "mismatch vs. f32 reference beyond bf16 tolerance"

    print("KERNEL_OK")
</pallas_src>

<mosaic_0001>
module attributes {stable_mosaic.version = 11 : i64} {
  func.func @kernel(%arg0: i32, %arg1: memref<256x784xbf16, #tpu.memory_space<vmem>>, %arg2: memref<784x256xbf16, #tpu.memory_space<vmem>>, %arg3: memref<1x256xf32, #tpu.memory_space<vmem>>, %arg4: memref<256x128xbf16, #tpu.memory_space<vmem>>, %arg5: memref<1x128xf32, #tpu.memory_space<vmem>>, %arg6: memref<128x128xbf16, #tpu.memory_space<vmem>>, %arg7: memref<1x128xf32, #tpu.memory_space<vmem>>, %arg8: memref<128x128xbf16, #tpu.memory_space<vmem>>, %arg9: memref<1x128xf32, #tpu.memory_space<vmem>>, %arg10: memref<1x128xf32, #tpu.memory_space<vmem>>, %arg11: memref<256x128xf32, #tpu.memory_space<vmem>>) attributes {dimension_semantics = [#tpu.dimension_semantics<parallel>], iteration_bounds = array<i64: 2>, scalar_prefetch = 0 : i64, scratch_operands = 0 : i64, tpu.core_type = #tpu.core_type<tc>, window_params = [{transform_indices = @transform_0, window_bounds = array<i64: 256, 784>}, {pipeline_mode = #tpu.pipeline_mode<synchronous>, transform_indices = @transform_1, window_bounds = array<i64: 784, 256>}, {pipeline_mode = #tpu.pipeline_mode<synchronous>, transform_indices = @transform_2, window_bounds = array<i64: 1, 256>}, {pipeline_mode = #tpu.pipeline_mode<synchronous>, transform_indices = @transform_3, window_bounds = array<i64: 256, 128>}, {pipeline_mode = #tpu.pipeline_mode<synchronous>, transform_indices = @transform_4, window_bounds = array<i64: 1, 128>}, {pipeline_mode = #tpu.pipeline_mode<synchronous>, transform_indices = @transform_5, window_bounds = array<i64: 128, 128>}, {pipeline_mode = #tpu.pipeline_mode<synchronous>, transform_indices = @transform_6, window_bounds = array<i64: 1, 128>}, {pipeline_mode = #tpu.pipeline_mode<synchronous>, transform_indices = @transform_7, window_bounds = array<i64: 128, 128>}, {pipeline_mode = #tpu.pipeline_mode<synchronous>, transform_indices = @transform_8, window_bounds = array<i64: 1, 128>}, {pipeline_mode = #tpu.pipeline_mode<synchronous>, transform_indices = @transform_9, window_bounds = array<i64: 1, 128>}, {transform_indices = @transform_10, window_bounds = array<i64: 256, 128>}]} {
    %c0 = arith.constant 0 : index
    %c0_0 = arith.constant 0 : index
    %0 = vector.load %arg1[%c0, %c0_0] : memref<256x784xbf16, #tpu.memory_space<vmem>>, vector<256x784xbf16>
    %c0_1 = arith.constant 0 : index
    %c0_2 = arith.constant 0 : index
    %1 = vector.load %arg2[%c0_1, %c0_2] : memref<784x256xbf16, #tpu.memory_space<vmem>>, vector<784x256xbf16>
    %cst = arith.constant dense<0.000000e+00> : vector<256x256xf32>
    %2 = tpu.matmul %0, %1, %cst {dimension_numbers = #tpu.dot_dimension_numbers<[1], [0], [0], [1], [0, 0, 1, 1], [], []>} : vector<256x784xbf16>, vector<784x256xbf16>, vector<256x256xf32> -> vector<256x256xf32>
    %c0_3 = arith.constant 0 : index
    %c0_4 = arith.constant 0 : index
    %3 = vector.load %arg3[%c0_3, %c0_4] : memref<1x256xf32, #tpu.memory_space<vmem>>, vector<1x256xf32>
    %4 = vector.broadcast %3 : vector<1x256xf32> to vector<256x256xf32>
    %5 = arith.addf %2, %4 : vector<256x256xf32>
    %cst_5 = arith.constant 0.000000e+00 : f32
    %6 = vector.broadcast %cst_5 : f32 to vector<256x256xf32>
    %7 = arith.maximumf %5, %6 : vector<256x256xf32>
    %8 = arith.truncf %7 : vector<256x256xf32> to vector<256x256xbf16>
    %c0_6 = arith.constant 0 : index
    %c0_7 = arith.constant 0 : index
    %9 = vector.load %arg4[%c0_6, %c0_7] : memref<256x128xbf16, #tpu.memory_space<vmem>>, vector<256x128xbf16>
    %cst_8 = arith.constant dense<0.000000e+00> : vector<256x128xf32>
    %10 = tpu.matmul %8, %9, %cst_8 {dimension_numbers = #tpu.dot_dimension_numbers<[1], [0], [0], [1], [0, 0, 1, 1], [], []>} : vector<256x256xbf16>, vector<256x128xbf16>, vector<256x128xf32> -> vector<256x128xf32>
    %c0_9 = arith.constant 0 : index
    %c0_10 = arith.constant 0 : index
    %11 = vector.load %arg5[%c0_9, %c0_10] : memref<1x128xf32, #tpu.memory_space<vmem>>, vector<1x128xf32>
    %12 = vector.broadcast %11 : vector<1x128xf32> to vector<256x128xf32>
    %13 = arith.addf %10, %12 : vector<256x128xf32>
    %cst_11 = arith.constant 0.000000e+00 : f32
    %14 = vector.broadcast %cst_11 : f32 to vector<256x128xf32>
    %15 = arith.maximumf %13, %14 : vector<256x128xf32>
    %16 = arith.truncf %15 : vector<256x128xf32> to vector<256x128xbf16>
    %c0_12 = arith.constant 0 : index
    %c0_13 = arith.constant 0 : index
    %17 = vector.load %arg6[%c0_12, %c0_13] : memref<128x128xbf16, #tpu.memory_space<vmem>>, vector<128x128xbf16>
    %cst_14 = arith.constant dense<0.000000e+00> : vector<256x128xf32>
    %18 = tpu.matmul %16, %17, %cst_14 {dimension_numbers = #tpu.dot_dimension_numbers<[1], [0], [0], [1], [0, 0, 1, 1], [], []>} : vector<256x128xbf16>, vector<128x128xbf16>, vector<256x128xf32> -> vector<256x128xf32>
    %c0_15 = arith.constant 0 : index
    %c0_16 = arith.constant 0 : index
    %19 = vector.load %arg7[%c0_15, %c0_16] : memref<1x128xf32, #tpu.memory_space<vmem>>, vector<1x128xf32>
    %20 = vector.broadcast %19 : vector<1x128xf32> to vector<256x128xf32>
    %21 = arith.addf %18, %20 : vector<256x128xf32>
    %cst_17 = arith.constant 0.000000e+00 : f32
    %22 = vector.broadcast %cst_17 : f32 to vector<256x128xf32>
    %23 = arith.maximumf %21, %22 : vector<256x128xf32>
    %24 = arith.truncf %23 : vector<256x128xf32> to vector<256x128xbf16>
    %c0_18 = arith.constant 0 : index
    %c0_19 = arith.constant 0 : index
    %25 = vector.load %arg8[%c0_18, %c0_19] : memref<128x128xbf16, #tpu.memory_space<vmem>>, vector<128x128xbf16>
    %cst_20 = arith.constant dense<0.000000e+00> : vector<256x128xf32>
    %26 = tpu.matmul %24, %25, %cst_20 {dimension_numbers = #tpu.dot_dimension_numbers<[1], [0], [0], [1], [0, 0, 1, 1], [], []>} : vector<256x128xbf16>, vector<128x128xbf16>, vector<256x128xf32> -> vector<256x128xf32>
    %c0_21 = arith.constant 0 : index
    %c0_22 = arith.constant 0 : index
    %27 = vector.load %arg9[%c0_21, %c0_22] : memref<1x128xf32, #tpu.memory_space<vmem>>, vector<1x128xf32>
    %28 = vector.broadcast %27 : vector<1x128xf32> to vector<256x128xf32>
    %29 = arith.addf %26, %28 : vector<256x128xf32>
    %c0_23 = arith.constant 0 : index
    %c0_24 = arith.constant 0 : index
    %30 = vector.load %arg10[%c0_23, %c0_24] : memref<1x128xf32, #tpu.memory_space<vmem>>, vector<1x128xf32>
    %31 = vector.broadcast %30 : vector<1x128xf32> to vector<256x128xf32>
    %32 = arith.mulf %31, %29 : vector<256x128xf32>
    %c0_25 = arith.constant 0 : index
    %c0_26 = arith.constant 0 : index
    %33 = vector.load %arg11[%c0_25, %c0_26] : memref<256x128xf32, #tpu.memory_space<vmem>>, vector<256x128xf32>
    tpu.vector_store %arg11[%c0_25, %c0_26], %32 {strides = array<i32>} : memref<256x128xf32, #tpu.memory_space<vmem>>, vector<256x128xf32>,
    return
  }
  func.func @transform_0(%arg0: i32) -> (i32, i32) {
    %c0_i32 = arith.constant 0 : i32
    %c0_i32_0 = arith.constant 0 : i32
    return %arg0, %c0_i32 : i32, i32
  }
  func.func @transform_1(%arg0: i32) -> (i32, i32) {
    %c0_i32 = arith.constant 0 : i32
    %c0_i32_0 = arith.constant 0 : i32
    %c0_i32_1 = arith.constant 0 : i32
    return %c0_i32, %c0_i32_0 : i32, i32
  }
  func.func @transform_2(%arg0: i32) -> (i32, i32) {
    %c0_i32 = arith.constant 0 : i32
    %c0_i32_0 = arith.constant 0 : i32
    %c0_i32_1 = arith.constant 0 : i32
    return %c0_i32, %c0_i32_0 : i32, i32
  }
  func.func @transform_3(%arg0: i32) -> (i32, i32) {
    %c0_i32 = arith.constant 0 : i32
    %c0_i32_0 = arith.constant 0 : i32
    %c0_i32_1 = arith.constant 0 : i32
    return %c0_i32, %c0_i32_0 : i32, i32
  }
  func.func @transform_4(%arg0: i32) -> (i32, i32) {
    %c0_i32 = arith.constant 0 : i32
    %c0_i32_0 = arith.constant 0 : i32
    %c0_i32_1 = arith.constant 0 : i32
    return %c0_i32, %c0_i32_0 : i32, i32
  }
  func.func @transform_5(%arg0: i32) -> (i32, i32) {
    %c0_i32 = arith.constant 0 : i32
    %c0_i32_0 = arith.constant 0 : i32
    %c0_i32_1 = arith.constant 0 : i32
    return %c0_i32, %c0_i32_0 : i32, i32
  }
  func.func @transform_6(%arg0: i32) -> (i32, i32) {
    %c0_i32 = arith.constant 0 : i32
    %c0_i32_0 = arith.constant 0 : i32
    %c0_i32_1 = arith.constant 0 : i32
    return %c0_i32, %c0_i32_0 : i32, i32
  }
  func.func @transform_7(%arg0: i32) -> (i32, i32) {
    %c0_i32 = arith.constant 0 : i32
    %c0_i32_0 = arith.constant 0 : i32
    %c0_i32_1 = arith.constant 0 : i32
    return %c0_i32, %c0_i32_0 : i32, i32
  }
  func.func @transform_8(%arg0: i32) -> (i32, i32) {
    %c0_i32 = arith.constant 0 : i32
    %c0_i32_0 = arith.constant 0 : i32
    %c0_i32_1 = arith.constant 0 : i32
    return %c0_i32, %c0_i32_0 : i32, i32
  }
  func.func @transform_9(%arg0: i32) -> (i32, i32) {
    %c0_i32 = arith.constant 0 : i32
    %c0_i32_0 = arith.constant 0 : i32
    %c0_i32_1 = arith.constant 0 : i32
    return %c0_i32, %c0_i32_0 : i32, i32
  }
  func.func @transform_10(%arg0: i32) -> (i32, i32) {
    %c0_i32 = arith.constant 0 : i32
    %c0_i32_0 = arith.constant 0 : i32
    return %arg0, %c0_i32 : i32, i32
  }
}

</mosaic_0001>

<llo_original>
// kernel: tpu_custom_call.1
$region0: #{tpu_custom_call.1}
  #allocation0 [shape = 'u32[]', space=smem, size = 0x4, offset = 0x4, fixed_abs, tag = 'smem constant byte address 0x4 - core index']
  #allocation1 [shape = 'u32[144,128]{1,0:T(1,128)}', space=vmem, size = 0x12000, scoped, tag = 'internal scratch']
  %s0 = inlined_call_operand.vmem [shape: bf16[512,784], index: 0, kind: input, shape index: {}]
  %s1 = inlined_call_operand.vmem [shape: bf16[784,256], index: 1, kind: input, shape index: {}]
  %s2 = inlined_call_operand.vmem [shape: f32[1,256], index: 2, kind: input, shape index: {}]
  %s3 = inlined_call_operand.vmem [shape: bf16[256,128], index: 3, kind: input, shape index: {}]
  %s4 = inlined_call_operand.vmem [shape: f32[1,128], index: 4, kind: input, shape index: {}]
  %s5 = inlined_call_operand.vmem [shape: bf16[128,128], index: 5, kind: input, shape index: {}]
  %s6 = inlined_call_operand.vmem [shape: f32[1,128], index: 6, kind: input, shape index: {}]
  %s7 = inlined_call_operand.vmem [shape: bf16[128,128], index: 7, kind: input, shape index: {}]
  %s8 = inlined_call_operand.vmem [shape: f32[1,128], index: 8, kind: input, shape index: {}]
  %s9 = inlined_call_operand.vmem [shape: f32[1,128], index: 9, kind: input, shape index: {}]
  %s10 = inlined_call_operand.hbm [shape: f32[512,128], index: 10, kind: output, shape index: {}]
  %s11 = sld [smem:[#allocation0]]
  $region73: #{tpu_custom_call.1} parent=0
    _
  %s13 = ssub.s32 1, %s11
  %s14 = scalar_select 0, %s13, %s11
  $region1: #{tpu_custom_call.1} parent=0
    #allocation2 [shape = 'u8[262144]{0}', space=vmem, size = 0x40000, scoped, tag = 'output window, operand 0']
    #allocation3 [shape = 's32[2]{0}', space=sflag, size = 0x8, scoped, tag = 'scoped memory for tpu_custom_call.1']
    %15 = vsyncpa [#allocation3], 0
    %s16 = scalar_lea.sflag [#allocation3], 1
    %17 = vsyncpa %s16, 0
    loop: start=0, step=1, limit=4
    $region2: #{tpu_custom_call.1} parent=1 // loop_pre_header
      _
    $region3: #{tpu_custom_call.1} parent=1 // loop_header
      %s19 = sphi 0, %s23
      %p20 = scmp.ge.s32.totalorder %s19, 4
      %s29 = sphi 0, %s31
      %s32 = sphi 0, %s29
      %s33 = sphi 0, %s32
      %s49 = sphi 0, %s33
      %s53 = sphi 0, %s53
      %s55 = sphi 0, %s53
      %s56 = sphi 0, %s55
      %s70 = sphi 0, %s56
      %s74 = sphi 0, %s74
      %s76 = sphi 0, %s74
      %s77 = sphi 0, %s76
      %s91 = sphi 0, %s77
      %s95 = sphi 0, %s95
      %s97 = sphi 0, %s95
      %s98 = sphi 0, %s97
      %s112 = sphi 0, %s98
      %s116 = sphi 0, %s116
      %s118 = sphi 0, %s116
      %s119 = sphi 0, %s118
      %s133 = sphi 0, %s119
      %s137 = sphi 0, %s137
      %s139 = sphi 0, %s137
      %s140 = sphi 0, %s139
      %s154 = sphi 0, %s140
      %s158 = sphi 0, %s158
      %s160 = sphi 0, %s158
      %s161 = sphi 0, %s160
      %s175 = sphi 0, %s161
      %s179 = sphi 0, %s179
      %s181 = sphi 0, %s179
      %s182 = sphi 0, %s181
      %s196 = sphi 0, %s182
      %s200 = sphi 0, %s200
      %s202 = sphi 0, %s200
      %s203 = sphi 0, %s202
      %s217 = sphi 0, %s203
      %s221 = sphi 0, %s221
      %s223 = sphi 0, %s221
      %s224 = sphi 0, %s223
      %s238 = sphi 0, %s224
      %s244 = sphi 0, %s246
      %s247 = sphi 0, %s244
      %s248 = sphi 0, %s247
      %s264 = sphi 0, %s248
    $region4: #{tpu_custom_call.1} parent=1 // loop_header_branch
      %22 = sbr.rel (%p20) target = $region8
    $region5: #{tpu_custom_call.1} parent=1 // loop_body
      %s24 = ssub.s32 %s19, 1
      %s25 = ssub.s32 %s19, 2
      %s26 = sadd.s32 %s19, 1
      %s27 = ssub.s32 %s19, %s26
      %p28 = scmp.eq.s32.totalorder %s27, 0
      %s30 = sadd.s32 %s29, 1
      %s31 = scalar_select %p28, %s29, %s30
      %p34 = pneg %p28
      %p35 = scmp.eq.s32.totalorder %s19, 1
      %p36 = por %p34, %p35
      %p37 = scmp.ne.s32.totalorder %s29, %s32
      %p38 = scmp.eq.s32.totalorder %s19, 0
      %p39 = por %p37, %p38
      %p40 = scmp.ne.s32.totalorder %s29, %s32
      %p41 = scmp.eq.s32.totalorder %s24, 1
      %p42 = por %p40, %p41
      %p43 = scmp.ne.s32.totalorder %s32, %s33
      %p44 = scmp.eq.s32.totalorder %s24, 0
      %p45 = por %p43, %p44
      %p46 = scmp.ne.s32.totalorder %s32, %s33
      %p47 = scmp.eq.s32.totalorder %s25, 1
      %p48 = por %p46, %p47
      %p50 = scmp.ne.s32.totalorder %s33, %s49
      %p51 = scmp.eq.s32.totalorder %s25, 0
      %p52 = por %p50, %p51
      %s54 = sadd.s32 %s53, 1
      %p57 = scmp.eq.s32.totalorder %s19, 1
      %p58 = scmp.ne.s32.totalorder %s53, %s55
      %p59 = scmp.eq.s32.totalorder %s19, 0
      %p60 = por %p58, %p59
      %p61 = scmp.ne.s32.totalorder %s53, %s55
      %p62 = scmp.eq.s32.totalorder %s24, 1
      %p63 = por %p61, %p62
      %p64 = scmp.ne.s32.totalorder %s55, %s56
      %p65 = scmp.eq.s32.totalorder %s24, 0
      %p66 = por %p64, %p65
      %p67 = scmp.ne.s32.totalorder %s55, %s56
      %p68 = scmp.eq.s32.totalorder %s25, 1
      %p69 = por %p67, %p68
      %p71 = scmp.ne.s32.totalorder %s56, %s70
      %p72 = scmp.eq.s32.totalorder %s25, 0
      %p73 = por %p71, %p72
      %s75 = sadd.s32 %s74, 1
      %p78 = scmp.eq.s32.totalorder %s19, 1
      %p79 = scmp.ne.s32.totalorder %s74, %s76
      %p80 = scmp.eq.s32.totalorder %s19, 0
      %p81 = por %p79, %p80
      %p82 = scmp.ne.s32.totalorder %s74, %s76
      %p83 = scmp.eq.s32.totalorder %s24, 1
      %p84 = por %p82, %p83
      %p85 = scmp.ne.s32.totalorder %s76, %s77
      %p86 = scmp.eq.s32.totalorder %s24, 0
      %p87 = por %p85, %p86
      %p88 = scmp.ne.s32.totalorder %s76, %s77
      %p89 = scmp.eq.s32.totalorder %s25, 1
      %p90 = por %p88, %p89
      %p92 = scmp.ne.s32.totalorder %s77, %s91
      %p93 = scmp.eq.s32.totalorder %s25, 0
      %p94 = por %p92, %p93
      %s96 = sadd.s32 %s95, 1
      %p99 = scmp.eq.s32.totalorder %s19, 1
      %p100 = scmp.ne.s32.totalorder %s95, %s97
      %p101 = scmp.eq.s32.totalorder %s19, 0
      %p102 = por %p100, %p101
      %p103 = scmp.ne.s32.totalorder %s95, %s97
      %p104 = scmp.eq.s32.totalorder %s24, 1
      %p105 = por %p103, %p104
      %p106 = scmp.ne.s32.totalorder %s97, %s98
      %p107 = scmp.eq.s32.totalorder %s24, 0
      %p108 = por %p106, %p107
      %p109 = scmp.ne.s32.totalorder %s97, %s98
      %p110 = scmp.eq.s32.totalorder %s25, 1
      %p111 = por %p109, %p110
      %p113 = scmp.ne.s32.totalorder %s98, %s112
      %p114 = scmp.eq.s32.totalorder %s25, 0
      %p115 = por %p113, %p114
      %s117 = sadd.s32 %s116, 1
      %p120 = scmp.eq.s32.totalorder %s19, 1
      %p121 = scmp.ne.s32.totalorder %s116, %s118
      %p122 = scmp.eq.s32.totalorder %s19, 0
      %p123 = por %p121, %p122
      %p124 = scmp.ne.s32.totalorder %s116, %s118
      %p125 = scmp.eq.s32.totalorder %s24, 1
      %p126 = por %p124, %p125
      %p127 = scmp.ne.s32.totalorder %s118, %s119
      %p128 = scmp.eq.s32.totalorder %s24, 0
      %p129 = por %p127, %p128
      %p130 = scmp.ne.s32.totalorder %s118, %s119
      %p131 = scmp.eq.s32.totalorder %s25, 1
      %p132 = por %p130, %p131
      %p134 = scmp.ne.s32.totalorder %s119, %s133
      %p135 = scmp.eq.s32.totalorder %s25, 0
      %p136 = por %p134, %p135
      %s138 = sadd.s32 %s137, 1
      %p141 = scmp.eq.s32.totalorder %s19, 1
      %p142 = scmp.ne.s32.totalorder %s137, %s139
      %p143 = scmp.eq.s32.totalorder %s19, 0
      %p144 = por %p142, %p143
      %p145 = scmp.ne.s32.totalorder %s137, %s139
      %p146 = scmp.eq.s32.totalorder %s24, 1
      %p147 = por %p145, %p146
      %p148 = scmp.ne.s32.totalorder %s139, %s140
      %p149 = scmp.eq.s32.totalorder %s24, 0
      %p150 = por %p148, %p149
      %p151 = scmp.ne.s32.totalorder %s139, %s140
      %p152 = scmp.eq.s32.totalorder %s25, 1
      %p153 = por %p151, %p152
      %p155 = scmp.ne.s32.totalorder %s140, %s154
      %p156 = scmp.eq.s32.totalorder %s25, 0
      %p157 = por %p155, %p156
      %s159 = sadd.s32 %s158, 1
      %p162 = scmp.eq.s32.totalorder %s19, 1
      %p163 = scmp.ne.s32.totalorder %s158, %s160
      %p164 = scmp.eq.s32.totalorder %s19, 0
      %p165 = por %p163, %p164
      %p166 = scmp.ne.s32.totalorder %s158, %s160
      %p167 = scmp.eq.s32.totalorder %s24, 1
      %p168 = por %p166, %p167
      %p169 = scmp.ne.s32.totalorder %s160, %s161
      %p170 = scmp.eq.s32.totalorder %s24, 0
      %p171 = por %p169, %p170
      %p172 = scmp.ne.s32.totalorder %s160, %s161
      %p173 = scmp.eq.s32.totalorder %s25, 1
      %p174 = por %p172, %p173
      %p176 = scmp.ne.s32.totalorder %s161, %s175
      %p177 = scmp.eq.s32.totalorder %s25, 0
      %p178 = por %p176, %p177
      %s180 = sadd.s32 %s179, 1
      %p183 = scmp.eq.s32.totalorder %s19, 1
      %p184 = scmp.ne.s32.totalorder %s179, %s181
      %p185 = scmp.eq.s32.totalorder %s19, 0
      %p186 = por %p184, %p185
      %p187 = scmp.ne.s32.totalorder %s179, %s181
      %p188 = scmp.eq.s32.totalorder %s24, 1
      %p189 = por %p187, %p188
      %p190 = scmp.ne.s32.totalorder %s181, %s182
      %p191 = scmp.eq.s32.totalorder %s24, 0
      %p192 = por %p190, %p191
      %p193 = scmp.ne.s32.totalorder %s181, %s182
      %p194 = scmp.eq.s32.totalorder %s25, 1
      %p195 = por %p193, %p194
      %p197 = scmp.ne.s32.totalorder %s182, %s196
      %p198 = scmp.eq.s32.totalorder %s25, 0
      %p199 = por %p197, %p198
      %s201 = sadd.s32 %s200, 1
      %p204 = scmp.eq.s32.totalorder %s19, 1
      %p205 = scmp.ne.s32.totalorder %s200, %s202
      %p206 = scmp.eq.s32.totalorder %s19, 0
      %p207 = por %p205, %p206
      %p208 = scmp.ne.s32.totalorder %s200, %s202
      %p209 = scmp.eq.s32.totalorder %s24, 1
      %p210 = por %p208, %p209
      %p211 = scmp.ne.s32.totalorder %s202, %s203
      %p212 = scmp.eq.s32.totalorder %s24, 0
      %p213 = por %p211, %p212
      %p214 = scmp.ne.s32.totalorder %s202, %s203
      %p215 = scmp.eq.s32.totalorder %s25, 1
      %p216 = por %p214, %p215
      %p218 = scmp.ne.s32.totalorder %s203, %s217
      %p219 = scmp.eq.s32.totalorder %s25, 0
      %p220 = por %p218, %p219
      %s222 = sadd.s32 %s221, 1
      %p225 = scmp.eq.s32.totalorder %s19, 1
      %p226 = scmp.ne.s32.totalorder %s221, %s223
      %p227 = scmp.eq.s32.totalorder %s19, 0
      %p228 = por %p226, %p227
      %p229 = scmp.ne.s32.totalorder %s221, %s223
      %p230 = scmp.eq.s32.totalorder %s24, 1
      %p231 = por %p229, %p230
      %p232 = scmp.ne.s32.totalorder %s223, %s224
      %p233 = scmp.eq.s32.totalorder %s24, 0
      %p234 = por %p232, %p233
      %p235 = scmp.ne.s32.totalorder %s223, %s224
      %p236 = scmp.eq.s32.totalorder %s25, 1
      %p237 = por %p235, %p236
      %p239 = scmp.ne.s32.totalorder %s224, %s238
      %p240 = scmp.eq.s32.totalorder %s25, 0
      %p241 = por %p239, %p240
      %s242 = ssub.s32 %s19, %s26
      %p243 = scmp.eq.s32.totalorder %s242, 0
      %s245 = sadd.s32 %s244, 1
      %s246 = scalar_select %p243, %s244, %s245
      %p249 = pneg %p243
      %p250 = scmp.eq.s32.totalorder %s19, 1
      %p251 = por %p249, %p250
      %p252 = scmp.ne.s32.totalorder %s244, %s247
      %p253 = scmp.eq.s32.totalorder %s19, 0
      %p254 = por %p252, %p253
      %p255 = scmp.ne.s32.totalorder %s244, %s247
      %p256 = scmp.eq.s32.totalorder %s24, 1
      %p257 = por %p255, %p256
      %p258 = scmp.ne.s32.totalorder %s247, %s248
      %p259 = scmp.eq.s32.totalorder %s24, 0
      %p260 = por %p258, %p259
      %p261 = scmp.ne.s32.totalorder %s247, %s248
      %p262 = scmp.eq.s32.totalorder %s25, 1
      %p263 = por %p261, %p262
      %p265 = scmp.ne.s32.totalorder %s248, %s264
      %p266 = scmp.eq.s32.totalorder %s25, 0
      %p267 = por %p265, %p266
      %p268 = scmp.le.s32.totalorder 1, %s19
      %p269 = scmp.lt.s32.totalorder %s19, 3
      %p270 = pnand %p268, %p269
      %p271 = pneg %p270
      // Predicated region
      $region9: #{tpu_custom_call.1} parent=5 // pred_check
        _
      $region10: #{tpu_custom_call.1} parent=5 // pred_check_branch
        %273 = sbr.rel (%p270) target = $region12
      $region11: #{tpu_custom_call.1} parent=5 // pred_region
        %s274 = ssub.s32 %s19, 1
        // Predicated region
        $region13: #{tpu_custom_call.1} parent=11 // pred_check
          %p275 = pneg %p66
        $region14: #{tpu_custom_call.1} parent=11 // pred_check_branch
          %277 = sbr.rel (%p275) target = $region16
        $region15: #{tpu_custom_call.1} parent=11 // pred_region
          _
        $region16: #{tpu_custom_call.1} parent=11 // pred_fallthru
          _
        // Predicated region
        $region17: #{tpu_custom_call.1} parent=11 // pred_check
          %p278 = pneg %p87
        $region18: #{tpu_custom_call.1} parent=11 // pred_check_branch
          %280 = sbr.rel (%p278) target = $region20
        $region19: #{tpu_custom_call.1} parent=11 // pred_region
          _
        $region20: #{tpu_custom_call.1} parent=11 // pred_fallthru
          _
        // Predicated region
        $region21: #{tpu_custom_call.1} parent=11 // pred_check
          %p281 = pneg %p108
        $region22: #{tpu_custom_call.1} parent=11 // pred_check_branch
          %283 = sbr.rel (%p281) target = $region24
        $region23: #{tpu_custom_call.1} parent=11 // pred_region
          _
        $region24: #{tpu_custom_call.1} parent=11 // pred_fallthru
          _
        // Predicated region
        $region25: #{tpu_custom_call.1} parent=11 // pred_check
          %p284 = pneg %p129
        $region26: #{tpu_custom_call.1} parent=11 // pred_check_branch
          %286 = sbr.rel (%p284) target = $region28
        $region27: #{tpu_custom_call.1} parent=11 // pred_region
          _
        $region28: #{tpu_custom_call.1} parent=11 // pred_fallthru
          _
        // Predicated region
        $region29: #{tpu_custom_call.1} parent=11 // pred_check
          %p287 = pneg %p150
        $region30: #{tpu_custom_call.1} parent=11 // pred_check_branch
          %289 = sbr.rel (%p287) target = $region32
        $region31: #{tpu_custom_call.1} parent=11 // pred_region
          _
        $region32: #{tpu_custom_call.1} parent=11 // pred_fallthru
          _
        // Predicated region
        $region33: #{tpu_custom_call.1} parent=11 // pred_check
          %p290 = pneg %p171
        $region34: #{tpu_custom_call.1} parent=11 // pred_check_branch
          %292 = sbr.rel (%p290) target = $region36
        $region35: #{tpu_custom_call.1} parent=11 // pred_region
          _
        $region36: #{tpu_custom_call.1} parent=11 // pred_fallthru
          _
        // Predicated region
        $region37: #{tpu_custom_call.1} parent=11 // pred_check
          %p293 = pneg %p192
        $region38: #{tpu_custom_call.1} parent=11 // pred_check_branch
          %295 = sbr.rel (%p293) target = $region40
        $region39: #{tpu_custom_call.1} parent=11 // pred_region
          _
        $region40: #{tpu_custom_call.1} parent=11 // pred_fallthru
          _
        // Predicated region
        $region41: #{tpu_custom_call.1} parent=11 // pred_check
          %p296 = pneg %p213
        $region42: #{tpu_custom_call.1} parent=11 // pred_check_branch
          %298 = sbr.rel (%p296) target = $region44
        $region43: #{tpu_custom_call.1} parent=11 // pred_region
          _
        $region44: #{tpu_custom_call.1} parent=11 // pred_fallthru
          _
        // Predicated region
        $region45: #{tpu_custom_call.1} parent=11 // pred_check
          %p299 = pneg %p234
        $region46: #{tpu_custom_call.1} parent=11 // pred_check_branch
          %301 = sbr.rel (%p299) target = $region48
        $region47: #{tpu_custom_call.1} parent=11 // pred_region
          _
        $region48: #{tpu_custom_call.1} parent=11 // pred_fallthru
          _
      $region12: #{tpu_custom_call.1} parent=5 // pred_fallthru
        _
      %p302 = scmp.lt.s32.totalorder %s19, 2
      // Predicated region
      $region49: #{tpu_custom_call.1} parent=5 // pred_check
        %p303 = pneg %p302
      $region50: #{tpu_custom_call.1} parent=5 // pred_check_branch
        %305 = sbr.rel (%p303) target = $region52
      $region51: #{tpu_custom_call.1} parent=5 // pred_region
        // Predicated region
        $region53: #{tpu_custom_call.1} parent=51 // pred_check
          %p306 = pneg %p39
        $region54: #{tpu_custom_call.1} parent=51 // pred_check_branch
          %308 = sbr.rel (%p306) target = $region56
        $region55: #{tpu_custom_call.1} parent=51 // pred_region
          %s309 = smul.u32 32, %s19
          %p310 = scmp.lt.s32.totalorder %s309, 63
          %s311 = scalar_select %p310, %s309, 63
          %s312 = smul.addr %s311, 7
          %s313 = smul.addr %s312, 4
          %s314 = scalar_lea.vmem %s0, %s313
          %s315 = smul.u32 32, %s19
        $region56: #{tpu_custom_call.1} parent=51 // pred_fallthru
          _
      $region52: #{tpu_custom_call.1} parent=5 // pred_fallthru
        _
      %p316 = scmp.le.s32.totalorder 1, %s19
      %p317 = scmp.lt.s32.totalorder %s19, 3
      %p318 = pnand %p316, %p317
      %p319 = pneg %p318
      // Predicated region
      $region57: #{tpu_custom_call.1} parent=5 // pred_check
        _
      $region58: #{tpu_custom_call.1} parent=5 // pred_check_branch
        %321 = sbr.rel (%p318) target = $region60
      $region59: #{tpu_custom_call.1} parent=5 // pred_region
        %s322 = ssub.s32 %s19, 1
        %s323 = smul.u32 32, %s24
        %p324 = scmp.lt.s32.totalorder %s323, 63
        %s325 = scalar_select %p324, %s323, 63
        %s326 = smul.addr %s325, 7
        %s327 = smul.addr %s326, 4
        %s328 = scalar_lea.vmem %s0, %s327
        %p329 = pneg %p45
        %p330 = pneg %p42
        %p331 = pneg %p66
        %p332 = pneg %p63
        %p333 = pneg %p87
        %p334 = pneg %p84
        %p335 = pneg %p108
        %p336 = pneg %p105
        %p337 = pneg %p129
        %p338 = pneg %p126
        %p339 = pneg %p150
        %p340 = pneg %p147
        %p341 = pneg %p171
        %p342 = pneg %p168
        %p343 = pneg %p192
        %p344 = pneg %p189
        %p345 = pneg %p213
        %p346 = pneg %p210
        %p347 = pneg %p234
        %p348 = pneg %p231
        %p349 = pneg %p260
        %p350 = pneg %p257
        %s351 = sand.u32 %s247, 1
        %s352 = scalar_lea.sflag [#allocation3], %s351
        %s353 = sand.u32 %s247, 1
        %s354 = smul.addr %s353, 256
        %s355 = scalar_lea.vmem [#allocation2], %s354
        %s356 = smul.u32 32, %s24
        %p357 = scmp.lt.s32.totalorder %s356, 63
        %s358 = scalar_select %p357, %s356, 63
        %s359 = smul.addr %s358, 7
        %s360 = smul.addr %s359, 4
        %s361 = scalar_lea.vmem %s0, %s360
        %s362 = smul.u32 32, %s24
        %s363 = smul.u32 32, %s24
        %v365 = vld [vmem:[%s361] sm:$0xff]
        %v366 = vld [vmem:[%s361 + $0x8] sm:$0xff]
        %v367 = vld [vmem:[%s361 + $0x10] sm:$0xff]
        %v368 = vld [vmem:[%s361 + $0x18] sm:$0xf]
        %v369 = vld [vmem:[%s361 + $0x1c] sm:$0xff]
        %v370 = vld [vmem:[%s361 + $0x24] sm:$0xff]
        %v371 = vld [vmem:[%s361 + $0x2c] sm:$0xff]
        %v372 = vld [vmem:[%s361 + $0x34] sm:$0xf]
        %v373 = vld [vmem:[%s361 + $0x38] sm:$0xff]
        %v374 = vld [vmem:[%s361 + $0x40] sm:$0xff]
        %v375 = vld [vmem:[%s361 + $0x48] sm:$0xff]
        %v376 = vld [vmem:[%s361 + $0x50] sm:$0xf]
        %v377 = vld [vmem:[%s361 + $0x54] sm:$0xff]
        %v378 = vld [vmem:[%s361 + $0x5c] sm:$0xff]
        %v379 = vld [vmem:[%s361 + $0x64] sm:$0xff]
        %v380 = vld [vmem:[%s361 + $0x6c] sm:$0xf]
        %v381 = vld [vmem:[%s361 + $0x70] sm:$0xff]
        %v382 = vld [vmem:[%s361 + $0x78] sm:$0xff]
        %v383 = vld [vmem:[%s361 + $0x80] sm:$0xff]
        %v384 = vld [vmem:[%s361 + $0x88] sm:$0xf]
        %v385 = vld [vmem:[%s361 + $0x8c] sm:$0xff]
        %v386 = vld [vmem:[%s361 + $0x94] sm:$0xff]
        %v387 = vld [vmem:[%s361 + $0x9c] sm:$0xff]
        %v388 = vld [vmem:[%s361 + $0xa4] sm:$0xf]
        %v389 = vld [vmem:[%s361 + $0xa8] sm:$0xff]
        %v390 = vld [vmem:[%s361 + $0xb0] sm:$0xff]
        %v391 = vld [vmem:[%s361 + $0xb8] sm:$0xff]
        %v392 = vld [vmem:[%s361 + $0xc0] sm:$0xf]
        %v393 = vld [vmem:[%s361 + $0xc4] sm:$0xff]
        %v394 = vld [vmem:[%s361 + $0xcc] sm:$0xff]
        %v395 = vld [vmem:[%s361 + $0xd4] sm:$0xff]
        %v396 = vld [vmem:[%s361 + $0xdc] sm:$0xf]
        %v397 = vld [vmem:[%s361 + $0xe0] sm:$0xff]
        %v398 = vld [vmem:[%s361 + $0xe8] sm:$0xff]
        %v399 = vld [vmem:[%s361 + $0xf0] sm:$0xff]
        %v400 = vld [vmem:[%s361 + $0xf8] sm:$0xf]
        %v401 = vld [vmem:[%s361 + $0xfc] sm:$0xff]
        %v402 = vld [vmem:[%s361 + $0x104] sm:$0xff]
        %v403 = vld [vmem:[%s361 + $0x10c] sm:$0xff]
        %v404 = vld [vmem:[%s361 + $0x114] sm:$0xf]
        %v405 = vld [vmem:[%s361 + $0x118] sm:$0xff]
        %v406 = vld [vmem:[%s361 + $0x120] sm:$0xff]
        %v407 = vld [vmem:[%s361 + $0x128] sm:$0xff]
        %v408 = vld [vmem:[%s361 + $0x130] sm:$0xf]
        %v409 = vld [vmem:[%s361 + $0x134] sm:$0xff]
        %v410 = vld [vmem:[%s361 + $0x13c] sm:$0xff]
        %v411 = vld [vmem:[%s361 + $0x144] sm:$0xff]
        %v412 = vld [vmem:[%s361 + $0x14c] sm:$0xf]
        %v413 = vld [vmem:[%s361 + $0x150] sm:$0xff]
        %v414 = vld [vmem:[%s361 + $0x158] sm:$0xff]
        %v415 = vld [vmem:[%s361 + $0x160] sm:$0xff]
        %v416 = vld [vmem:[%s361 + $0x168] sm:$0xf]
        %v417 = vld [vmem:[%s361 + $0x16c] sm:$0xff]
        %v418 = vld [vmem:[%s361 + $0x174] sm:$0xff]
        %v419 = vld [vmem:[%s361 + $0x17c] sm:$0xff]
        %v420 = vld [vmem:[%s361 + $0x184] sm:$0xf]
        %v421 = vld [vmem:[%s361 + $0x188] sm:$0xff]
        %v422 = vld [vmem:[%s361 + $0x190] sm:$0xff]
        %v423 = vld [vmem:[%s361 + $0x198] sm:$0xff]
        %v424 = vld [vmem:[%s361 + $0x1a0] sm:$0xf]
        %v425 = vld [vmem:[%s361 + $0x1a4] sm:$0xff]
        %v426 = vld [vmem:[%s361 + $0x1ac] sm:$0xff]
        %v427 = vld [vmem:[%s361 + $0x1b4] sm:$0xff]
        %v428 = vld [vmem:[%s361 + $0x1bc] sm:$0xf]
        %v429 = vld [vmem:[%s361 + $0x1c0] sm:$0xff]
        %v430 = vld [vmem:[%s361 + $0x1c8] sm:$0xff]
        %v431 = vld [vmem:[%s361 + $0x1d0] sm:$0xff]
        %v432 = vld [vmem:[%s361 + $0x1d8] sm:$0xf]
        %v433 = vld [vmem:[%s361 + $0x1dc] sm:$0xff]
        %v434 = vld [vmem:[%s361 + $0x1e4] sm:$0xff]
        %v435 = vld [vmem:[%s361 + $0x1ec] sm:$0xff]
        %v436 = vld [vmem:[%s361 + $0x1f4] sm:$0xf]
        %v437 = vld [vmem:[%s361 + $0x1f8] sm:$0xff]
        %v438 = vld [vmem:[%s361 + $0x200] sm:$0xff]
        %v439 = vld [vmem:[%s361 + $0x208] sm:$0xff]
        %v440 = vld [vmem:[%s361 + $0x210] sm:$0xf]
        %v441 = vld [vmem:[%s361 + $0x214] sm:$0xff]
        %v442 = vld [vmem:[%s361 + $0x21c] sm:$0xff]
        %v443 = vld [vmem:[%s361 + $0x224] sm:$0xff]
        %v444 = vld [vmem:[%s361 + $0x22c] sm:$0xf]
        %v445 = vld [vmem:[%s361 + $0x230] sm:$0xff]
        %v446 = vld [vmem:[%s361 + $0x238] sm:$0xff]
        %v447 = vld [vmem:[%s361 + $0x240] sm:$0xff]
        %v448 = vld [vmem:[%s361 + $0x248] sm:$0xf]
        %v449 = vld [vmem:[%s361 + $0x24c] sm:$0xff]
        %v450 = vld [vmem:[%s361 + $0x254] sm:$0xff]
        %v451 = vld [vmem:[%s361 + $0x25c] sm:$0xff]
        %v452 = vld [vmem:[%s361 + $0x264] sm:$0xf]
        %v453 = vld [vmem:[%s361 + $0x268] sm:$0xff]
        %v454 = vld [vmem:[%s361 + $0x270] sm:$0xff]
        %v455 = vld [vmem:[%s361 + $0x278] sm:$0xff]
        %v456 = vld [vmem:[%s361 + $0x280] sm:$0xf]
        %v457 = vld [vmem:[%s361 + $0x284] sm:$0xff]
        %v458 = vld [vmem:[%s361 + $0x28c] sm:$0xff]
        %v459 = vld [vmem:[%s361 + $0x294] sm:$0xff]
        %v460 = vld [vmem:[%s361 + $0x29c] sm:$0xf]
        %v461 = vld [vmem:[%s361 + $0x2a0] sm:$0xff]
        %v462 = vld [vmem:[%s361 + $0x2a8] sm:$0xff]
        %v463 = vld [vmem:[%s361 + $0x2b0] sm:$0xff]
        %v464 = vld [vmem:[%s361 + $0x2b8] sm:$0xf]
        %v465 = vld [vmem:[%s361 + $0x2bc] sm:$0xff]
        %v466 = vld [vmem:[%s361 + $0x2c4] sm:$0xff]
        %v467 = vld [vmem:[%s361 + $0x2cc] sm:$0xff]
        %v468 = vld [vmem:[%s361 + $0x2d4] sm:$0xf]
        %v469 = vld [vmem:[%s361 + $0x2d8] sm:$0xff]
        %v470 = vld [vmem:[%s361 + $0x2e0] sm:$0xff]
        %v471 = vld [vmem:[%s361 + $0x2e8] sm:$0xff]
        %v472 = vld [vmem:[%s361 + $0x2f0] sm:$0xf]
        %v473 = vld [vmem:[%s361 + $0x2f4] sm:$0xff]
        %v474 = vld [vmem:[%s361 + $0x2fc] sm:$0xff]
        %v475 = vld [vmem:[%s361 + $0x304] sm:$0xff]
        %v476 = vld [vmem:[%s361 + $0x30c] sm:$0xf]
        %v477 = vld [vmem:[%s361 + $0x310] sm:$0xff]
        %v478 = vld [vmem:[%s361 + $0x318] sm:$0xff]
        %v479 = vld [vmem:[%s361 + $0x320] sm:$0xff]
        %v480 = vld [vmem:[%s361 + $0x328] sm:$0xf]
        %v481 = vld [vmem:[%s361 + $0x32c] sm:$0xff]
        %v482 = vld [vmem:[%s361 + $0x334] sm:$0xff]
        %v483 = vld [vmem:[%s361 + $0x33c] sm:$0xff]
        %v484 = vld [vmem:[%s361 + $0x344] sm:$0xf]
        %v485 = vld [vmem:[%s361 + $0x348] sm:$0xff]
        %v486 = vld [vmem:[%s361 + $0x350] sm:$0xff]
        %v487 = vld [vmem:[%s361 + $0x358] sm:$0xff]
        %v488 = vld [vmem:[%s361 + $0x360] sm:$0xf]
        %v489 = vld [vmem:[%s361 + $0x364] sm:$0xff]
        %v490 = vld [vmem:[%s361 + $0x36c] sm:$0xff]
        %v491 = vld [vmem:[%s361 + $0x374] sm:$0xff]
        %v492 = vld [vmem:[%s361 + $0x37c] sm:$0xf]
        %v493 = vld [vmem:[%s1] sm:$0xff]
        %v494 = vld [vmem:[%s1 + $0x8] sm:$0xff]
        %v495 = vld [vmem:[%s1 + $0x10] sm:$0xff]
        %v496 = vld [vmem:[%s1 + $0x18] sm:$0xff]
        %v497 = vld [vmem:[%s1 + $0x20] sm:$0xff]
        %v498 = vld [vmem:[%s1 + $0x28] sm:$0xff]
        %v499 = vld [vmem:[%s1 + $0x30] sm:$0xff]
        %v500 = vld [vmem:[%s1 + $0x38] sm:$0xff]
        %v501 = vld [vmem:[%s1 + $0x40] sm:$0xff]
        %v502 = vld [vmem:[%s1 + $0x48] sm:$0xff]
        %v503 = vld [vmem:[%s1 + $0x50] sm:$0xff]
        %v504 = vld [vmem:[%s1 + $0x58] sm:$0xff]
        %v505 = vld [vmem:[%s1 + $0x60] sm:$0xff]
        %v506 = vld [vmem:[%s1 + $0x68] sm:$0xff]
        %v507 = vld [vmem:[%s1 + $0x70] sm:$0xff]
        %v508 = vld [vmem:[%s1 + $0x78] sm:$0xff]
        %v509 = vld [vmem:[%s1 + $0x80] sm:$0xff]
        %v510 = vld [vmem:[%s1 + $0x88] sm:$0xff]
        %v511 = vld [vmem:[%s1 + $0x90] sm:$0xff]
        %v512 = vld [vmem:[%s1 + $0x98] sm:$0xff]
        %v513 = vld [vmem:[%s1 + $0xa0] sm:$0xff]
        %v514 = vld [vmem:[%s1 + $0xa8] sm:$0xff]
        %v515 = vld [vmem:[%s1 + $0xb0] sm:$0xff]
        %v516 = vld [vmem:[%s1 + $0xb8] sm:$0xff]
        %v517 = vld [vmem:[%s1 + $0xc0] sm:$0xff]
        %v518 = vld [vmem:[%s1 + $0xc8] sm:$0xff]
        %v519 = vld [vmem:[%s1 + $0xd0] sm:$0xff]
        %v520 = vld [vmem:[%s1 + $0xd8] sm:$0xff]
        %v521 = vld [vmem:[%s1 + $0xe0] sm:$0xff]
        %v522 = vld [vmem:[%s1 + $0xe8] sm:$0xff]
        %v523 = vld [vmem:[%s1 + $0xf0] sm:$0xff]
        %v524 = vld [vmem:[%s1 + $0xf8] sm:$0xff]
        %v525 = vld [vmem:[%s1 + $0x100] sm:$0xff]
        %v526 = vld [vmem:[%s1 + $0x108] sm:$0xff]
        %v527 = vld [vmem:[%s1 + $0x110] sm:$0xff]
        %v528 = vld [vmem:[%s1 + $0x118] sm:$0xff]
        %v529 = vld [vmem:[%s1 + $0x120] sm:$0xff]
        %v530 = vld [vmem:[%s1 + $0x128] sm:$0xff]
        %v531 = vld [vmem:[%s1 + $0x130] sm:$0xff]
        %v532 = vld [vmem:[%s1 + $0x138] sm:$0xff]
        %v533 = vld [vmem:[%s1 + $0x140] sm:$0xff]
        %v534 = vld [vmem:[%s1 + $0x148] sm:$0xff]
        %v535 = vld [vmem:[%s1 + $0x150] sm:$0xff]
        %v536 = vld [vmem:[%s1 + $0x158] sm:$0xff]
        %v537 = vld [vmem:[%s1 + $0x160] sm:$0xff]
        %v538 = vld [vmem:[%s1 + $0x168] sm:$0xff]
        %v539 = vld [vmem:[%s1 + $0x170] sm:$0xff]
        %v540 = vld [vmem:[%s1 + $0x178] sm:$0xff]
        %v541 = vld [vmem:[%s1 + $0x180] sm:$0xff]
        %v542 = vld [vmem:[%s1 + $0x188] sm:$0xff]
        %v543 = vld [vmem:[%s1 + $0x190] sm:$0xff]
        %v544 = vld [vmem:[%s1 + $0x198] sm:$0xff]
        %v545 = vld [vmem:[%s1 + $0x1a0] sm:$0xff]
        %v546 = vld [vmem:[%s1 + $0x1a8] sm:$0xff]
        %v547 = vld [vmem:[%s1 + $0x1b0] sm:$0xff]
        %v548 = vld [vmem:[%s1 + $0x1b8] sm:$0xff]
        %v549 = vld [vmem:[%s1 + $0x1c0] sm:$0xff]
        %v550 = vld [vmem:[%s1 + $0x1c8] sm:$0xff]
        %v551 = vld [vmem:[%s1 + $0x1d0] sm:$0xff]
        %v552 = vld [vmem:[%s1 + $0x1d8] sm:$0xff]
        %v553 = vld [vmem:[%s1 + $0x1e0] sm:$0xff]
        %v554 = vld [vmem:[%s1 + $0x1e8] sm:$0xff]
        %v555 = vld [vmem:[%s1 + $0x1f0] sm:$0xff]
        %v556 = vld [vmem:[%s1 + $0x1f8] sm:$0xff]
        %v557 = vld [vmem:[%s1 + $0x200] sm:$0xff]
        %v558 = vld [vmem:[%s1 + $0x208] sm:$0xff]
        %v559 = vld [vmem:[%s1 + $0x210] sm:$0xff]
        %v560 = vld [vmem:[%s1 + $0x218] sm:$0xff]
        %v561 = vld [vmem:[%s1 + $0x220] sm:$0xff]
        %v562 = vld [vmem:[%s1 + $0x228] sm:$0xff]
        %v563 = vld [vmem:[%s1 + $0x230] sm:$0xff]
        %v564 = vld [vmem:[%s1 + $0x238] sm:$0xff]
        %v565 = vld [vmem:[%s1 + $0x240] sm:$0xff]
        %v566 = vld [vmem:[%s1 + $0x248] sm:$0xff]
        %v567 = vld [vmem:[%s1 + $0x250] sm:$0xff]
        %v568 = vld [vmem:[%s1 + $0x258] sm:$0xff]
        %v569 = vld [vmem:[%s1 + $0x260] sm:$0xff]
        %v570 = vld [vmem:[%s1 + $0x268] sm:$0xff]
        %v571 = vld [vmem:[%s1 + $0x270] sm:$0xff]
        %v572 = vld [vmem:[%s1 + $0x278] sm:$0xff]
        %v573 = vld [vmem:[%s1 + $0x280] sm:$0xff]
        %v574 = vld [vmem:[%s1 + $0x288] sm:$0xff]
        %v575 = vld [vmem:[%s1 + $0x290] sm:$0xff]
        %v576 = vld [vmem:[%s1 + $0x298] sm:$0xff]
        %v577 = vld [vmem:[%s1 + $0x2a0] sm:$0xff]
        %v578 = vld [vmem:[%s1 + $0x2a8] sm:$0xff]
        %v579 = vld [vmem:[%s1 + $0x2b0] sm:$0xff]
        %v580 = vld [vmem:[%s1 + $0x2b8] sm:$0xff]
        %v581 = vld [vmem:[%s1 + $0x2c0] sm:$0xff]
        %v582 = vld [vmem:[%s1 + $0x2c8] sm:$0xff]
        %v583 = vld [vmem:[%s1 + $0x2d0] sm:$0xff]
        %v584 = vld [vmem:[%s1 + $0x2d8] sm:$0xff]
        %v585 = vld [vmem:[%s1 + $0x2e0] sm:$0xff]
        %v586 = vld [vmem:[%s1 + $0x2e8] sm:$0xff]
        %v587 = vld [vmem:[%s1 + $0x2f0] sm:$0xff]
        %v588 = vld [vmem:[%s1 + $0x2f8] sm:$0xff]
        %v589 = vld [vmem:[%s1 + $0x300] sm:$0xff]
        %v590 = vld [vmem:[%s1 + $0x308] sm:$0xff]
        %v591 = vld [vmem:[%s2] sm:$0x3]
        %v593 = vlaneseq
        %v594 = vshrl.u32 %v593, 7
        %v595 = vsub.s32 0, %v594
        %v596 = vrot.slane %v591, %v595
        %v597 = vlaneseq
        %v598 = vshrl.u32 %v597, 7
        %v599 = vsub.s32 1, %v598
        %v600 = vrot.slane %v591, %v599
        %v731 = vunpack.c.l.b16 %v365
        %v732 = vunpack.c.h.b16 %v365
        %v733 = vunpack.c.l.b16 %v366
        %v734 = vunpack.c.h.b16 %v366
        %v735 = vunpack.c.l.b16 %v367
        %v736 = vunpack.c.h.b16 %v367
        %v737 = vunpack.c.l.b16 %v368
        %v738 = vunpack.c.l.b16 %v369
        %v739 = vunpack.c.h.b16 %v369
        %v740 = vunpack.c.l.b16 %v370
        %v741 = vunpack.c.h.b16 %v370
        %v742 = vunpack.c.l.b16 %v371
        %v743 = vunpack.c.h.b16 %v371
        %v744 = vunpack.c.l.b16 %v372
        %v745 = vunpack.c.l.b16 %v373
        %v746 = vunpack.c.h.b16 %v373
        %v747 = vunpack.c.l.b16 %v374
        %v748 = vunpack.c.h.b16 %v374
        %v749 = vunpack.c.l.b16 %v375
        %v750 = vunpack.c.h.b16 %v375
        %v751 = vunpack.c.l.b16 %v376
        %v752 = vunpack.c.l.b16 %v377
        %v753 = vunpack.c.h.b16 %v377
        %v754 = vunpack.c.l.b16 %v378
        %v755 = vunpack.c.h.b16 %v378
        %v756 = vunpack.c.l.b16 %v379
        %v757 = vunpack.c.h.b16 %v379
        %v758 = vunpack.c.l.b16 %v380
        %v759 = vunpack.c.l.b16 %v381
        %v760 = vunpack.c.h.b16 %v381
        %v761 = vunpack.c.l.b16 %v382
        %v762 = vunpack.c.h.b16 %v382
        %v763 = vunpack.c.l.b16 %v383
        %v764 = vunpack.c.h.b16 %v383
        %v765 = vunpack.c.l.b16 %v384
        %v766 = vunpack.c.l.b16 %v385
        %v767 = vunpack.c.h.b16 %v385
        %v768 = vunpack.c.l.b16 %v386
        %v769 = vunpack.c.h.b16 %v386
        %v770 = vunpack.c.l.b16 %v387
        %v771 = vunpack.c.h.b16 %v387
        %v772 = vunpack.c.l.b16 %v388
        %v773 = vunpack.c.l.b16 %v389
        %v774 = vunpack.c.h.b16 %v389
        %v775 = vunpack.c.l.b16 %v390
        %v776 = vunpack.c.h.b16 %v390
        %v777 = vunpack.c.l.b16 %v391
        %v778 = vunpack.c.h.b16 %v391
        %v779 = vunpack.c.l.b16 %v392
        %v780 = vunpack.c.l.b16 %v393
        %v781 = vunpack.c.h.b16 %v393
        %v782 = vunpack.c.l.b16 %v394
        %v783 = vunpack.c.h.b16 %v394
        %v784 = vunpack.c.l.b16 %v395
        %v785 = vunpack.c.h.b16 %v395
        %v786 = vunpack.c.l.b16 %v396
        %v787 = vunpack.c.l.b16 %v397
        %v788 = vunpack.c.h.b16 %v397
        %v789 = vunpack.c.l.b16 %v398
        %v790 = vunpack.c.h.b16 %v398
        %v791 = vunpack.c.l.b16 %v399
        %v792 = vunpack.c.h.b16 %v399
        %v793 = vunpack.c.l.b16 %v400
        %v794 = vunpack.c.l.b16 %v401
        %v795 = vunpack.c.h.b16 %v401
        %v796 = vunpack.c.l.b16 %v402
        %v797 = vunpack.c.h.b16 %v402
        %v798 = vunpack.c.l.b16 %v403
        %v799 = vunpack.c.h.b16 %v403
        %v800 = vunpack.c.l.b16 %v404
        %v801 = vunpack.c.l.b16 %v405
        %v802 = vunpack.c.h.b16 %v405
        %v803 = vunpack.c.l.b16 %v406
        %v804 = vunpack.c.h.b16 %v406
        %v805 = vunpack.c.l.b16 %v407
        %v806 = vunpack.c.h.b16 %v407
        %v807 = vunpack.c.l.b16 %v408
        %v808 = vunpack.c.l.b16 %v409
        %v809 = vunpack.c.h.b16 %v409
        %v810 = vunpack.c.l.b16 %v410
        %v811 = vunpack.c.h.b16 %v410
        %v812 = vunpack.c.l.b16 %v411
        %v813 = vunpack.c.h.b16 %v411
        %v814 = vunpack.c.l.b16 %v412
        %v815 = vunpack.c.l.b16 %v413
        %v816 = vunpack.c.h.b16 %v413
        %v817 = vunpack.c.l.b16 %v414
        %v818 = vunpack.c.h.b16 %v414
        %v819 = vunpack.c.l.b16 %v415
        %v820 = vunpack.c.h.b16 %v415
        %v821 = vunpack.c.l.b16 %v416
        %v822 = vunpack.c.l.b16 %v417
        %v823 = vunpack.c.h.b16 %v417
        %v824 = vunpack.c.l.b16 %v418
        %v825 = vunpack.c.h.b16 %v418
        %v826 = vunpack.c.l.b16 %v419
        %v827 = vunpack.c.h.b16 %v419
        %v828 = vunpack.c.l.b16 %v420
        %v829 = vunpack.c.l.b16 %v421
        %v830 = vunpack.c.h.b16 %v421
        %v831 = vunpack.c.l.b16 %v422
        %v832 = vunpack.c.h.b16 %v422
        %v833 = vunpack.c.l.b16 %v423
        %v834 = vunpack.c.h.b16 %v423
        %v835 = vunpack.c.l.b16 %v424
        %v836 = vunpack.c.l.b16 %v425
        %v837 = vunpack.c.h.b16 %v425
        %v838 = vunpack.c.l.b16 %v426
        %v839 = vunpack.c.h.b16 %v426
        %v840 = vunpack.c.l.b16 %v427
        %v841 = vunpack.c.h.b16 %v427
        %v842 = vunpack.c.l.b16 %v428
        %v843 = vunpack.c.l.b16 %v429
        %v844 = vunpack.c.h.b16 %v429
        %v845 = vunpack.c.l.b16 %v430
        %v846 = vunpack.c.h.b16 %v430
        %v847 = vunpack.c.l.b16 %v431
        %v848 = vunpack.c.h.b16 %v431
        %v849 = vunpack.c.l.b16 %v432
        %v850 = vunpack.c.l.b16 %v433
        %v851 = vunpack.c.h.b16 %v433
        %v852 = vunpack.c.l.b16 %v434
        %v853 = vunpack.c.h.b16 %v434
        %v854 = vunpack.c.l.b16 %v435
        %v855 = vunpack.c.h.b16 %v435
        %v856 = vunpack.c.l.b16 %v436
        %v857 = vunpack.c.l.b16 %v437
        %v858 = vunpack.c.h.b16 %v437
        %v859 = vunpack.c.l.b16 %v438
        %v860 = vunpack.c.h.b16 %v438
        %v861 = vunpack.c.l.b16 %v439
        %v862 = vunpack.c.h.b16 %v439
        %v863 = vunpack.c.l.b16 %v440
        %v864 = vunpack.c.l.b16 %v441
        %v865 = vunpack.c.h.b16 %v441
        %v866 = vunpack.c.l.b16 %v442
        %v867 = vunpack.c.h.b16 %v442
        %v868 = vunpack.c.l.b16 %v443
        %v869 = vunpack.c.h.b16 %v443
        %v870 = vunpack.c.l.b16 %v444
        %v871 = vunpack.c.l.b16 %v445
        %v872 = vunpack.c.h.b16 %v445
        %v873 = vunpack.c.l.b16 %v446
        %v874 = vunpack.c.h.b16 %v446
        %v875 = vunpack.c.l.b16 %v447
        %v876 = vunpack.c.h.b16 %v447
        %v877 = vunpack.c.l.b16 %v448
        %v878 = vunpack.c.l.b16 %v449
        %v879 = vunpack.c.h.b16 %v449
        %v880 = vunpack.c.l.b16 %v450
        %v881 = vunpack.c.h.b16 %v450
        %v882 = vunpack.c.l.b16 %v451
        %v883 = vunpack.c.h.b16 %v451
        %v884 = vunpack.c.l.b16 %v452
        %v885 = vunpack.c.l.b16 %v453
        %v886 = vunpack.c.h.b16 %v453
        %v887 = vunpack.c.l.b16 %v454
        %v888 = vunpack.c.h.b16 %v454
        %v889 = vunpack.c.l.b16 %v455
        %v890 = vunpack.c.h.b16 %v455
        %v891 = vunpack.c.l.b16 %v456
        %v892 = vunpack.c.l.b16 %v457
        %v893 = vunpack.c.h.b16 %v457
        %v894 = vunpack.c.l.b16 %v458
        %v895 = vunpack.c.h.b16 %v458
        %v896 = vunpack.c.l.b16 %v459
        %v897 = vunpack.c.h.b16 %v459
        %v898 = vunpack.c.l.b16 %v460
        %v899 = vunpack.c.l.b16 %v461
        %v900 = vunpack.c.h.b16 %v461
        %v901 = vunpack.c.l.b16 %v462
        %v902 = vunpack.c.h.b16 %v462
        %v903 = vunpack.c.l.b16 %v463
        %v904 = vunpack.c.h.b16 %v463
        %v905 = vunpack.c.l.b16 %v464
        %v906 = vunpack.c.l.b16 %v465
        %v907 = vunpack.c.h.b16 %v465
        %v908 = vunpack.c.l.b16 %v466
        %v909 = vunpack.c.h.b16 %v466
        %v910 = vunpack.c.l.b16 %v467
        %v911 = vunpack.c.h.b16 %v467
        %v912 = vunpack.c.l.b16 %v468
        %v913 = vunpack.c.l.b16 %v469
        %v914 = vunpack.c.h.b16 %v469
        %v915 = vunpack.c.l.b16 %v470
        %v916 = vunpack.c.h.b16 %v470
        %v917 = vunpack.c.l.b16 %v471
        %v918 = vunpack.c.h.b16 %v471
        %v919 = vunpack.c.l.b16 %v472
        %v920 = vunpack.c.l.b16 %v473
        %v921 = vunpack.c.h.b16 %v473
        %v922 = vunpack.c.l.b16 %v474
        %v923 = vunpack.c.h.b16 %v474
        %v924 = vunpack.c.l.b16 %v475
        %v925 = vunpack.c.h.b16 %v475
        %v926 = vunpack.c.l.b16 %v476
        %v927 = vunpack.c.l.b16 %v477
        %v928 = vunpack.c.h.b16 %v477
        %v929 = vunpack.c.l.b16 %v478
        %v930 = vunpack.c.h.b16 %v478
        %v931 = vunpack.c.l.b16 %v479
        %v932 = vunpack.c.h.b16 %v479
        %v933 = vunpack.c.l.b16 %v480
        %v934 = vunpack.c.l.b16 %v481
        %v935 = vunpack.c.h.b16 %v481
        %v936 = vunpack.c.l.b16 %v482
        %v937 = vunpack.c.h.b16 %v482
        %v938 = vunpack.c.l.b16 %v483
        %v939 = vunpack.c.h.b16 %v483
        %v940 = vunpack.c.l.b16 %v484
        %v941 = vunpack.c.l.b16 %v485
        %v942 = vunpack.c.h.b16 %v485
        %v943 = vunpack.c.l.b16 %v486
        %v944 = vunpack.c.h.b16 %v486
        %v945 = vunpack.c.l.b16 %v487
        %v946 = vunpack.c.h.b16 %v487
        %v947 = vunpack.c.l.b16 %v488
        %v948 = vunpack.c.l.b16 %v489
        %v949 = vunpack.c.h.b16 %v489
        %v950 = vunpack.c.l.b16 %v490
        %v951 = vunpack.c.h.b16 %v490
        %v952 = vunpack.c.l.b16 %v491
        %v953 = vunpack.c.h.b16 %v491
        %v954 = vunpack.c.l.b16 %v492
        %v955 = vpack.c.b16 %v738, %v731
        %v956 = vpack.c.b16 %v739, %v732
        %v957 = vpack.c.b16 %v740, %v733
        %v958 = vpack.c.b16 %v741, %v734
        %v959 = vpack.c.b16 %v742, %v735
        %v960 = vpack.c.b16 %v743, %v736
        %v961 = vpack.c.b16 %v744, %v737
        %v962 = vpack.c.b16 %v752, %v745
        %v963 = vpack.c.b16 %v753, %v746
        %v964 = vpack.c.b16 %v754, %v747
        %v965 = vpack.c.b16 %v755, %v748
        %v966 = vpack.c.b16 %v756, %v749
        %v967 = vpack.c.b16 %v757, %v750
        %v968 = vpack.c.b16 %v758, %v751
        %v969 = vpack.c.b16 %v766, %v759
        %v970 = vpack.c.b16 %v767, %v760
        %v971 = vpack.c.b16 %v768, %v761
        %v972 = vpack.c.b16 %v769, %v762
        %v973 = vpack.c.b16 %v770, %v763
        %v974 = vpack.c.b16 %v771, %v764
        %v975 = vpack.c.b16 %v772, %v765
        %v976 = vpack.c.b16 %v780, %v773
        %v977 = vpack.c.b16 %v781, %v774
        %v978 = vpack.c.b16 %v782, %v775
        %v979 = vpack.c.b16 %v783, %v776
        %v980 = vpack.c.b16 %v784, %v777
        %v981 = vpack.c.b16 %v785, %v778
        %v982 = vpack.c.b16 %v786, %v779
        %v983 = vpack.c.b16 %v794, %v787
        %v984 = vpack.c.b16 %v795, %v788
        %v985 = vpack.c.b16 %v796, %v789
        %v986 = vpack.c.b16 %v797, %v790
        %v987 = vpack.c.b16 %v798, %v791
        %v988 = vpack.c.b16 %v799, %v792
        %v989 = vpack.c.b16 %v800, %v793
        %v990 = vpack.c.b16 %v808, %v801
        %v991 = vpack.c.b16 %v809, %v802
        %v992 = vpack.c.b16 %v810, %v803
        %v993 = vpack.c.b16 %v811, %v804
        %v994 = vpack.c.b16 %v812, %v805
        %v995 = vpack.c.b16 %v813, %v806
        %v996 = vpack.c.b16 %v814, %v807
        %v997 = vpack.c.b16 %v822, %v815
        %v998 = vpack.c.b16 %v823, %v816
        %v999 = vpack.c.b16 %v824, %v817
        %v1000 = vpack.c.b16 %v825, %v818
        %v1001 = vpack.c.b16 %v826, %v819
        %v1002 = vpack.c.b16 %v827, %v820
        %v1003 = vpack.c.b16 %v828, %v821
        %v1004 = vpack.c.b16 %v836, %v829
        %v1005 = vpack.c.b16 %v837, %v830
        %v1006 = vpack.c.b16 %v838, %v831
        %v1007 = vpack.c.b16 %v839, %v832
        %v1008 = vpack.c.b16 %v840, %v833
        %v1009 = vpack.c.b16 %v841, %v834
        %v1010 = vpack.c.b16 %v842, %v835
        %v1011 = vpack.c.b16 %v850, %v843
        %v1012 = vpack.c.b16 %v851, %v844
        %v1013 = vpack.c.b16 %v852, %v845
        %v1014 = vpack.c.b16 %v853, %v846
        %v1015 = vpack.c.b16 %v854, %v847
        %v1016 = vpack.c.b16 %v855, %v848
        %v1017 = vpack.c.b16 %v856, %v849
        %v1018 = vpack.c.b16 %v864, %v857
        %v1019 = vpack.c.b16 %v865, %v858
        %v1020 = vpack.c.b16 %v866, %v859
        %v1021 = vpack.c.b16 %v867, %v860
        %v1022 = vpack.c.b16 %v868, %v861
        %v1023 = vpack.c.b16 %v869, %v862
        %v1024 = vpack.c.b16 %v870, %v863
        %v1025 = vpack.c.b16 %v878, %v871
        %v1026 = vpack.c.b16 %v879, %v872
        %v1027 = vpack.c.b16 %v880, %v873
        %v1028 = vpack.c.b16 %v881, %v874
        %v1029 = vpack.c.b16 %v882, %v875
        %v1030 = vpack.c.b16 %v883, %v876
        %v1031 = vpack.c.b16 %v884, %v877
        %v1032 = vpack.c.b16 %v892, %v885
        %v1033 = vpack.c.b16 %v893, %v886
        %v1034 = vpack.c.b16 %v894, %v887
        %v1035 = vpack.c.b16 %v895, %v888
        %v1036 = vpack.c.b16 %v896, %v889
        %v1037 = vpack.c.b16 %v897, %v890
        %v1038 = vpack.c.b16 %v898, %v891
        %v1039 = vpack.c.b16 %v906, %v899
        %v1040 = vpack.c.b16 %v907, %v900
        %v1041 = vpack.c.b16 %v908, %v901
        %v1042 = vpack.c.b16 %v909, %v902
        %v1043 = vpack.c.b16 %v910, %v903
        %v1044 = vpack.c.b16 %v911, %v904
        %v1045 = vpack.c.b16 %v912, %v905
        %v1046 = vpack.c.b16 %v920, %v913
        %v1047 = vpack.c.b16 %v921, %v914
        %v1048 = vpack.c.b16 %v922, %v915
        %v1049 = vpack.c.b16 %v923, %v916
        %v1050 = vpack.c.b16 %v924, %v917
        %v1051 = vpack.c.b16 %v925, %v918
        %v1052 = vpack.c.b16 %v926, %v919
        %v1053 = vpack.c.b16 %v934, %v927
        %v1054 = vpack.c.b16 %v935, %v928
        %v1055 = vpack.c.b16 %v936, %v929
        %v1056 = vpack.c.b16 %v937, %v930
        %v1057 = vpack.c.b16 %v938, %v931
        %v1058 = vpack.c.b16 %v939, %v932
        %v1059 = vpack.c.b16 %v940, %v933
        %v1060 = vpack.c.b16 %v948, %v941
        %v1061 = vpack.c.b16 %v949, %v942
        %v1062 = vpack.c.b16 %v950, %v943
        %v1063 = vpack.c.b16 %v951, %v944
        %v1064 = vpack.c.b16 %v952, %v945
        %v1065 = vpack.c.b16 %v953, %v946
        %v1066 = vpack.c.b16 %v954, %v947
        %v1261 = vunpack.c.l.b16 %v493
        %v1262 = vunpack.c.h.b16 %v493
        %v1263 = vunpack.c.l.b16 %v494
        %v1264 = vunpack.c.h.b16 %v494
        %v1265 = vunpack.c.l.b16 %v495
        %v1266 = vunpack.c.h.b16 %v495
        %v1267 = vunpack.c.l.b16 %v496
        %v1268 = vunpack.c.h.b16 %v496
        %v1269 = vunpack.c.l.b16 %v497
        %v1270 = vunpack.c.h.b16 %v497
        %v1271 = vunpack.c.l.b16 %v498
        %v1272 = vunpack.c.h.b16 %v498
        %v1273 = vunpack.c.l.b16 %v499
        %v1274 = vunpack.c.h.b16 %v499
        %v1275 = vunpack.c.l.b16 %v500
        %v1276 = vunpack.c.h.b16 %v500
        %v1277 = vunpack.c.l.b16 %v501
        %v1278 = vunpack.c.h.b16 %v501
        %v1279 = vunpack.c.l.b16 %v502
        %v1280 = vunpack.c.h.b16 %v502
        %v1281 = vunpack.c.l.b16 %v503
        %v1282 = vunpack.c.h.b16 %v503
        %v1283 = vunpack.c.l.b16 %v504
        %v1284 = vunpack.c.h.b16 %v504
        %v1285 = vunpack.c.l.b16 %v505
        %v1286 = vunpack.c.h.b16 %v505
        %v1287 = vunpack.c.l.b16 %v506
        %v1288 = vunpack.c.h.b16 %v506
        %v1289 = vunpack.c.l.b16 %v507
        %v1290 = vunpack.c.h.b16 %v507
        %v1291 = vunpack.c.l.b16 %v508
        %v1292 = vunpack.c.h.b16 %v508
        %v1293 = vunpack.c.l.b16 %v509
        %v1294 = vunpack.c.h.b16 %v509
        %v1295 = vunpack.c.l.b16 %v510
        %v1296 = vunpack.c.h.b16 %v510
        %v1297 = vunpack.c.l.b16 %v511
        %v1298 = vunpack.c.h.b16 %v511
        %v1299 = vunpack.c.l.b16 %v512
        %v1300 = vunpack.c.h.b16 %v512
        %v1301 = vunpack.c.l.b16 %v513
        %v1302 = vunpack.c.h.b16 %v513
        %v1303 = vunpack.c.l.b16 %v514
        %v1304 = vunpack.c.h.b16 %v514
        %v1305 = vunpack.c.l.b16 %v515
        %v1306 = vunpack.c.h.b16 %v515
        %v1307 = vunpack.c.l.b16 %v516
        %v1308 = vunpack.c.h.b16 %v516
        %v1309 = vunpack.c.l.b16 %v517
        %v1310 = vunpack.c.h.b16 %v517
        %v1311 = vunpack.c.l.b16 %v518
        %v1312 = vunpack.c.h.b16 %v518
        %v1313 = vunpack.c.l.b16 %v519
        %v1314 = vunpack.c.h.b16 %v519
        %v1315 = vunpack.c.l.b16 %v520
        %v1316 = vunpack.c.h.b16 %v520
        %v1317 = vunpack.c.l.b16 %v521
        %v1318 = vunpack.c.h.b16 %v521
        %v1319 = vunpack.c.l.b16 %v522
        %v1320 = vunpack.c.h.b16 %v522
        %v1321 = vunpack.c.l.b16 %v523
        %v1322 = vunpack.c.h.b16 %v523
        %v1323 = vunpack.c.l.b16 %v524
        %v1324 = vunpack.c.h.b16 %v524
        %v1325 = vunpack.c.l.b16 %v525
        %v1326 = vunpack.c.h.b16 %v525
        %v1327 = vunpack.c.l.b16 %v526
        %v1328 = vunpack.c.h.b16 %v526
        %v1329 = vunpack.c.l.b16 %v527
        %v1330 = vunpack.c.h.b16 %v527
        %v1331 = vunpack.c.l.b16 %v528
        %v1332 = vunpack.c.h.b16 %v528
        %v1333 = vunpack.c.l.b16 %v529
        %v1334 = vunpack.c.h.b16 %v529
        %v1335 = vunpack.c.l.b16 %v530
        %v1336 = vunpack.c.h.b16 %v530
        %v1337 = vunpack.c.l.b16 %v531
        %v1338 = vunpack.c.h.b16 %v531
        %v1339 = vunpack.c.l.b16 %v532
        %v1340 = vunpack.c.h.b16 %v532
        %v1341 = vunpack.c.l.b16 %v533
        %v1342 = vunpack.c.h.b16 %v533
        %v1343 = vunpack.c.l.b16 %v534
        %v1344 = vunpack.c.h.b16 %v534
        %v1345 = vunpack.c.l.b16 %v535
        %v1346 = vunpack.c.h.b16 %v535
        %v1347 = vunpack.c.l.b16 %v536
        %v1348 = vunpack.c.h.b16 %v536
        %v1349 = vunpack.c.l.b16 %v537
        %v1350 = vunpack.c.h.b16 %v537
        %v1351 = vunpack.c.l.b16 %v538
        %v1352 = vunpack.c.h.b16 %v538
        %v1353 = vunpack.c.l.b16 %v539
        %v1354 = vunpack.c.h.b16 %v539
        %v1355 = vunpack.c.l.b16 %v540
        %v1356 = vunpack.c.h.b16 %v540
        %v1357 = vunpack.c.l.b16 %v541
        %v1358 = vunpack.c.h.b16 %v541
        %v1359 = vunpack.c.l.b16 %v542
        %v1360 = vunpack.c.h.b16 %v542
        %v1361 = vunpack.c.l.b16 %v543
        %v1362 = vunpack.c.h.b16 %v543
        %v1363 = vunpack.c.l.b16 %v544
        %v1364 = vunpack.c.h.b16 %v544
        %v1365 = vunpack.c.l.b16 %v545
        %v1366 = vunpack.c.h.b16 %v545
        %v1367 = vunpack.c.l.b16 %v546
        %v1368 = vunpack.c.h.b16 %v546
        %v1369 = vunpack.c.l.b16 %v547
        %v1370 = vunpack.c.h.b16 %v547
        %v1371 = vunpack.c.l.b16 %v548
        %v1372 = vunpack.c.h.b16 %v548
        %v1373 = vunpack.c.l.b16 %v549
        %v1374 = vunpack.c.h.b16 %v549
        %v1375 = vunpack.c.l.b16 %v550
        %v1376 = vunpack.c.h.b16 %v550
        %v1377 = vunpack.c.l.b16 %v551
        %v1378 = vunpack.c.h.b16 %v551
        %v1379 = vunpack.c.l.b16 %v552
        %v1380 = vunpack.c.h.b16 %v552
        %v1381 = vunpack.c.l.b16 %v553
        %v1382 = vunpack.c.h.b16 %v553
        %v1383 = vunpack.c.l.b16 %v554
        %v1384 = vunpack.c.h.b16 %v554
        %v1385 = vunpack.c.l.b16 %v555
        %v1386 = vunpack.c.h.b16 %v555
        %v1387 = vunpack.c.l.b16 %v556
        %v1388 = vunpack.c.h.b16 %v556
        %v1389 = vunpack.c.l.b16 %v557
        %v1390 = vunpack.c.h.b16 %v557
        %v1391 = vunpack.c.l.b16 %v558
        %v1392 = vunpack.c.h.b16 %v558
        %v1393 = vunpack.c.l.b16 %v559
        %v1394 = vunpack.c.h.b16 %v559
        %v1395 = vunpack.c.l.b16 %v560
        %v1396 = vunpack.c.h.b16 %v560
        %v1397 = vunpack.c.l.b16 %v561
        %v1398 = vunpack.c.h.b16 %v561
        %v1399 = vunpack.c.l.b16 %v562
        %v1400 = vunpack.c.h.b16 %v562
        %v1401 = vunpack.c.l.b16 %v563
        %v1402 = vunpack.c.h.b16 %v563
        %v1403 = vunpack.c.l.b16 %v564
        %v1404 = vunpack.c.h.b16 %v564
        %v1405 = vunpack.c.l.b16 %v565
        %v1406 = vunpack.c.h.b16 %v565
        %v1407 = vunpack.c.l.b16 %v566
        %v1408 = vunpack.c.h.b16 %v566
        %v1409 = vunpack.c.l.b16 %v567
        %v1410 = vunpack.c.h.b16 %v567
        %v1411 = vunpack.c.l.b16 %v568
        %v1412 = vunpack.c.h.b16 %v568
        %v1413 = vunpack.c.l.b16 %v569
        %v1414 = vunpack.c.h.b16 %v569
        %v1415 = vunpack.c.l.b16 %v570
        %v1416 = vunpack.c.h.b16 %v570
        %v1417 = vunpack.c.l.b16 %v571
        %v1418 = vunpack.c.h.b16 %v571
        %v1419 = vunpack.c.l.b16 %v572
        %v1420 = vunpack.c.h.b16 %v572
        %v1421 = vunpack.c.l.b16 %v573
        %v1422 = vunpack.c.h.b16 %v573
        %v1423 = vunpack.c.l.b16 %v574
        %v1424 = vunpack.c.h.b16 %v574
        %v1425 = vunpack.c.l.b16 %v575
        %v1426 = vunpack.c.h.b16 %v575
        %v1427 = vunpack.c.l.b16 %v576
        %v1428 = vunpack.c.h.b16 %v576
        %v1429 = vunpack.c.l.b16 %v577
        %v1430 = vunpack.c.h.b16 %v577
        %v1431 = vunpack.c.l.b16 %v578
        %v1432 = vunpack.c.h.b16 %v578
        %v1433 = vunpack.c.l.b16 %v579
        %v1434 = vunpack.c.h.b16 %v579
        %v1435 = vunpack.c.l.b16 %v580
        %v1436 = vunpack.c.h.b16 %v580
        %v1437 = vunpack.c.l.b16 %v581
        %v1438 = vunpack.c.h.b16 %v581
        %v1439 = vunpack.c.l.b16 %v582
        %v1440 = vunpack.c.h.b16 %v582
        %v1441 = vunpack.c.l.b16 %v583
        %v1442 = vunpack.c.h.b16 %v583
        %v1443 = vunpack.c.l.b16 %v584
        %v1444 = vunpack.c.h.b16 %v584
        %v1445 = vunpack.c.l.b16 %v585
        %v1446 = vunpack.c.h.b16 %v585
        %v1447 = vunpack.c.l.b16 %v586
        %v1448 = vunpack.c.h.b16 %v586
        %v1449 = vunpack.c.l.b16 %v587
        %v1450 = vunpack.c.h.b16 %v587
        %v1451 = vunpack.c.l.b16 %v588
        %v1452 = vunpack.c.h.b16 %v588
        %v1453 = vunpack.c.l.b16 %v589
        %v1454 = vunpack.c.h.b16 %v589
        %v1455 = vunpack.c.l.b16 %v590
        %v1456 = vunpack.c.h.b16 %v590
        %v1457 = vpack.c.b16 %v1263, %v1261
        %v1458 = vpack.c.b16 %v1264, %v1262
        %v1459 = vpack.c.b16 %v1267, %v1265
        %v1460 = vpack.c.b16 %v1268, %v1266
        %v1461 = vpack.c.b16 %v1271, %v1269
        %v1462 = vpack.c.b16 %v1272, %v1270
        %v1463 = vpack.c.b16 %v1275, %v1273
        %v1464 = vpack.c.b16 %v1276, %v1274
        %v1465 = vpack.c.b16 %v1279, %v1277
        %v1466 = vpack.c.b16 %v1280, %v1278
        %v1467 = vpack.c.b16 %v1283, %v1281
        %v1468 = vpack.c.b16 %v1284, %v1282
        %v1469 = vpack.c.b16 %v1287, %v1285
        %v1470 = vpack.c.b16 %v1288, %v1286
        %v1471 = vpack.c.b16 %v1291, %v1289
        %v1472 = vpack.c.b16 %v1292, %v1290
        %v1473 = vpack.c.b16 %v1295, %v1293
        %v1474 = vpack.c.b16 %v1296, %v1294
        %v1475 = vpack.c.b16 %v1299, %v1297
        %v1476 = vpack.c.b16 %v1300, %v1298
        %v1477 = vpack.c.b16 %v1303, %v1301
        %v1478 = vpack.c.b16 %v1304, %v1302
        %v1479 = vpack.c.b16 %v1307, %v1305
        %v1480 = vpack.c.b16 %v1308, %v1306
        %v1481 = vpack.c.b16 %v1311, %v1309
        %v1482 = vpack.c.b16 %v1312, %v1310
        %v1483 = vpack.c.b16 %v1315, %v1313
        %v1484 = vpack.c.b16 %v1316, %v1314
        %v1485 = vpack.c.b16 %v1319, %v1317
        %v1486 = vpack.c.b16 %v1320, %v1318
        %v1487 = vpack.c.b16 %v1323, %v1321
        %v1488 = vpack.c.b16 %v1324, %v1322
        %v1489 = vpack.c.b16 %v1327, %v1325
        %v1490 = vpack.c.b16 %v1328, %v1326
        %v1491 = vpack.c.b16 %v1331, %v1329
        %v1492 = vpack.c.b16 %v1332, %v1330
        %v1493 = vpack.c.b16 %v1335, %v1333
        %v1494 = vpack.c.b16 %v1336, %v1334
        %v1495 = vpack.c.b16 %v1339, %v1337
        %v1496 = vpack.c.b16 %v1340, %v1338
        %v1497 = vpack.c.b16 %v1343, %v1341
        %v1498 = vpack.c.b16 %v1344, %v1342
        %v1499 = vpack.c.b16 %v1347, %v1345
        %v1500 = vpack.c.b16 %v1348, %v1346
        %v1501 = vpack.c.b16 %v1351, %v1349
        %v1502 = vpack.c.b16 %v1352, %v1350
        %v1503 = vpack.c.b16 %v1355, %v1353
        %v1504 = vpack.c.b16 %v1356, %v1354
        %v1505 = vpack.c.b16 %v1359, %v1357
        %v1506 = vpack.c.b16 %v1360, %v1358
        %v1507 = vpack.c.b16 %v1363, %v1361
        %v1508 = vpack.c.b16 %v1364, %v1362
        %v1509 = vpack.c.b16 %v1367, %v1365
        %v1510 = vpack.c.b16 %v1368, %v1366
        %v1511 = vpack.c.b16 %v1371, %v1369
        %v1512 = vpack.c.b16 %v1372, %v1370
        %v1513 = vpack.c.b16 %v1375, %v1373
        %v1514 = vpack.c.b16 %v1376, %v1374
        %v1515 = vpack.c.b16 %v1379, %v1377
        %v1516 = vpack.c.b16 %v1380, %v1378
        %v1517 = vpack.c.b16 %v1383, %v1381
        %v1518 = vpack.c.b16 %v1384, %v1382
        %v1519 = vpack.c.b16 %v1387, %v1385
        %v1520 = vpack.c.b16 %v1388, %v1386
        %v1521 = vpack.c.b16 %v1391, %v1389
        %v1522 = vpack.c.b16 %v1392, %v1390
        %v1523 = vpack.c.b16 %v1395, %v1393
        %v1524 = vpack.c.b16 %v1396, %v1394
        %v1525 = vpack.c.b16 %v1399, %v1397
        %v1526 = vpack.c.b16 %v1400, %v1398
        %v1527 = vpack.c.b16 %v1403, %v1401
        %v1528 = vpack.c.b16 %v1404, %v1402
        %v1529 = vpack.c.b16 %v1407, %v1405
        %v1530 = vpack.c.b16 %v1408, %v1406
        %v1531 = vpack.c.b16 %v1411, %v1409
        %v1532 = vpack.c.b16 %v1412, %v1410
        %v1533 = vpack.c.b16 %v1415, %v1413
        %v1534 = vpack.c.b16 %v1416, %v1414
        %v1535 = vpack.c.b16 %v1419, %v1417
        %v1536 = vpack.c.b16 %v1420, %v1418
        %v1537 = vpack.c.b16 %v1423, %v1421
        %v1538 = vpack.c.b16 %v1424, %v1422
        %v1539 = vpack.c.b16 %v1427, %v1425
        %v1540 = vpack.c.b16 %v1428, %v1426
        %v1541 = vpack.c.b16 %v1431, %v1429
        %v1542 = vpack.c.b16 %v1432, %v1430
        %v1543 = vpack.c.b16 %v1435, %v1433
        %v1544 = vpack.c.b16 %v1436, %v1434
        %v1545 = vpack.c.b16 %v1439, %v1437
        %v1546 = vpack.c.b16 %v1440, %v1438
        %v1547 = vpack.c.b16 %v1443, %v1441
        %v1548 = vpack.c.b16 %v1444, %v1442
        %v1549 = vpack.c.b16 %v1447, %v1445
        %v1550 = vpack.c.b16 %v1448, %v1446
        %v1551 = vpack.c.b16 %v1451, %v1449
        %v1552 = vpack.c.b16 %v1452, %v1450
        %v1553 = vpack.c.b16 %v1455, %v1453
        %v1554 = vpack.c.b16 %v1456, %v1454
        %vm1653 = vcmask 130048
        %v1655 = vsel %vm1653, %v961, 0
        %v1658 = vsel %vm1653, %v968, 0
        %v1661 = vsel %vm1653, %v975, 0
        %v1664 = vsel %vm1653, %v982, 0
        %v1667 = vsel %vm1653, %v989, 0
        %v1670 = vsel %vm1653, %v996, 0
        %v1673 = vsel %vm1653, %v1003, 0
        %v1676 = vsel %vm1653, %v1010, 0
        %v1679 = vsel %vm1653, %v1017, 0
        %v1682 = vsel %vm1653, %v1024, 0
        %v1685 = vsel %vm1653, %v1031, 0
        %v1688 = vsel %vm1653, %v1038, 0
        %v1691 = vsel %vm1653, %v1045, 0
        %v1694 = vsel %vm1653, %v1052, 0
        %v1697 = vsel %vm1653, %v1059, 0
        %v1700 = vsel %vm1653, %v1066, 0
        %1702 = vmatprep.subr.bf16.mxu0 %v1472
        %1703 = vmatpush1.bf16.msra.mxu0 %v1471
        %1704 = vmatprep.subr.bf16.mxu0 %v1470
        %1705 = vmatpush1.bf16.msra.mxu0 %v1469
        %1706 = vmatprep.subr.bf16.mxu0 %v1468
        %1707 = vmatpush1.bf16.msra.mxu0 %v1467
        %1708 = vmatprep.subr.bf16.mxu0 %v1466
        %1709 = vmatpush1.bf16.msra.mxu0 %v1465
        %1710 = vmatprep.subr.bf16.mxu0 %v1464
        %1711 = vmatpush1.bf16.msra.mxu0 %v1463
        %1712 = vmatprep.subr.bf16.mxu0 %v1462
        %1713 = vmatpush1.bf16.msra.mxu0 %v1461
        %1714 = vmatprep.subr.bf16.mxu0 %v1460
        %1715 = vmatpush1.bf16.msra.mxu0 %v1459
        %1716 = vmatprep.subr.bf16.mxu0 %v1458
        %1717 = vmatpush1.bf16.msra.mxu0 %v1457
        %1718 = vmatprep.subr.bf16.mxu0 %v1488
        %1719 = vmatpush2.bf16.msra.mxu0 %v1487
        %1720 = vmatprep.subr.bf16.mxu0 %v1486
        %1721 = vmatpush2.bf16.msra.mxu0 %v1485
        %1722 = vmatprep.subr.bf16.mxu0 %v1484
        %1723 = vmatpush2.bf16.msra.mxu0 %v1483
        %1724 = vmatprep.subr.bf16.mxu0 %v1482
        %1725 = vmatpush2.bf16.msra.mxu0 %v1481
        %1726 = vmatprep.subr.bf16.mxu0 %v1480
        %1727 = vmatpush2.bf16.msra.mxu0 %v1479
        %1728 = vmatprep.subr.bf16.mxu0 %v1478
        %1729 = vmatpush2.bf16.msra.mxu0 %v1477
        %1730 = vmatprep.subr.bf16.mxu0 %v1476
        %1731 = vmatpush2.bf16.msra.mxu0 %v1475
        %1732 = vmatprep.subr.bf16.mxu0 %v1474
        %1733 = vmatpush2.bf16.msra.mxu0 %v1473
        %1734 = vmatprep.mubr.bf16.mxu0 %v956
        %1735 = vmatmul.mubr.bf16.gmra.mxu0 %v955
        %v1736 = vpop.f32.mrf.mxu0
        %v1737 = vadd.f32 %v596, %v1736
        %v1738 = vpop.f32.mrf.mxu0
        %v1739 = vadd.f32 %v600, %v1738
        %v1740 = vpop.f32.mrf.mxu0
        %v1741 = vadd.f32 %v596, %v1740
        %v1742 = vpop.f32.mrf.mxu0
        %v1743 = vadd.f32 %v600, %v1742
        %1744 = vmatprep.mubr.bf16.mxu0 %v963
        %1745 = vmatmul.mubr.bf16.gmra.mxu0 %v962
        %v1746 = vpop.f32.mrf.mxu0
        %v1747 = vadd.f32 %v596, %v1746
        %v1748 = vpop.f32.mrf.mxu0
        %v1749 = vadd.f32 %v600, %v1748
        %v1750 = vpop.f32.mrf.mxu0
        %v1751 = vadd.f32 %v596, %v1750
        %v1752 = vpop.f32.mrf.mxu0
        %v1753 = vadd.f32 %v600, %v1752
        %1754 = vmatprep.mubr.bf16.mxu0 %v970
        %1755 = vmatmul.mubr.bf16.gmra.mxu0 %v969
        %v1756 = vpop.f32.mrf.mxu0
        %v1757 = vadd.f32 %v596, %v1756
        %v1758 = vpop.f32.mrf.mxu0
        %v1759 = vadd.f32 %v600, %v1758
        %v1760 = vpop.f32.mrf.mxu0
        %v1761 = vadd.f32 %v596, %v1760
        %v1762 = vpop.f32.mrf.mxu0
        %v1763 = vadd.f32 %v600, %v1762
        %1764 = vmatprep.mubr.bf16.mxu0 %v977
        %1765 = vmatmul.mubr.bf16.gmra.mxu0 %v976
        %v1766 = vpop.f32.mrf.mxu0
        %v1767 = vadd.f32 %v596, %v1766
        %v1768 = vpop.f32.mrf.mxu0
        %v1769 = vadd.f32 %v600, %v1768
        %v1770 = vpop.f32.mrf.mxu0
        %v1771 = vadd.f32 %v596, %v1770
        %v1772 = vpop.f32.mrf.mxu0
        %v1773 = vadd.f32 %v600, %v1772
        %1774 = vmatprep.mubr.bf16.mxu0 %v984
        %1775 = vmatmul.mubr.bf16.gmra.mxu0 %v983
        %v1776 = vpop.f32.mrf.mxu0
        %v1777 = vadd.f32 %v596, %v1776
        %v1778 = vpop.f32.mrf.mxu0
        %v1779 = vadd.f32 %v600, %v1778
        %v1780 = vpop.f32.mrf.mxu0
        %v1781 = vadd.f32 %v596, %v1780
        %v1782 = vpop.f32.mrf.mxu0
        %v1783 = vadd.f32 %v600, %v1782
        %1784 = vmatprep.mubr.bf16.mxu0 %v991
        %1785 = vmatmul.mubr.bf16.gmra.mxu0 %v990
        %v1786 = vpop.f32.mrf.mxu0
        %v1787 = vadd.f32 %v596, %v1786
        %v1788 = vpop.f32.mrf.mxu0
        %v1789 = vadd.f32 %v600, %v1788
        %v1790 = vpop.f32.mrf.mxu0
        %v1791 = vadd.f32 %v596, %v1790
        %v1792 = vpop.f32.mrf.mxu0
        %v1793 = vadd.f32 %v600, %v1792
        %1794 = vmatprep.mubr.bf16.mxu0 %v998
        %1795 = vmatmul.mubr.bf16.gmra.mxu0 %v997
        %v1796 = vpop.f32.mrf.mxu0
        %v1797 = vadd.f32 %v596, %v1796
        %v1798 = vpop.f32.mrf.mxu0
        %v1799 = vadd.f32 %v600, %v1798
        %v1800 = vpop.f32.mrf.mxu0
        %v1801 = vadd.f32 %v596, %v1800
        %v1802 = vpop.f32.mrf.mxu0
        %v1803 = vadd.f32 %v600, %v1802
        %1804 = vmatprep.mubr.bf16.mxu0 %v1005
        %1805 = vmatmul.mubr.bf16.gmra.mxu0 %v1004
        %v1806 = vpop.f32.mrf.mxu0
        %v1807 = vadd.f32 %v596, %v1806
        %v1808 = vpop.f32.mrf.mxu0
        %v1809 = vadd.f32 %v600, %v1808
        %v1810 = vpop.f32.mrf.mxu0
        %v1811 = vadd.f32 %v596, %v1810
        %v1812 = vpop.f32.mrf.mxu0
        %v1813 = vadd.f32 %v600, %v1812
        %1814 = vmatprep.mubr.bf16.mxu0 %v1012
        %1815 = vmatmul.mubr.bf16.gmra.mxu0 %v1011
        %v1816 = vpop.f32.mrf.mxu0
        %v1817 = vadd.f32 %v596, %v1816
        %v1818 = vpop.f32.mrf.mxu0
        %v1819 = vadd.f32 %v600, %v1818
        %v1820 = vpop.f32.mrf.mxu0
        %v1821 = vadd.f32 %v596, %v1820
        %v1822 = vpop.f32.mrf.mxu0
        %v1823 = vadd.f32 %v600, %v1822
        %1824 = vmatprep.mubr.bf16.mxu0 %v1019
        %1825 = vmatmul.mubr.bf16.gmra.mxu0 %v1018
        %v1826 = vpop.f32.mrf.mxu0
        %v1827 = vadd.f32 %v596, %v1826
        %v1828 = vpop.f32.mrf.mxu0
        %v1829 = vadd.f32 %v600, %v1828
        %v1830 = vpop.f32.mrf.mxu0
        %v1831 = vadd.f32 %v596, %v1830
        %v1832 = vpop.f32.mrf.mxu0
        %v1833 = vadd.f32 %v600, %v1832
        %1834 = vmatprep.mubr.bf16.mxu0 %v1026
        %1835 = vmatmul.mubr.bf16.gmra.mxu0 %v1025
        %v1836 = vpop.f32.mrf.mxu0
        %v1837 = vadd.f32 %v596, %v1836
        %v1838 = vpop.f32.mrf.mxu0
        %v1839 = vadd.f32 %v600, %v1838
        %v1840 = vpop.f32.mrf.mxu0
        %v1841 = vadd.f32 %v596, %v1840
        %v1842 = vpop.f32.mrf.mxu0
        %v1843 = vadd.f32 %v600, %v1842
        %1844 = vmatprep.mubr.bf16.mxu0 %v1033
        %1845 = vmatmul.mubr.bf16.gmra.mxu0 %v1032
        %v1846 = vpop.f32.mrf.mxu0
        %v1847 = vadd.f32 %v596, %v1846
        %v1848 = vpop.f32.mrf.mxu0
        %v1849 = vadd.f32 %v600, %v1848
        %v1850 = vpop.f32.mrf.mxu0
        %v1851 = vadd.f32 %v596, %v1850
        %v1852 = vpop.f32.mrf.mxu0
        %v1853 = vadd.f32 %v600, %v1852
        %1854 = vmatprep.mubr.bf16.mxu0 %v1040
        %1855 = vmatmul.mubr.bf16.gmra.mxu0 %v1039
        %v1856 = vpop.f32.mrf.mxu0
        %v1857 = vadd.f32 %v596, %v1856
        %v1858 = vpop.f32.mrf.mxu0
        %v1859 = vadd.f32 %v600, %v1858
        %v1860 = vpop.f32.mrf.mxu0
        %v1861 = vadd.f32 %v596, %v1860
        %v1862 = vpop.f32.mrf.mxu0
        %v1863 = vadd.f32 %v600, %v1862
        %1864 = vmatprep.mubr.bf16.mxu0 %v1047
        %1865 = vmatmul.mubr.bf16.gmra.mxu0 %v1046
        %v1866 = vpop.f32.mrf.mxu0
        %v1867 = vadd.f32 %v596, %v1866
        %v1868 = vpop.f32.mrf.mxu0
        %v1869 = vadd.f32 %v600, %v1868
        %v1870 = vpop.f32.mrf.mxu0
        %v1871 = vadd.f32 %v596, %v1870
        %v1872 = vpop.f32.mrf.mxu0
        %v1873 = vadd.f32 %v600, %v1872
        %1874 = vmatprep.mubr.bf16.mxu0 %v1054
        %1875 = vmatmul.mubr.bf16.gmra.mxu0 %v1053
        %v1876 = vpop.f32.mrf.mxu0
        %v1877 = vadd.f32 %v596, %v1876
        %v1878 = vpop.f32.mrf.mxu0
        %v1879 = vadd.f32 %v600, %v1878
        %v1880 = vpop.f32.mrf.mxu0
        %v1881 = vadd.f32 %v596, %v1880
        %v1882 = vpop.f32.mrf.mxu0
        %v1883 = vadd.f32 %v600, %v1882
        %1884 = vmatprep.mubr.bf16.mxu0 %v1061
        %1885 = vmatmul.mubr.bf16.gmra.mxu0 %v1060
        %v1886 = vpop.f32.mrf.mxu0
        %v1887 = vadd.f32 %v596, %v1886
        %v1888 = vpop.f32.mrf.mxu0
        %v1889 = vadd.f32 %v600, %v1888
        %v1890 = vpop.f32.mrf.mxu0
        %v1891 = vadd.f32 %v596, %v1890
        %v1892 = vpop.f32.mrf.mxu0
        %v1893 = vadd.f32 %v600, %v1892
        %1894 = vdwg.mxu0
        %1895 = vmatprep.subr.bf16.mxu0 %v1504
        %1896 = vmatpush1.bf16.msra.mxu0 %v1503
        %1897 = vmatprep.subr.bf16.mxu0 %v1502
        %1898 = vmatpush1.bf16.msra.mxu0 %v1501
        %1899 = vmatprep.subr.bf16.mxu0 %v1500
        %1900 = vmatpush1.bf16.msra.mxu0 %v1499
        %1901 = vmatprep.subr.bf16.mxu0 %v1498
        %1902 = vmatpush1.bf16.msra.mxu0 %v1497
        %1903 = vmatprep.subr.bf16.mxu0 %v1496
        %1904 = vmatpush1.bf16.msra.mxu0 %v1495
        %1905 = vmatprep.subr.bf16.mxu0 %v1494
        %1906 = vmatpush1.bf16.msra.mxu0 %v1493
        %1907 = vmatprep.subr.bf16.mxu0 %v1492
        %1908 = vmatpush1.bf16.msra.mxu0 %v1491
        %1909 = vmatprep.subr.bf16.mxu0 %v1490
        %1910 = vmatpush1.bf16.msra.mxu0 %v1489
        %1911 = vmatprep.subr.bf16.mxu0 %v1520
        %1912 = vmatpush2.bf16.msra.mxu0 %v1519
        %1913 = vmatprep.subr.bf16.mxu0 %v1518
        %1914 = vmatpush2.bf16.msra.mxu0 %v1517
        %1915 = vmatprep.subr.bf16.mxu0 %v1516
        %1916 = vmatpush2.bf16.msra.mxu0 %v1515
        %1917 = vmatprep.subr.bf16.mxu0 %v1514
        %1918 = vmatpush2.bf16.msra.mxu0 %v1513
        %1919 = vmatprep.subr.bf16.mxu0 %v1512
        %1920 = vmatpush2.bf16.msra.mxu0 %v1511
        %1921 = vmatprep.subr.bf16.mxu0 %v1510
        %1922 = vmatpush2.bf16.msra.mxu0 %v1509
        %1923 = vmatprep.subr.bf16.mxu0 %v1508
        %1924 = vmatpush2.bf16.msra.mxu0 %v1507
        %1925 = vmatprep.subr.bf16.mxu0 %v1506
        %1926 = vmatpush2.bf16.msra.mxu0 %v1505
        %1927 = vmatprep.mubr.bf16.mxu0 %v958
        %1928 = vmatmul.mubr.bf16.gmra.mxu0 %v957
        %v1929 = vpop.f32.mrf.mxu0
        %v1930 = vadd.f32 %v1737, %v1929
        %v1931 = vpop.f32.mrf.mxu0
        %v1932 = vadd.f32 %v1739, %v1931
        %v1933 = vpop.f32.mrf.mxu0
        %v1934 = vadd.f32 %v1741, %v1933
        %v1935 = vpop.f32.mrf.mxu0
        %v1936 = vadd.f32 %v1743, %v1935
        %1937 = vmatprep.mubr.bf16.mxu0 %v965
        %1938 = vmatmul.mubr.bf16.gmra.mxu0 %v964
        %v1939 = vpop.f32.mrf.mxu0
        %v1940 = vadd.f32 %v1747, %v1939
        %v1941 = vpop.f32.mrf.mxu0
        %v1942 = vadd.f32 %v1749, %v1941
        %v1943 = vpop.f32.mrf.mxu0
        %v1944 = vadd.f32 %v1751, %v1943
        %v1945 = vpop.f32.mrf.mxu0
        %v1946 = vadd.f32 %v1753, %v1945
        %1947 = vmatprep.mubr.bf16.mxu0 %v972
        %1948 = vmatmul.mubr.bf16.gmra.mxu0 %v971
        %v1949 = vpop.f32.mrf.mxu0
        %v1950 = vadd.f32 %v1757, %v1949
        %v1951 = vpop.f32.mrf.mxu0
        %v1952 = vadd.f32 %v1759, %v1951
        %v1953 = vpop.f32.mrf.mxu0
        %v1954 = vadd.f32 %v1761, %v1953
        %v1955 = vpop.f32.mrf.mxu0
        %v1956 = vadd.f32 %v1763, %v1955
        %1957 = vmatprep.mubr.bf16.mxu0 %v979
        %1958 = vmatmul.mubr.bf16.gmra.mxu0 %v978
        %v1959 = vpop.f32.mrf.mxu0
        %v1960 = vadd.f32 %v1767, %v1959
        %v1961 = vpop.f32.mrf.mxu0
        %v1962 = vadd.f32 %v1769, %v1961
        %v1963 = vpop.f32.mrf.mxu0
        %v1964 = vadd.f32 %v1771, %v1963
        %v1965 = vpop.f32.mrf.mxu0
        %v1966 = vadd.f32 %v1773, %v1965
        %1967 = vmatprep.mubr.bf16.mxu0 %v986
        %1968 = vmatmul.mubr.bf16.gmra.mxu0 %v985
        %v1969 = vpop.f32.mrf.mxu0
        %v1970 = vadd.f32 %v1777, %v1969
        %v1971 = vpop.f32.mrf.mxu0
        %v1972 = vadd.f32 %v1779, %v1971
        %v1973 = vpop.f32.mrf.mxu0
        %v1974 = vadd.f32 %v1781, %v1973
        %v1975 = vpop.f32.mrf.mxu0
        %v1976 = vadd.f32 %v1783, %v1975
        %1977 = vmatprep.mubr.bf16.mxu0 %v993
        %1978 = vmatmul.mubr.bf16.gmra.mxu0 %v992
        %v1979 = vpop.f32.mrf.mxu0
        %v1980 = vadd.f32 %v1787, %v1979
        %v1981 = vpop.f32.mrf.mxu0
        %v1982 = vadd.f32 %v1789, %v1981
        %v1983 = vpop.f32.mrf.mxu0
        %v1984 = vadd.f32 %v1791, %v1983
        %v1985 = vpop.f32.mrf.mxu0
        %v1986 = vadd.f32 %v1793, %v1985
        %1987 = vmatprep.mubr.bf16.mxu0 %v1000
        %1988 = vmatmul.mubr.bf16.gmra.mxu0 %v999
        %v1989 = vpop.f32.mrf.mxu0
        %v1990 = vadd.f32 %v1797, %v1989
        %v1991 = vpop.f32.mrf.mxu0
        %v1992 = vadd.f32 %v1799, %v1991
        %v1993 = vpop.f32.mrf.mxu0
        %v1994 = vadd.f32 %v1801, %v1993
        %v1995 = vpop.f32.mrf.mxu0
        %v1996 = vadd.f32 %v1803, %v1995
        %1997 = vmatprep.mubr.bf16.mxu0 %v1007
        %1998 = vmatmul.mubr.bf16.gmra.mxu0 %v1006
        %v1999 = vpop.f32.mrf.mxu0
        %v2000 = vadd.f32 %v1807, %v1999
        %v2001 = vpop.f32.mrf.mxu0
        %v2002 = vadd.f32 %v1809, %v2001
        %v2003 = vpop.f32.mrf.mxu0
        %v2004 = vadd.f32 %v1811, %v2003
        %v2005 = vpop.f32.mrf.mxu0
        %v2006 = vadd.f32 %v1813, %v2005
        %2007 = vmatprep.mubr.bf16.mxu0 %v1014
        %2008 = vmatmul.mubr.bf16.gmra.mxu0 %v1013
        %v2009 = vpop.f32.mrf.mxu0
        %v2010 = vadd.f32 %v1817, %v2009
        %v2011 = vpop.f32.mrf.mxu0
        %v2012 = vadd.f32 %v1819, %v2011
        %v2013 = vpop.f32.mrf.mxu0
        %v2014 = vadd.f32 %v1821, %v2013
        %v2015 = vpop.f32.mrf.mxu0
        %v2016 = vadd.f32 %v1823, %v2015
        %2017 = vmatprep.mubr.bf16.mxu0 %v1021
        %2018 = vmatmul.mubr.bf16.gmra.mxu0 %v1020
        %v2019 = vpop.f32.mrf.mxu0
        %v2020 = vadd.f32 %v1827, %v2019
        %v2021 = vpop.f32.mrf.mxu0
        %v2022 = vadd.f32 %v1829, %v2021
        %v2023 = vpop.f32.mrf.mxu0
        %v2024 = vadd.f32 %v1831, %v2023
        %v2025 = vpop.f32.mrf.mxu0
        %v2026 = vadd.f32 %v1833, %v2025
        %2027 = vmatprep.mubr.bf16.mxu0 %v1028
        %2028 = vmatmul.mubr.bf16.gmra.mxu0 %v1027
        %v2029 = vpop.f32.mrf.mxu0
        %v2030 = vadd.f32 %v1837, %v2029
        %v2031 = vpop.f32.mrf.mxu0
        %v2032 = vadd.f32 %v1839, %v2031
        %v2033 = vpop.f32.mrf.mxu0
        %v2034 = vadd.f32 %v1841, %v2033
        %v2035 = vpop.f32.mrf.mxu0
        %v2036 = vadd.f32 %v1843, %v2035
        %2037 = vmatprep.mubr.bf16.mxu0 %v1035
        %2038 = vmatmul.mubr.bf16.gmra.mxu0 %v1034
        %v2039 = vpop.f32.mrf.mxu0
        %v2040 = vadd.f32 %v1847, %v2039
        %v2041 = vpop.f32.mrf.mxu0
        %v2042 = vadd.f32 %v1849, %v2041
        %v2043 = vpop.f32.mrf.mxu0
        %v2044 = vadd.f32 %v1851, %v2043
        %v2045 = vpop.f32.mrf.mxu0
        %v2046 = vadd.f32 %v1853, %v2045
        %2047 = vmatprep.mubr.bf16.mxu0 %v1042
        %2048 = vmatmul.mubr.bf16.gmra.mxu0 %v1041
        %v2049 = vpop.f32.mrf.mxu0
        %v2050 = vadd.f32 %v1857, %v2049
        %v2051 = vpop.f32.mrf.mxu0
        %v2052 = vadd.f32 %v1859, %v2051
        %v2053 = vpop.f32.mrf.mxu0
        %v2054 = vadd.f32 %v1861, %v2053
        %v2055 = vpop.f32.mrf.mxu0
        %v2056 = vadd.f32 %v1863, %v2055
        %2057 = vmatprep.mubr.bf16.mxu0 %v1049
        %2058 = vmatmul.mubr.bf16.gmra.mxu0 %v1048
        %v2059 = vpop.f32.mrf.mxu0
        %v2060 = vadd.f32 %v1867, %v2059
        %v2061 = vpop.f32.mrf.mxu0
        %v2062 = vadd.f32 %v1869, %v2061
        %v2063 = vpop.f32.mrf.mxu0
        %v2064 = vadd.f32 %v1871, %v2063
        %v2065 = vpop.f32.mrf.mxu0
        %v2066 = vadd.f32 %v1873, %v2065
        %2067 = vmatprep.mubr.bf16.mxu0 %v1056
        %2068 = vmatmul.mubr.bf16.gmra.mxu0 %v1055
        %v2069 = vpop.f32.mrf.mxu0
        %v2070 = vadd.f32 %v1877, %v2069
        %v2071 = vpop.f32.mrf.mxu0
        %v2072 = vadd.f32 %v1879, %v2071
        %v2073 = vpop.f32.mrf.mxu0
        %v2074 = vadd.f32 %v1881, %v2073
        %v2075 = vpop.f32.mrf.mxu0
        %v2076 = vadd.f32 %v1883, %v2075
        %2077 = vmatprep.mubr.bf16.mxu0 %v1063
        %2078 = vmatmul.mubr.bf16.gmra.mxu0 %v1062
        %v2079 = vpop.f32.mrf.mxu0
        %v2080 = vadd.f32 %v1887, %v2079
        %v2081 = vpop.f32.mrf.mxu0
        %v2082 = vadd.f32 %v1889, %v2081
        %v2083 = vpop.f32.mrf.mxu0
        %v2084 = vadd.f32 %v1891, %v2083
        %v2085 = vpop.f32.mrf.mxu0
        %v2086 = vadd.f32 %v1893, %v2085
        %2087 = vdwg.mxu0
        %2088 = vmatprep.subr.bf16.mxu0 %v1536
        %2089 = vmatpush1.bf16.msra.mxu0 %v1535
        %2090 = vmatprep.subr.bf16.mxu0 %v1534
        %2091 = vmatpush1.bf16.msra.mxu0 %v1533
        %2092 = vmatprep.subr.bf16.mxu0 %v1532
        %2093 = vmatpush1.bf16.msra.mxu0 %v1531
        %2094 = vmatprep.subr.bf16.mxu0 %v1530
        %2095 = vmatpush1.bf16.msra.mxu0 %v1529
        %2096 = vmatprep.subr.bf16.mxu0 %v1528
        %2097 = vmatpush1.bf16.msra.mxu0 %v1527
        %2098 = vmatprep.subr.bf16.mxu0 %v1526
        %2099 = vmatpush1.bf16.msra.mxu0 %v1525
        %2100 = vmatprep.subr.bf16.mxu0 %v1524
        %2101 = vmatpush1.bf16.msra.mxu0 %v1523
        %2102 = vmatprep.subr.bf16.mxu0 %v1522
        %2103 = vmatpush1.bf16.msra.mxu0 %v1521
        %2104 = vmatprep.subr.bf16.mxu0 %v1552
        %2105 = vmatpush2.bf16.msra.mxu0 %v1551
        %2106 = vmatprep.subr.bf16.mxu0 %v1550
        %2107 = vmatpush2.bf16.msra.mxu0 %v1549
        %2108 = vmatprep.subr.bf16.mxu0 %v1548
        %2109 = vmatpush2.bf16.msra.mxu0 %v1547
        %2110 = vmatprep.subr.bf16.mxu0 %v1546
        %2111 = vmatpush2.bf16.msra.mxu0 %v1545
        %2112 = vmatprep.subr.bf16.mxu0 %v1544
        %2113 = vmatpush2.bf16.msra.mxu0 %v1543
        %2114 = vmatprep.subr.bf16.mxu0 %v1542
        %2115 = vmatpush2.bf16.msra.mxu0 %v1541
        %2116 = vmatprep.subr.bf16.mxu0 %v1540
        %2117 = vmatpush2.bf16.msra.mxu0 %v1539
        %2118 = vmatprep.subr.bf16.mxu0 %v1538
        %2119 = vmatpush2.bf16.msra.mxu0 %v1537
        %2120 = vmatprep.mubr.bf16.mxu0 %v960
        %2121 = vmatmul.mubr.bf16.gmra.mxu0 %v959
        %v2122 = vpop.f32.mrf.mxu0
        %v2123 = vadd.f32 %v1930, %v2122
        %v2124 = vpop.f32.mrf.mxu0
        %v2125 = vadd.f32 %v1932, %v2124
        %v2126 = vpop.f32.mrf.mxu0
        %v2127 = vadd.f32 %v1934, %v2126
        %v2128 = vpop.f32.mrf.mxu0
        %v2129 = vadd.f32 %v1936, %v2128
        %2130 = vmatprep.mubr.bf16.mxu0 %v967
        %2131 = vmatmul.mubr.bf16.gmra.mxu0 %v966
        %v2132 = vpop.f32.mrf.mxu0
        %v2133 = vadd.f32 %v1940, %v2132
        %v2134 = vpop.f32.mrf.mxu0
        %v2135 = vadd.f32 %v1942, %v2134
        %v2136 = vpop.f32.mrf.mxu0
        %v2137 = vadd.f32 %v1944, %v2136
        %v2138 = vpop.f32.mrf.mxu0
        %v2139 = vadd.f32 %v1946, %v2138
        %2140 = vmatprep.mubr.bf16.mxu0 %v974
        %2141 = vmatmul.mubr.bf16.gmra.mxu0 %v973
        %v2142 = vpop.f32.mrf.mxu0
        %v2143 = vadd.f32 %v1950, %v2142
        %v2144 = vpop.f32.mrf.mxu0
        %v2145 = vadd.f32 %v1952, %v2144
        %v2146 = vpop.f32.mrf.mxu0
        %v2147 = vadd.f32 %v1954, %v2146
        %v2148 = vpop.f32.mrf.mxu0
        %v2149 = vadd.f32 %v1956, %v2148
        %2150 = vmatprep.mubr.bf16.mxu0 %v981
        %2151 = vmatmul.mubr.bf16.gmra.mxu0 %v980
        %v2152 = vpop.f32.mrf.mxu0
        %v2153 = vadd.f32 %v1960, %v2152
        %v2154 = vpop.f32.mrf.mxu0
        %v2155 = vadd.f32 %v1962, %v2154
        %v2156 = vpop.f32.mrf.mxu0
        %v2157 = vadd.f32 %v1964, %v2156
        %v2158 = vpop.f32.mrf.mxu0
        %v2159 = vadd.f32 %v1966, %v2158
        %2160 = vmatprep.mubr.bf16.mxu0 %v988
        %2161 = vmatmul.mubr.bf16.gmra.mxu0 %v987
        %v2162 = vpop.f32.mrf.mxu0
        %v2163 = vadd.f32 %v1970, %v2162
        %v2164 = vpop.f32.mrf.mxu0
        %v2165 = vadd.f32 %v1972, %v2164
        %v2166 = vpop.f32.mrf.mxu0
        %v2167 = vadd.f32 %v1974, %v2166
        %v2168 = vpop.f32.mrf.mxu0
        %v2169 = vadd.f32 %v1976, %v2168
        %2170 = vmatprep.mubr.bf16.mxu0 %v995
        %2171 = vmatmul.mubr.bf16.gmra.mxu0 %v994
        %v2172 = vpop.f32.mrf.mxu0
        %v2173 = vadd.f32 %v1980, %v2172
        %v2174 = vpop.f32.mrf.mxu0
        %v2175 = vadd.f32 %v1982, %v2174
        %v2176 = vpop.f32.mrf.mxu0
        %v2177 = vadd.f32 %v1984, %v2176
        %v2178 = vpop.f32.mrf.mxu0
        %v2179 = vadd.f32 %v1986, %v2178
        %2180 = vmatprep.mubr.bf16.mxu0 %v1002
        %2181 = vmatmul.mubr.bf16.gmra.mxu0 %v1001
        %v2182 = vpop.f32.mrf.mxu0
        %v2183 = vadd.f32 %v1990, %v2182
        %v2184 = vpop.f32.mrf.mxu0
        %v2185 = vadd.f32 %v1992, %v2184
        %v2186 = vpop.f32.mrf.mxu0
        %v2187 = vadd.f32 %v1994, %v2186
        %v2188 = vpop.f32.mrf.mxu0
        %v2189 = vadd.f32 %v1996, %v2188
        %2190 = vmatprep.mubr.bf16.mxu0 %v1009
        %2191 = vmatmul.mubr.bf16.gmra.mxu0 %v1008
        %v2192 = vpop.f32.mrf.mxu0
        %v2193 = vadd.f32 %v2000, %v2192
        %v2194 = vpop.f32.mrf.mxu0
        %v2195 = vadd.f32 %v2002, %v2194
        %v2196 = vpop.f32.mrf.mxu0
        %v2197 = vadd.f32 %v2004, %v2196
        %v2198 = vpop.f32.mrf.mxu0
        %v2199 = vadd.f32 %v2006, %v2198
        %2200 = vmatprep.mubr.bf16.mxu0 %v1016
        %2201 = vmatmul.mubr.bf16.gmra.mxu0 %v1015
        %v2202 = vpop.f32.mrf.mxu0
        %v2203 = vadd.f32 %v2010, %v2202
        %v2204 = vpop.f32.mrf.mxu0
        %v2205 = vadd.f32 %v2012, %v2204
        %v2206 = vpop.f32.mrf.mxu0
        %v2207 = vadd.f32 %v2014, %v2206
        %v2208 = vpop.f32.mrf.mxu0
        %v2209 = vadd.f32 %v2016, %v2208
        %2210 = vmatprep.mubr.bf16.mxu0 %v1023
        %2211 = vmatmul.mubr.bf16.gmra.mxu0 %v1022
        %v2212 = vpop.f32.mrf.mxu0
        %v2213 = vadd.f32 %v2020, %v2212
        %v2214 = vpop.f32.mrf.mxu0
        %v2215 = vadd.f32 %v2022, %v2214
        %v2216 = vpop.f32.mrf.mxu0
        %v2217 = vadd.f32 %v2024, %v2216
        %v2218 = vpop.f32.mrf.mxu0
        %v2219 = vadd.f32 %v2026, %v2218
        %2220 = vmatprep.mubr.bf16.mxu0 %v1030
        %2221 = vmatmul.mubr.bf16.gmra.mxu0 %v1029
        %v2222 = vpop.f32.mrf.mxu0
        %v2223 = vadd.f32 %v2030, %v2222
        %v2224 = vpop.f32.mrf.mxu0
        %v2225 = vadd.f32 %v2032, %v2224
        %v2226 = vpop.f32.mrf.mxu0
        %v2227 = vadd.f32 %v2034, %v2226
        %v2228 = vpop.f32.mrf.mxu0
        %v2229 = vadd.f32 %v2036, %v2228
        %2230 = vmatprep.mubr.bf16.mxu0 %v1037
        %2231 = vmatmul.mubr.bf16.gmra.mxu0 %v1036
        %v2232 = vpop.f32.mrf.mxu0
        %v2233 = vadd.f32 %v2040, %v2232
        %v2234 = vpop.f32.mrf.mxu0
        %v2235 = vadd.f32 %v2042, %v2234
        %v2236 = vpop.f32.mrf.mxu0
        %v2237 = vadd.f32 %v2044, %v2236
        %v2238 = vpop.f32.mrf.mxu0
        %v2239 = vadd.f32 %v2046, %v2238
        %2240 = vmatprep.mubr.bf16.mxu0 %v1044
        %2241 = vmatmul.mubr.bf16.gmra.mxu0 %v1043
        %v2242 = vpop.f32.mrf.mxu0
        %v2243 = vadd.f32 %v2050, %v2242
        %v2244 = vpop.f32.mrf.mxu0
        %v2245 = vadd.f32 %v2052, %v2244
        %v2246 = vpop.f32.mrf.mxu0
        %v2247 = vadd.f32 %v2054, %v2246
        %v2248 = vpop.f32.mrf.mxu0
        %v2249 = vadd.f32 %v2056, %v2248
        %2250 = vmatprep.mubr.bf16.mxu0 %v1051
        %2251 = vmatmul.mubr.bf16.gmra.mxu0 %v1050
        %v2252 = vpop.f32.mrf.mxu0
        %v2253 = vadd.f32 %v2060, %v2252
        %v2254 = vpop.f32.mrf.mxu0
        %v2255 = vadd.f32 %v2062, %v2254
        %v2256 = vpop.f32.mrf.mxu0
        %v2257 = vadd.f32 %v2064, %v2256
        %v2258 = vpop.f32.mrf.mxu0
        %v2259 = vadd.f32 %v2066, %v2258
        %2260 = vmatprep.mubr.bf16.mxu0 %v1058
        %2261 = vmatmul.mubr.bf16.gmra.mxu0 %v1057
        %v2262 = vpop.f32.mrf.mxu0
        %v2263 = vadd.f32 %v2070, %v2262
        %v2264 = vpop.f32.mrf.mxu0
        %v2265 = vadd.f32 %v2072, %v2264
        %v2266 = vpop.f32.mrf.mxu0
        %v2267 = vadd.f32 %v2074, %v2266
        %v2268 = vpop.f32.mrf.mxu0
        %v2269 = vadd.f32 %v2076, %v2268
        %2270 = vmatprep.mubr.bf16.mxu0 %v1065
        %2271 = vmatmul.mubr.bf16.gmra.mxu0 %v1064
        %v2272 = vpop.f32.mrf.mxu0
        %v2273 = vadd.f32 %v2080, %v2272
        %v2274 = vpop.f32.mrf.mxu0
        %v2275 = vadd.f32 %v2082, %v2274
        %v2276 = vpop.f32.mrf.mxu0
        %v2277 = vadd.f32 %v2084, %v2276
        %v2278 = vpop.f32.mrf.mxu0
        %v2279 = vadd.f32 %v2086, %v2278
        %2280 = vdwg.mxu0
        %2281 = vmatprep.subr.bf16.mxu0 0
        %2282 = vmatpush1.bf16.msra.mxu0 0
        %2283 = vmatprep.subr.bf16.mxu0 0
        %2284 = vmatpush1.bf16.msra.mxu0 0
        %2285 = vmatprep.subr.bf16.mxu0 0
        %2286 = vmatpush1.bf16.msra.mxu0 0
        %2287 = vmatprep.subr.bf16.mxu0 0
        %2288 = vmatpush1.bf16.msra.mxu0 0
        %2289 = vmatprep.subr.bf16.mxu0 0
        %2290 = vmatpush1.bf16.msra.mxu0 0
        %2291 = vmatprep.subr.bf16.mxu0 0
        %2292 = vmatpush1.bf16.msra.mxu0 0
        %2293 = vmatprep.subr.bf16.mxu0 0
        %2294 = vmatpush1.bf16.msra.mxu0 0
        %2295 = vmatprep.subr.bf16.mxu0 %v1554
        %2296 = vmatpush1.bf16.msra.mxu0 %v1553
        %2297 = vmatprep.subr.bf16.mxu0 0
        %2298 = vmatpush2.bf16.msra.mxu0 0
        %2299 = vmatprep.subr.bf16.mxu0 0
        %2300 = vmatpush2.bf16.msra.mxu0 0
        %2301 = vmatprep.subr.bf16.mxu0 0
        %2302 = vmatpush2.bf16.msra.mxu0 0
        %2303 = vmatprep.subr.bf16.mxu0 0
        %2304 = vmatpush2.bf16.msra.mxu0 0
        %2305 = vmatprep.subr.bf16.mxu0 0
        %2306 = vmatpush2.bf16.msra.mxu0 0
        %2307 = vmatprep.subr.bf16.mxu0 0
        %2308 = vmatpush2.bf16.msra.mxu0 0
        %2309 = vmatprep.subr.bf16.mxu0 0
        %2310 = vmatpush2.bf16.msra.mxu0 0
        %2311 = vmatprep.subr.bf16.mxu0 0
        %2312 = vmatpush2.bf16.msra.mxu0 0
        %2313 = vmatprep.mubr.bf16.mxu0 0
        %2314 = vmatmul.mubr.bf16.gmra.mxu0 %v1655
        %v2315 = vpop.f32.mrf.mxu0
        %v2316 = vadd.f32 %v2123, %v2315
        %v2317 = vpop.f32.mrf.mxu0
        %v2318 = vadd.f32 %v2125, %v2317
        %v2319 = vpop.f32.mrf.mxu0
        %v2320 = vadd.f32 %v2127, %v2319
        %v2321 = vpop.f32.mrf.mxu0
        %v2322 = vadd.f32 %v2129, %v2321
        %2323 = vmatprep.mubr.bf16.mxu0 0
        %2324 = vmatmul.mubr.bf16.gmra.mxu0 %v1658
        %v2325 = vpop.f32.mrf.mxu0
        %v2326 = vadd.f32 %v2133, %v2325
        %v2327 = vpop.f32.mrf.mxu0
        %v2328 = vadd.f32 %v2135, %v2327
        %v2329 = vpop.f32.mrf.mxu0
        %v2330 = vadd.f32 %v2137, %v2329
        %v2331 = vpop.f32.mrf.mxu0
        %v2332 = vadd.f32 %v2139, %v2331
        %2333 = vmatprep.mubr.bf16.mxu0 0
        %2334 = vmatmul.mubr.bf16.gmra.mxu0 %v1661
        %v2335 = vpop.f32.mrf.mxu0
        %v2336 = vadd.f32 %v2143, %v2335
        %v2337 = vpop.f32.mrf.mxu0
        %v2338 = vadd.f32 %v2145, %v2337
        %v2339 = vpop.f32.mrf.mxu0
        %v2340 = vadd.f32 %v2147, %v2339
        %v2341 = vpop.f32.mrf.mxu0
        %v2342 = vadd.f32 %v2149, %v2341
        %2343 = vmatprep.mubr.bf16.mxu0 0
        %2344 = vmatmul.mubr.bf16.gmra.mxu0 %v1664
        %v2345 = vpop.f32.mrf.mxu0
        %v2346 = vadd.f32 %v2153, %v2345
        %v2347 = vpop.f32.mrf.mxu0
        %v2348 = vadd.f32 %v2155, %v2347
        %v2349 = vpop.f32.mrf.mxu0
        %v2350 = vadd.f32 %v2157, %v2349
        %v2351 = vpop.f32.mrf.mxu0
        %v2352 = vadd.f32 %v2159, %v2351
        %2353 = vmatprep.mubr.bf16.mxu0 0
        %2354 = vmatmul.mubr.bf16.gmra.mxu0 %v1667
        %v2355 = vpop.f32.mrf.mxu0
        %v2356 = vadd.f32 %v2163, %v2355
        %v2357 = vpop.f32.mrf.mxu0
        %v2358 = vadd.f32 %v2165, %v2357
        %v2359 = vpop.f32.mrf.mxu0
        %v2360 = vadd.f32 %v2167, %v2359
        %v2361 = vpop.f32.mrf.mxu0
        %v2362 = vadd.f32 %v2169, %v2361
        %2363 = vmatprep.mubr.bf16.mxu0 0
        %2364 = vmatmul.mubr.bf16.gmra.mxu0 %v1670
        %v2365 = vpop.f32.mrf.mxu0
        %v2366 = vadd.f32 %v2173, %v2365
        %v2367 = vpop.f32.mrf.mxu0
        %v2368 = vadd.f32 %v2175, %v2367
        %v2369 = vpop.f32.mrf.mxu0
        %v2370 = vadd.f32 %v2177, %v2369
        %v2371 = vpop.f32.mrf.mxu0
        %v2372 = vadd.f32 %v2179, %v2371
        %2373 = vmatprep.mubr.bf16.mxu0 0
        %2374 = vmatmul.mubr.bf16.gmra.mxu0 %v1673
        %v2375 = vpop.f32.mrf.mxu0
        %v2376 = vadd.f32 %v2183, %v2375
        %v2377 = vpop.f32.mrf.mxu0
        %v2378 = vadd.f32 %v2185, %v2377
        %v2379 = vpop.f32.mrf.mxu0
        %v2380 = vadd.f32 %v2187, %v2379
        %v2381 = vpop.f32.mrf.mxu0
        %v2382 = vadd.f32 %v2189, %v2381
        %2383 = vmatprep.mubr.bf16.mxu0 0
        %2384 = vmatmul.mubr.bf16.gmra.mxu0 %v1676
        %v2385 = vpop.f32.mrf.mxu0
        %v2386 = vadd.f32 %v2193, %v2385
        %v2387 = vpop.f32.mrf.mxu0
        %v2388 = vadd.f32 %v2195, %v2387
        %v2389 = vpop.f32.mrf.mxu0
        %v2390 = vadd.f32 %v2197, %v2389
        %v2391 = vpop.f32.mrf.mxu0
        %v2392 = vadd.f32 %v2199, %v2391
        %2393 = vmatprep.mubr.bf16.mxu0 0
        %2394 = vmatmul.mubr.bf16.gmra.mxu0 %v1679
        %v2395 = vpop.f32.mrf.mxu0
        %v2396 = vadd.f32 %v2203, %v2395
        %v2397 = vpop.f32.mrf.mxu0
        %v2398 = vadd.f32 %v2205, %v2397
        %v2399 = vpop.f32.mrf.mxu0
        %v2400 = vadd.f32 %v2207, %v2399
        %v2401 = vpop.f32.mrf.mxu0
        %v2402 = vadd.f32 %v2209, %v2401
        %2403 = vmatprep.mubr.bf16.mxu0 0
        %2404 = vmatmul.mubr.bf16.gmra.mxu0 %v1682
        %v2405 = vpop.f32.mrf.mxu0
        %v2406 = vadd.f32 %v2213, %v2405
        %v2407 = vpop.f32.mrf.mxu0
        %v2408 = vadd.f32 %v2215, %v2407
        %v2409 = vpop.f32.mrf.mxu0
        %v2410 = vadd.f32 %v2217, %v2409
        %v2411 = vpop.f32.mrf.mxu0
        %v2412 = vadd.f32 %v2219, %v2411
        %2413 = vmatprep.mubr.bf16.mxu0 0
        %2414 = vmatmul.mubr.bf16.gmra.mxu0 %v1685
        %v2415 = vpop.f32.mrf.mxu0
        %v2416 = vadd.f32 %v2223, %v2415
        %v2417 = vpop.f32.mrf.mxu0
        %v2418 = vadd.f32 %v2225, %v2417
        %v2419 = vpop.f32.mrf.mxu0
        %v2420 = vadd.f32 %v2227, %v2419
        %v2421 = vpop.f32.mrf.mxu0
        %v2422 = vadd.f32 %v2229, %v2421
        %2423 = vmatprep.mubr.bf16.mxu0 0
        %2424 = vmatmul.mubr.bf16.gmra.mxu0 %v1688
        %v2425 = vpop.f32.mrf.mxu0
        %v2426 = vadd.f32 %v2233, %v2425
        %v2427 = vpop.f32.mrf.mxu0
        %v2428 = vadd.f32 %v2235, %v2427
        %v2429 = vpop.f32.mrf.mxu0
        %v2430 = vadd.f32 %v2237, %v2429
        %v2431 = vpop.f32.mrf.mxu0
        %v2432 = vadd.f32 %v2239, %v2431
        %2433 = vmatprep.mubr.bf16.mxu0 0
        %2434 = vmatmul.mubr.bf16.gmra.mxu0 %v1691
        %v2435 = vpop.f32.mrf.mxu0
        %v2436 = vadd.f32 %v2243, %v2435
        %v2437 = vpop.f32.mrf.mxu0
        %v2438 = vadd.f32 %v2245, %v2437
        %v2439 = vpop.f32.mrf.mxu0
        %v2440 = vadd.f32 %v2247, %v2439
        %v2441 = vpop.f32.mrf.mxu0
        %v2442 = vadd.f32 %v2249, %v2441
        %2443 = vmatprep.mubr.bf16.mxu0 0
        %2444 = vmatmul.mubr.bf16.gmra.mxu0 %v1694
        %v2445 = vpop.f32.mrf.mxu0
        %v2446 = vadd.f32 %v2253, %v2445
        %v2447 = vpop.f32.mrf.mxu0
        %v2448 = vadd.f32 %v2255, %v2447
        %v2449 = vpop.f32.mrf.mxu0
        %v2450 = vadd.f32 %v2257, %v2449
        %v2451 = vpop.f32.mrf.mxu0
        %v2452 = vadd.f32 %v2259, %v2451
        %2453 = vmatprep.mubr.bf16.mxu0 0
        %2454 = vmatmul.mubr.bf16.gmra.mxu0 %v1697
        %v2455 = vpop.f32.mrf.mxu0
        %v2456 = vadd.f32 %v2263, %v2455
        %v2457 = vpop.f32.mrf.mxu0
        %v2458 = vadd.f32 %v2265, %v2457
        %v2459 = vpop.f32.mrf.mxu0
        %v2460 = vadd.f32 %v2267, %v2459
        %v2461 = vpop.f32.mrf.mxu0
        %v2462 = vadd.f32 %v2269, %v2461
        %2463 = vmatprep.mubr.bf16.mxu0 0
        %2464 = vmatmul.mubr.bf16.gmra.mxu0 %v1700
        %v2465 = vpop.f32.mrf.mxu0
        %v2466 = vadd.f32 %v2273, %v2465
        %v2467 = vpop.f32.mrf.mxu0
        %v2468 = vadd.f32 %v2275, %v2467
        %v2469 = vpop.f32.mrf.mxu0
        %v2470 = vadd.f32 %v2277, %v2469
        %v2471 = vpop.f32.mrf.mxu0
        %v2472 = vadd.f32 %v2279, %v2471
        %2473 = vdwg.mxu0
        %v2474 = vmax.f32 %v2316, 0.0
        %v2475 = vmax.f32 %v2318, 0.0
        %v2476 = vmax.f32 %v2320, 0.0
        %v2477 = vmax.f32 %v2322, 0.0
        %v2478 = vmax.f32 %v2326, 0.0
        %v2479 = vmax.f32 %v2328, 0.0
        %v2480 = vmax.f32 %v2330, 0.0
        %v2481 = vmax.f32 %v2332, 0.0
        %v2482 = vmax.f32 %v2336, 0.0
        %v2483 = vmax.f32 %v2338, 0.0
        %v2484 = vmax.f32 %v2340, 0.0
        %v2485 = vmax.f32 %v2342, 0.0
        %v2486 = vmax.f32 %v2346, 0.0
        %v2487 = vmax.f32 %v2348, 0.0
        %v2488 = vmax.f32 %v2350, 0.0
        %v2489 = vmax.f32 %v2352, 0.0
        %v2490 = vmax.f32 %v2356, 0.0
        %v2491 = vmax.f32 %v2358, 0.0
        %v2492 = vmax.f32 %v2360, 0.0
        %v2493 = vmax.f32 %v2362, 0.0
        %v2494 = vmax.f32 %v2366, 0.0
        %v2495 = vmax.f32 %v2368, 0.0
        %v2496 = vmax.f32 %v2370, 0.0
        %v2497 = vmax.f32 %v2372, 0.0
        %v2498 = vmax.f32 %v2376, 0.0
        %v2499 = vmax.f32 %v2378, 0.0
        %v2500 = vmax.f32 %v2380, 0.0
        %v2501 = vmax.f32 %v2382, 0.0
        %v2502 = vmax.f32 %v2386, 0.0
        %v2503 = vmax.f32 %v2388, 0.0
        %v2504 = vmax.f32 %v2390, 0.0
        %v2505 = vmax.f32 %v2392, 0.0
        %v2506 = vmax.f32 %v2396, 0.0
        %v2507 = vmax.f32 %v2398, 0.0
        %v2508 = vmax.f32 %v2400, 0.0
        %v2509 = vmax.f32 %v2402, 0.0
        %v2510 = vmax.f32 %v2406, 0.0
        %v2511 = vmax.f32 %v2408, 0.0
        %v2512 = vmax.f32 %v2410, 0.0
        %v2513 = vmax.f32 %v2412, 0.0
        %v2514 = vmax.f32 %v2416, 0.0
        %v2515 = vmax.f32 %v2418, 0.0
        %v2516 = vmax.f32 %v2420, 0.0
        %v2517 = vmax.f32 %v2422, 0.0
        %v2518 = vmax.f32 %v2426, 0.0
        %v2519 = vmax.f32 %v2428, 0.0
        %v2520 = vmax.f32 %v2430, 0.0
        %v2521 = vmax.f32 %v2432, 0.0
        %v2522 = vmax.f32 %v2436, 0.0
        %v2523 = vmax.f32 %v2438, 0.0
        %v2524 = vmax.f32 %v2440, 0.0
        %v2525 = vmax.f32 %v2442, 0.0
        %v2526 = vmax.f32 %v2446, 0.0
        %v2527 = vmax.f32 %v2448, 0.0
        %v2528 = vmax.f32 %v2450, 0.0
        %v2529 = vmax.f32 %v2452, 0.0
        %v2530 = vmax.f32 %v2456, 0.0
        %v2531 = vmax.f32 %v2458, 0.0
        %v2532 = vmax.f32 %v2460, 0.0
        %v2533 = vmax.f32 %v2462, 0.0
        %v2534 = vmax.f32 %v2466, 0.0
        %v2535 = vmax.f32 %v2468, 0.0
        %v2536 = vmax.f32 %v2470, 0.0
        %v2537 = vmax.f32 %v2472, 0.0
        %v2538 = vpack.c.bf16 %v2476, %v2474
        %v2539 = vpack.c.bf16 %v2477, %v2475
        %v2540 = vpack.c.bf16 %v2480, %v2478
        %v2541 = vpack.c.bf16 %v2481, %v2479
        %v2542 = vpack.c.bf16 %v2484, %v2482
        %v2543 = vpack.c.bf16 %v2485, %v2483
        %v2544 = vpack.c.bf16 %v2488, %v2486
        %v2545 = vpack.c.bf16 %v2489, %v2487
        %v2546 = vpack.c.bf16 %v2492, %v2490
        %v2547 = vpack.c.bf16 %v2493, %v2491
        %v2548 = vpack.c.bf16 %v2496, %v2494
        %v2549 = vpack.c.bf16 %v2497, %v2495
        %v2550 = vpack.c.bf16 %v2500, %v2498
        %v2551 = vpack.c.bf16 %v2501, %v2499
        %v2552 = vpack.c.bf16 %v2504, %v2502
        %v2553 = vpack.c.bf16 %v2505, %v2503
        %v2554 = vpack.c.bf16 %v2508, %v2506
        %v2555 = vpack.c.bf16 %v2509, %v2507
        %v2556 = vpack.c.bf16 %v2512, %v2510
        %v2557 = vpack.c.bf16 %v2513, %v2511
        %v2558 = vpack.c.bf16 %v2516, %v2514
        %v2559 = vpack.c.bf16 %v2517, %v2515
        %v2560 = vpack.c.bf16 %v2520, %v2518
        %v2561 = vpack.c.bf16 %v2521, %v2519
        %v2562 = vpack.c.bf16 %v2524, %v2522
        %v2563 = vpack.c.bf16 %v2525, %v2523
        %v2564 = vpack.c.bf16 %v2528, %v2526
        %v2565 = vpack.c.bf16 %v2529, %v2527
        %v2566 = vpack.c.bf16 %v2532, %v2530
        %v2567 = vpack.c.bf16 %v2533, %v2531
        %v2568 = vpack.c.bf16 %v2536, %v2534
        %v2569 = vpack.c.bf16 %v2537, %v2535
        %v2570 = vld [vmem:[%s3] sm:$0xf]
        %v2571 = vld [vmem:[%s3 + $0x4] sm:$0xf]
        %v2572 = vld [vmem:[%s3 + $0x8] sm:$0xf]
        %v2573 = vld [vmem:[%s3 + $0xc] sm:$0xf]
        %v2574 = vld [vmem:[%s3 + $0x10] sm:$0xf]
        %v2575 = vld [vmem:[%s3 + $0x14] sm:$0xf]
        %v2576 = vld [vmem:[%s3 + $0x18] sm:$0xf]
        %v2577 = vld [vmem:[%s3 + $0x1c] sm:$0xf]
        %v2578 = vld [vmem:[%s3 + $0x20] sm:$0xf]
        %v2579 = vld [vmem:[%s3 + $0x24] sm:$0xf]
        %v2580 = vld [vmem:[%s3 + $0x28] sm:$0xf]
        %v2581 = vld [vmem:[%s3 + $0x2c] sm:$0xf]
        %v2582 = vld [vmem:[%s3 + $0x30] sm:$0xf]
        %v2583 = vld [vmem:[%s3 + $0x34] sm:$0xf]
        %v2584 = vld [vmem:[%s3 + $0x38] sm:$0xf]
        %v2585 = vld [vmem:[%s3 + $0x3c] sm:$0xf]
        %v2586 = vld [vmem:[%s3 + $0x40] sm:$0xf]
        %v2587 = vld [vmem:[%s3 + $0x44] sm:$0xf]
        %v2588 = vld [vmem:[%s3 + $0x48] sm:$0xf]
        %v2589 = vld [vmem:[%s3 + $0x4c] sm:$0xf]
        %v2590 = vld [vmem:[%s3 + $0x50] sm:$0xf]
        %v2591 = vld [vmem:[%s3 + $0x54] sm:$0xf]
        %v2592 = vld [vmem:[%s3 + $0x58] sm:$0xf]
        %v2593 = vld [vmem:[%s3 + $0x5c] sm:$0xf]
        %v2594 = vld [vmem:[%s3 + $0x60] sm:$0xf]
        %v2595 = vld [vmem:[%s3 + $0x64] sm:$0xf]
        %v2596 = vld [vmem:[%s3 + $0x68] sm:$0xf]
        %v2597 = vld [vmem:[%s3 + $0x6c] sm:$0xf]
        %v2598 = vld [vmem:[%s3 + $0x70] sm:$0xf]
        %v2599 = vld [vmem:[%s3 + $0x74] sm:$0xf]
        %v2600 = vld [vmem:[%s3 + $0x78] sm:$0xf]
        %v2601 = vld [vmem:[%s3 + $0x7c] sm:$0xf]
        %v2602 = vld [vmem:[%s4] sm:$0x1]
        %v2604 = vlaneseq
        %v2605 = vshrl.u32 %v2604, 7
        %v2606 = vsub.s32 0, %v2605
        %v2607 = vrot.slane %v2602, %v2606
        %v2641 = vunpack.c.l.b16 %v2570
        %v2642 = vunpack.c.l.b16 %v2571
        %v2643 = vunpack.c.l.b16 %v2572
        %v2644 = vunpack.c.l.b16 %v2573
        %v2645 = vunpack.c.l.b16 %v2574
        %v2646 = vunpack.c.l.b16 %v2575
        %v2647 = vunpack.c.l.b16 %v2576
        %v2648 = vunpack.c.l.b16 %v2577
        %v2649 = vunpack.c.l.b16 %v2578
        %v2650 = vunpack.c.l.b16 %v2579
        %v2651 = vunpack.c.l.b16 %v2580
        %v2652 = vunpack.c.l.b16 %v2581
        %v2653 = vunpack.c.l.b16 %v2582
        %v2654 = vunpack.c.l.b16 %v2583
        %v2655 = vunpack.c.l.b16 %v2584
        %v2656 = vunpack.c.l.b16 %v2585
        %v2657 = vunpack.c.l.b16 %v2586
        %v2658 = vunpack.c.l.b16 %v2587
        %v2659 = vunpack.c.l.b16 %v2588
        %v2660 = vunpack.c.l.b16 %v2589
        %v2661 = vunpack.c.l.b16 %v2590
        %v2662 = vunpack.c.l.b16 %v2591
        %v2663 = vunpack.c.l.b16 %v2592
        %v2664 = vunpack.c.l.b16 %v2593
        %v2665 = vunpack.c.l.b16 %v2594
        %v2666 = vunpack.c.l.b16 %v2595
        %v2667 = vunpack.c.l.b16 %v2596
        %v2668 = vunpack.c.l.b16 %v2597
        %v2669 = vunpack.c.l.b16 %v2598
        %v2670 = vunpack.c.l.b16 %v2599
        %v2671 = vunpack.c.l.b16 %v2600
        %v2672 = vunpack.c.l.b16 %v2601
        %v2673 = vpack.c.b16 %v2642, %v2641
        %v2674 = vpack.c.b16 %v2644, %v2643
        %v2675 = vpack.c.b16 %v2646, %v2645
        %v2676 = vpack.c.b16 %v2648, %v2647
        %v2677 = vpack.c.b16 %v2650, %v2649
        %v2678 = vpack.c.b16 %v2652, %v2651
        %v2679 = vpack.c.b16 %v2654, %v2653
        %v2680 = vpack.c.b16 %v2656, %v2655
        %v2681 = vpack.c.b16 %v2658, %v2657
        %v2682 = vpack.c.b16 %v2660, %v2659
        %v2683 = vpack.c.b16 %v2662, %v2661
        %v2684 = vpack.c.b16 %v2664, %v2663
        %v2685 = vpack.c.b16 %v2666, %v2665
        %v2686 = vpack.c.b16 %v2668, %v2667
        %v2687 = vpack.c.b16 %v2670, %v2669
        %v2688 = vpack.c.b16 %v2672, %v2671
        %2705 = vmatprep.subr.bf16.mxu0 0
        %2706 = vmatpush1.bf16.msra.mxu0 %v2680
        %2707 = vmatprep.subr.bf16.mxu0 0
        %2708 = vmatpush1.bf16.msra.mxu0 %v2679
        %2709 = vmatprep.subr.bf16.mxu0 0
        %2710 = vmatpush1.bf16.msra.mxu0 %v2678
        %2711 = vmatprep.subr.bf16.mxu0 0
        %2712 = vmatpush1.bf16.msra.mxu0 %v2677
        %2713 = vmatprep.subr.bf16.mxu0 0
        %2714 = vmatpush1.bf16.msra.mxu0 %v2676
        %2715 = vmatprep.subr.bf16.mxu0 0
        %2716 = vmatpush1.bf16.msra.mxu0 %v2675
        %2717 = vmatprep.subr.bf16.mxu0 0
        %2718 = vmatpush1.bf16.msra.mxu0 %v2674
        %2719 = vmatprep.subr.bf16.mxu0 0
        %2720 = vmatpush1.bf16.msra.mxu0 %v2673
        %2721 = vmatprep.subr.bf16.mxu0 0
        %2722 = vmatpush2.bf16.msra.mxu0 %v2688
        %2723 = vmatprep.subr.bf16.mxu0 0
        %2724 = vmatpush2.bf16.msra.mxu0 %v2687
        %2725 = vmatprep.subr.bf16.mxu0 0
        %2726 = vmatpush2.bf16.msra.mxu0 %v2686
        %2727 = vmatprep.subr.bf16.mxu0 0
        %2728 = vmatpush2.bf16.msra.mxu0 %v2685
        %2729 = vmatprep.subr.bf16.mxu0 0
        %2730 = vmatpush2.bf16.msra.mxu0 %v2684
        %2731 = vmatprep.subr.bf16.mxu0 0
        %2732 = vmatpush2.bf16.msra.mxu0 %v2683
        %2733 = vmatprep.subr.bf16.mxu0 0
        %2734 = vmatpush2.bf16.msra.mxu0 %v2682
        %2735 = vmatprep.subr.bf16.mxu0 0
        %2736 = vmatpush2.bf16.msra.mxu0 %v2681
        %2737 = vmatprep.mubr.bf16.mxu0 %v2539
        %2738 = vmatmul.mubr.bf16.gmra.mxu0 %v2538
        %v2739 = vpop.f32.mrf.mxu0
        %v2740 = vadd.f32 %v2607, %v2739
        %v2741 = vpop.f32.mrf.mxu0
        %v2742 = vpop.f32.mrf.mxu0
        %v2743 = vadd.f32 %v2607, %v2742
        %v2744 = vpop.f32.mrf.mxu0
        %2745 = vmatprep.mubr.bf16.mxu0 %v2541
        %2746 = vmatmul.mubr.bf16.gmra.mxu0 %v2540
        %v2747 = vpop.f32.mrf.mxu0
        %v2748 = vadd.f32 %v2607, %v2747
        %v2749 = vpop.f32.mrf.mxu0
        %v2750 = vpop.f32.mrf.mxu0
        %v2751 = vadd.f32 %v2607, %v2750
        %v2752 = vpop.f32.mrf.mxu0
        %2753 = vmatprep.mubr.bf16.mxu0 %v2543
        %2754 = vmatmul.mubr.bf16.gmra.mxu0 %v2542
        %v2755 = vpop.f32.mrf.mxu0
        %v2756 = vadd.f32 %v2607, %v2755
        %v2757 = vpop.f32.mrf.mxu0
        %v2758 = vpop.f32.mrf.mxu0
        %v2759 = vadd.f32 %v2607, %v2758
        %v2760 = vpop.f32.mrf.mxu0
        %2761 = vmatprep.mubr.bf16.mxu0 %v2545
        %2762 = vmatmul.mubr.bf16.gmra.mxu0 %v2544
        %v2763 = vpop.f32.mrf.mxu0
        %v2764 = vadd.f32 %v2607, %v2763
        %v2765 = vpop.f32.mrf.mxu0
        %v2766 = vpop.f32.mrf.mxu0
        %v2767 = vadd.f32 %v2607, %v2766
        %v2768 = vpop.f32.mrf.mxu0
        %2769 = vmatprep.mubr.bf16.mxu0 %v2547
        %2770 = vmatmul.mubr.bf16.gmra.mxu0 %v2546
        %v2771 = vpop.f32.mrf.mxu0
        %v2772 = vadd.f32 %v2607, %v2771
        %v2773 = vpop.f32.mrf.mxu0
        %v2774 = vpop.f32.mrf.mxu0
        %v2775 = vadd.f32 %v2607, %v2774
        %v2776 = vpop.f32.mrf.mxu0
        %2777 = vmatprep.mubr.bf16.mxu0 %v2549
        %2778 = vmatmul.mubr.bf16.gmra.mxu0 %v2548
        %v2779 = vpop.f32.mrf.mxu0
        %v2780 = vadd.f32 %v2607, %v2779
        %v2781 = vpop.f32.mrf.mxu0
        %v2782 = vpop.f32.mrf.mxu0
        %v2783 = vadd.f32 %v2607, %v2782
        %v2784 = vpop.f32.mrf.mxu0
        %2785 = vmatprep.mubr.bf16.mxu0 %v2551
        %2786 = vmatmul.mubr.bf16.gmra.mxu0 %v2550
        %v2787 = vpop.f32.mrf.mxu0
        %v2788 = vadd.f32 %v2607, %v2787
        %v2789 = vpop.f32.mrf.mxu0
        %v2790 = vpop.f32.mrf.mxu0
        %v2791 = vadd.f32 %v2607, %v2790
        %v2792 = vpop.f32.mrf.mxu0
        %2793 = vmatprep.mubr.bf16.mxu0 %v2553
        %2794 = vmatmul.mubr.bf16.gmra.mxu0 %v2552
        %v2795 = vpop.f32.mrf.mxu0
        %v2796 = vadd.f32 %v2607, %v2795
        %v2797 = vpop.f32.mrf.mxu0
        %v2798 = vpop.f32.mrf.mxu0
        %v2799 = vadd.f32 %v2607, %v2798
        %v2800 = vpop.f32.mrf.mxu0
        %2801 = vmatprep.mubr.bf16.mxu0 %v2555
        %2802 = vmatmul.mubr.bf16.gmra.mxu0 %v2554
        %v2803 = vpop.f32.mrf.mxu0
        %v2804 = vadd.f32 %v2607, %v2803
        %v2805 = vpop.f32.mrf.mxu0
        %v2806 = vpop.f32.mrf.mxu0
        %v2807 = vadd.f32 %v2607, %v2806
        %v2808 = vpop.f32.mrf.mxu0
        %2809 = vmatprep.mubr.bf16.mxu0 %v2557
        %2810 = vmatmul.mubr.bf16.gmra.mxu0 %v2556
        %v2811 = vpop.f32.mrf.mxu0
        %v2812 = vadd.f32 %v2607, %v2811
        %v2813 = vpop.f32.mrf.mxu0
        %v2814 = vpop.f32.mrf.mxu0
        %v2815 = vadd.f32 %v2607, %v2814
        %v2816 = vpop.f32.mrf.mxu0
        %2817 = vmatprep.mubr.bf16.mxu0 %v2559
        %2818 = vmatmul.mubr.bf16.gmra.mxu0 %v2558
        %v2819 = vpop.f32.mrf.mxu0
        %v2820 = vadd.f32 %v2607, %v2819
        %v2821 = vpop.f32.mrf.mxu0
        %v2822 = vpop.f32.mrf.mxu0
        %v2823 = vadd.f32 %v2607, %v2822
        %v2824 = vpop.f32.mrf.mxu0
        %2825 = vmatprep.mubr.bf16.mxu0 %v2561
        %2826 = vmatmul.mubr.bf16.gmra.mxu0 %v2560
        %v2827 = vpop.f32.mrf.mxu0
        %v2828 = vadd.f32 %v2607, %v2827
        %v2829 = vpop.f32.mrf.mxu0
        %v2830 = vpop.f32.mrf.mxu0
        %v2831 = vadd.f32 %v2607, %v2830
        %v2832 = vpop.f32.mrf.mxu0
        %2833 = vmatprep.mubr.bf16.mxu0 %v2563
        %2834 = vmatmul.mubr.bf16.gmra.mxu0 %v2562
        %v2835 = vpop.f32.mrf.mxu0
        %v2836 = vadd.f32 %v2607, %v2835
        %v2837 = vpop.f32.mrf.mxu0
        %v2838 = vpop.f32.mrf.mxu0
        %v2839 = vadd.f32 %v2607, %v2838
        %v2840 = vpop.f32.mrf.mxu0
        %2841 = vmatprep.mubr.bf16.mxu0 %v2565
        %2842 = vmatmul.mubr.bf16.gmra.mxu0 %v2564
        %v2843 = vpop.f32.mrf.mxu0
        %v2844 = vadd.f32 %v2607, %v2843
        %v2845 = vpop.f32.mrf.mxu0
        %v2846 = vpop.f32.mrf.mxu0
        %v2847 = vadd.f32 %v2607, %v2846
        %v2848 = vpop.f32.mrf.mxu0
        %2849 = vmatprep.mubr.bf16.mxu0 %v2567
        %2850 = vmatmul.mubr.bf16.gmra.mxu0 %v2566
        %v2851 = vpop.f32.mrf.mxu0
        %v2852 = vadd.f32 %v2607, %v2851
        %v2853 = vpop.f32.mrf.mxu0
        %v2854 = vpop.f32.mrf.mxu0
        %v2855 = vadd.f32 %v2607, %v2854
        %v2856 = vpop.f32.mrf.mxu0
        %2857 = vmatprep.mubr.bf16.mxu0 %v2569
        %2858 = vmatmul.mubr.bf16.gmra.mxu0 %v2568
        %v2859 = vpop.f32.mrf.mxu0
        %v2860 = vadd.f32 %v2607, %v2859
        %v2861 = vpop.f32.mrf.mxu0
        %v2862 = vpop.f32.mrf.mxu0
        %v2863 = vadd.f32 %v2607, %v2862
        %v2864 = vpop.f32.mrf.mxu0
        %2865 = vdwg.mxu0
        %v2866 = vmax.f32 %v2740, 0.0
        %v2867 = vmax.f32 %v2743, 0.0
        %v2868 = vmax.f32 %v2748, 0.0
        %v2869 = vmax.f32 %v2751, 0.0
        %v2870 = vmax.f32 %v2756, 0.0
        %v2871 = vmax.f32 %v2759, 0.0
        %v2872 = vmax.f32 %v2764, 0.0
        %v2873 = vmax.f32 %v2767, 0.0
        %v2874 = vmax.f32 %v2772, 0.0
        %v2875 = vmax.f32 %v2775, 0.0
        %v2876 = vmax.f32 %v2780, 0.0
        %v2877 = vmax.f32 %v2783, 0.0
        %v2878 = vmax.f32 %v2788, 0.0
        %v2879 = vmax.f32 %v2791, 0.0
        %v2880 = vmax.f32 %v2796, 0.0
        %v2881 = vmax.f32 %v2799, 0.0
        %v2882 = vmax.f32 %v2804, 0.0
        %v2883 = vmax.f32 %v2807, 0.0
        %v2884 = vmax.f32 %v2812, 0.0
        %v2885 = vmax.f32 %v2815, 0.0
        %v2886 = vmax.f32 %v2820, 0.0
        %v2887 = vmax.f32 %v2823, 0.0
        %v2888 = vmax.f32 %v2828, 0.0
        %v2889 = vmax.f32 %v2831, 0.0
        %v2890 = vmax.f32 %v2836, 0.0
        %v2891 = vmax.f32 %v2839, 0.0
        %v2892 = vmax.f32 %v2844, 0.0
        %v2893 = vmax.f32 %v2847, 0.0
        %v2894 = vmax.f32 %v2852, 0.0
        %v2895 = vmax.f32 %v2855, 0.0
        %v2896 = vmax.f32 %v2860, 0.0
        %v2897 = vmax.f32 %v2863, 0.0
        %v2898 = vpack.c.bf16 %v2867, %v2866
        %v2899 = vpack.c.bf16 %v2869, %v2868
        %v2900 = vpack.c.bf16 %v2871, %v2870
        %v2901 = vpack.c.bf16 %v2873, %v2872
        %v2902 = vpack.c.bf16 %v2875, %v2874
        %v2903 = vpack.c.bf16 %v2877, %v2876
        %v2904 = vpack.c.bf16 %v2879, %v2878
        %v2905 = vpack.c.bf16 %v2881, %v2880
        %v2906 = vpack.c.bf16 %v2883, %v2882
        %v2907 = vpack.c.bf16 %v2885, %v2884
        %v2908 = vpack.c.bf16 %v2887, %v2886
        %v2909 = vpack.c.bf16 %v2889, %v2888
        %v2910 = vpack.c.bf16 %v2891, %v2890
        %v2911 = vpack.c.bf16 %v2893, %v2892
        %v2912 = vpack.c.bf16 %v2895, %v2894
        %v2913 = vpack.c.bf16 %v2897, %v2896
        %v2914 = vld [vmem:[%s5] sm:$0xf]
        %v2915 = vld [vmem:[%s5 + $0x4] sm:$0xf]
        %v2916 = vld [vmem:[%s5 + $0x8] sm:$0xf]
        %v2917 = vld [vmem:[%s5 + $0xc] sm:$0xf]
        %v2918 = vld [vmem:[%s5 + $0x10] sm:$0xf]
        %v2919 = vld [vmem:[%s5 + $0x14] sm:$0xf]
        %v2920 = vld [vmem:[%s5 + $0x18] sm:$0xf]
        %v2921 = vld [vmem:[%s5 + $0x1c] sm:$0xf]
        %v2922 = vld [vmem:[%s5 + $0x20] sm:$0xf]
        %v2923 = vld [vmem:[%s5 + $0x24] sm:$0xf]
        %v2924 = vld [vmem:[%s5 + $0x28] sm:$0xf]
        %v2925 = vld [vmem:[%s5 + $0x2c] sm:$0xf]
        %v2926 = vld [vmem:[%s5 + $0x30] sm:$0xf]
        %v2927 = vld [vmem:[%s5 + $0x34] sm:$0xf]
        %v2928 = vld [vmem:[%s5 + $0x38] sm:$0xf]
        %v2929 = vld [vmem:[%s5 + $0x3c] sm:$0xf]
        %v2930 = vld [vmem:[%s6] sm:$0x1]
        %v2932 = vlaneseq
        %v2933 = vshrl.u32 %v2932, 7
        %v2934 = vsub.s32 0, %v2933
        %v2935 = vrot.slane %v2930, %v2934
        %v2953 = vunpack.c.l.b16 %v2914
        %v2954 = vunpack.c.l.b16 %v2915
        %v2955 = vunpack.c.l.b16 %v2916
        %v2956 = vunpack.c.l.b16 %v2917
        %v2957 = vunpack.c.l.b16 %v2918
        %v2958 = vunpack.c.l.b16 %v2919
        %v2959 = vunpack.c.l.b16 %v2920
        %v2960 = vunpack.c.l.b16 %v2921
        %v2961 = vunpack.c.l.b16 %v2922
        %v2962 = vunpack.c.l.b16 %v2923
        %v2963 = vunpack.c.l.b16 %v2924
        %v2964 = vunpack.c.l.b16 %v2925
        %v2965 = vunpack.c.l.b16 %v2926
        %v2966 = vunpack.c.l.b16 %v2927
        %v2967 = vunpack.c.l.b16 %v2928
        %v2968 = vunpack.c.l.b16 %v2929
        %v2969 = vpack.c.b16 %v2954, %v2953
        %v2970 = vpack.c.b16 %v2956, %v2955
        %v2971 = vpack.c.b16 %v2958, %v2957
        %v2972 = vpack.c.b16 %v2960, %v2959
        %v2973 = vpack.c.b16 %v2962, %v2961
        %v2974 = vpack.c.b16 %v2964, %v2963
        %v2975 = vpack.c.b16 %v2966, %v2965
        %v2976 = vpack.c.b16 %v2968, %v2967
        %2985 = vmatprep.subr.bf16.mxu0 0
        %2986 = vmatpush1.bf16.msra.mxu0 %v2976
        %2987 = vmatprep.subr.bf16.mxu0 0
        %2988 = vmatpush1.bf16.msra.mxu0 %v2975
        %2989 = vmatprep.subr.bf16.mxu0 0
        %2990 = vmatpush1.bf16.msra.mxu0 %v2974
        %2991 = vmatprep.subr.bf16.mxu0 0
        %2992 = vmatpush1.bf16.msra.mxu0 %v2973
        %2993 = vmatprep.subr.bf16.mxu0 0
        %2994 = vmatpush1.bf16.msra.mxu0 %v2972
        %2995 = vmatprep.subr.bf16.mxu0 0
        %2996 = vmatpush1.bf16.msra.mxu0 %v2971
        %2997 = vmatprep.subr.bf16.mxu0 0
        %2998 = vmatpush1.bf16.msra.mxu0 %v2970
        %2999 = vmatprep.subr.bf16.mxu0 0
        %3000 = vmatpush1.bf16.msra.mxu0 %v2969
        %3001 = vmatprep.subr.bf16.mxu0 0
        %3002 = vmatpush2.bf16.msra.mxu0 0
        %3003 = vmatprep.subr.bf16.mxu0 0
        %3004 = vmatpush2.bf16.msra.mxu0 0
        %3005 = vmatprep.subr.bf16.mxu0 0
        %3006 = vmatpush2.bf16.msra.mxu0 0
        %3007 = vmatprep.subr.bf16.mxu0 0
        %3008 = vmatpush2.bf16.msra.mxu0 0
        %3009 = vmatprep.subr.bf16.mxu0 0
        %3010 = vmatpush2.bf16.msra.mxu0 0
        %3011 = vmatprep.subr.bf16.mxu0 0
        %3012 = vmatpush2.bf16.msra.mxu0 0
        %3013 = vmatprep.subr.bf16.mxu0 0
        %3014 = vmatpush2.bf16.msra.mxu0 0
        %3015 = vmatprep.subr.bf16.mxu0 0
        %3016 = vmatpush2.bf16.msra.mxu0 0
        %3017 = vmatprep.mubr.bf16.mxu0 0
        %3018 = vmatmul.mubr.bf16.gmra.mxu0 %v2898
        %v3019 = vpop.f32.mrf.mxu0
        %v3020 = vadd.f32 %v2935, %v3019
        %v3021 = vpop.f32.mrf.mxu0
        %v3022 = vpop.f32.mrf.mxu0
        %v3023 = vadd.f32 %v2935, %v3022
        %v3024 = vpop.f32.mrf.mxu0
        %3025 = vmatprep.mubr.bf16.mxu0 0
        %3026 = vmatmul.mubr.bf16.gmra.mxu0 %v2899
        %v3027 = vpop.f32.mrf.mxu0
        %v3028 = vadd.f32 %v2935, %v3027
        %v3029 = vpop.f32.mrf.mxu0
        %v3030 = vpop.f32.mrf.mxu0
        %v3031 = vadd.f32 %v2935, %v3030
        %v3032 = vpop.f32.mrf.mxu0
        %3033 = vmatprep.mubr.bf16.mxu0 0
        %3034 = vmatmul.mubr.bf16.gmra.mxu0 %v2900
        %v3035 = vpop.f32.mrf.mxu0
        %v3036 = vadd.f32 %v2935, %v3035
        %v3037 = vpop.f32.mrf.mxu0
        %v3038 = vpop.f32.mrf.mxu0
        %v3039 = vadd.f32 %v2935, %v3038
        %v3040 = vpop.f32.mrf.mxu0
        %3041 = vmatprep.mubr.bf16.mxu0 0
        %3042 = vmatmul.mubr.bf16.gmra.mxu0 %v2901
        %v3043 = vpop.f32.mrf.mxu0
        %v3044 = vadd.f32 %v2935, %v3043
        %v3045 = vpop.f32.mrf.mxu0
        %v3046 = vpop.f32.mrf.mxu0
        %v3047 = vadd.f32 %v2935, %v3046
        %v3048 = vpop.f32.mrf.mxu0
        %3049 = vmatprep.mubr.bf16.mxu0 0
        %3050 = vmatmul.mubr.bf16.gmra.mxu0 %v2902
        %v3051 = vpop.f32.mrf.mxu0
        %v3052 = vadd.f32 %v2935, %v3051
        %v3053 = vpop.f32.mrf.mxu0
        %v3054 = vpop.f32.mrf.mxu0
        %v3055 = vadd.f32 %v2935, %v3054
        %v3056 = vpop.f32.mrf.mxu0
        %3057 = vmatprep.mubr.bf16.mxu0 0
        %3058 = vmatmul.mubr.bf16.gmra.mxu0 %v2903
        %v3059 = vpop.f32.mrf.mxu0
        %v3060 = vadd.f32 %v2935, %v3059
        %v3061 = vpop.f32.mrf.mxu0
        %v3062 = vpop.f32.mrf.mxu0
        %v3063 = vadd.f32 %v2935, %v3062
        %v3064 = vpop.f32.mrf.mxu0
        %3065 = vmatprep.mubr.bf16.mxu0 0
        %3066 = vmatmul.mubr.bf16.gmra.mxu0 %v2904
        %v3067 = vpop.f32.mrf.mxu0
        %v3068 = vadd.f32 %v2935, %v3067
        %v3069 = vpop.f32.mrf.mxu0
        %v3070 = vpop.f32.mrf.mxu0
        %v3071 = vadd.f32 %v2935, %v3070
        %v3072 = vpop.f32.mrf.mxu0
        %3073 = vmatprep.mubr.bf16.mxu0 0
        %3074 = vmatmul.mubr.bf16.gmra.mxu0 %v2905
        %v3075 = vpop.f32.mrf.mxu0
        %v3076 = vadd.f32 %v2935, %v3075
        %v3077 = vpop.f32.mrf.mxu0
        %v3078 = vpop.f32.mrf.mxu0
        %v3079 = vadd.f32 %v2935, %v3078
        %v3080 = vpop.f32.mrf.mxu0
        %3081 = vmatprep.mubr.bf16.mxu0 0
        %3082 = vmatmul.mubr.bf16.gmra.mxu0 %v2906
        %v3083 = vpop.f32.mrf.mxu0
        %v3084 = vadd.f32 %v2935, %v3083
        %v3085 = vpop.f32.mrf.mxu0
        %v3086 = vpop.f32.mrf.mxu0
        %v3087 = vadd.f32 %v2935, %v3086
        %v3088 = vpop.f32.mrf.mxu0
        %3089 = vmatprep.mubr.bf16.mxu0 0
        %3090 = vmatmul.mubr.bf16.gmra.mxu0 %v2907
        %v3091 = vpop.f32.mrf.mxu0
        %v3092 = vadd.f32 %v2935, %v3091
        %v3093 = vpop.f32.mrf.mxu0
        %v3094 = vpop.f32.mrf.mxu0
        %v3095 = vadd.f32 %v2935, %v3094
        %v3096 = vpop.f32.mrf.mxu0
        %3097 = vmatprep.mubr.bf16.mxu0 0
        %3098 = vmatmul.mubr.bf16.gmra.mxu0 %v2908
        %v3099 = vpop.f32.mrf.mxu0
        %v3100 = vadd.f32 %v2935, %v3099
        %v3101 = vpop.f32.mrf.mxu0
        %v3102 = vpop.f32.mrf.mxu0
        %v3103 = vadd.f32 %v2935, %v3102
        %v3104 = vpop.f32.mrf.mxu0
        %3105 = vmatprep.mubr.bf16.mxu0 0
        %3106 = vmatmul.mubr.bf16.gmra.mxu0 %v2909
        %v3107 = vpop.f32.mrf.mxu0
        %v3108 = vadd.f32 %v2935, %v3107
        %v3109 = vpop.f32.mrf.mxu0
        %v3110 = vpop.f32.mrf.mxu0
        %v3111 = vadd.f32 %v2935, %v3110
        %v3112 = vpop.f32.mrf.mxu0
        %3113 = vmatprep.mubr.bf16.mxu0 0
        %3114 = vmatmul.mubr.bf16.gmra.mxu0 %v2910
        %v3115 = vpop.f32.mrf.mxu0
        %v3116 = vadd.f32 %v2935, %v3115
        %v3117 = vpop.f32.mrf.mxu0
        %v3118 = vpop.f32.mrf.mxu0
        %v3119 = vadd.f32 %v2935, %v3118
        %v3120 = vpop.f32.mrf.mxu0
        %3121 = vmatprep.mubr.bf16.mxu0 0
        %3122 = vmatmul.mubr.bf16.gmra.mxu0 %v2911
        %v3123 = vpop.f32.mrf.mxu0
        %v3124 = vadd.f32 %v2935, %v3123
        %v3125 = vpop.f32.mrf.mxu0
        %v3126 = vpop.f32.mrf.mxu0
        %v3127 = vadd.f32 %v2935, %v3126
        %v3128 = vpop.f32.mrf.mxu0
        %3129 = vmatprep.mubr.bf16.mxu0 0
        %3130 = vmatmul.mubr.bf16.gmra.mxu0 %v2912
        %v3131 = vpop.f32.mrf.mxu0
        %v3132 = vadd.f32 %v2935, %v3131
        %v3133 = vpop.f32.mrf.mxu0
        %v3134 = vpop.f32.mrf.mxu0
        %v3135 = vadd.f32 %v2935, %v3134
        %v3136 = vpop.f32.mrf.mxu0
        %3137 = vmatprep.mubr.bf16.mxu0 0
        %3138 = vmatmul.mubr.bf16.gmra.mxu0 %v2913
        %v3139 = vpop.f32.mrf.mxu0
        %v3140 = vadd.f32 %v2935, %v3139
        %v3141 = vpop.f32.mrf.mxu0
        %v3142 = vpop.f32.mrf.mxu0
        %v3143 = vadd.f32 %v2935, %v3142
        %v3144 = vpop.f32.mrf.mxu0
        %3145 = vdwg.mxu0
        %v3146 = vmax.f32 %v3020, 0.0
        %v3147 = vmax.f32 %v3023, 0.0
        %v3148 = vmax.f32 %v3028, 0.0
        %v3149 = vmax.f32 %v3031, 0.0
        %v3150 = vmax.f32 %v3036, 0.0
        %v3151 = vmax.f32 %v3039, 0.0
        %v3152 = vmax.f32 %v3044, 0.0
        %v3153 = vmax.f32 %v3047, 0.0
        %v3154 = vmax.f32 %v3052, 0.0
        %v3155 = vmax.f32 %v3055, 0.0
        %v3156 = vmax.f32 %v3060, 0.0
        %v3157 = vmax.f32 %v3063, 0.0
        %v3158 = vmax.f32 %v3068, 0.0
        %v3159 = vmax.f32 %v3071, 0.0
        %v3160 = vmax.f32 %v3076, 0.0
        %v3161 = vmax.f32 %v3079, 0.0
        %v3162 = vmax.f32 %v3084, 0.0
        %v3163 = vmax.f32 %v3087, 0.0
        %v3164 = vmax.f32 %v3092, 0.0
        %v3165 = vmax.f32 %v3095, 0.0
        %v3166 = vmax.f32 %v3100, 0.0
        %v3167 = vmax.f32 %v3103, 0.0
        %v3168 = vmax.f32 %v3108, 0.0
        %v3169 = vmax.f32 %v3111, 0.0
        %v3170 = vmax.f32 %v3116, 0.0
        %v3171 = vmax.f32 %v3119, 0.0
        %v3172 = vmax.f32 %v3124, 0.0
        %v3173 = vmax.f32 %v3127, 0.0
        %v3174 = vmax.f32 %v3132, 0.0
        %v3175 = vmax.f32 %v3135, 0.0
        %v3176 = vmax.f32 %v3140, 0.0
        %v3177 = vmax.f32 %v3143, 0.0
        %v3178 = vpack.c.bf16 %v3147, %v3146
        %v3179 = vpack.c.bf16 %v3149, %v3148
        %v3180 = vpack.c.bf16 %v3151, %v3150
        %v3181 = vpack.c.bf16 %v3153, %v3152
        %v3182 = vpack.c.bf16 %v3155, %v3154
        %v3183 = vpack.c.bf16 %v3157, %v3156
        %v3184 = vpack.c.bf16 %v3159, %v3158
        %v3185 = vpack.c.bf16 %v3161, %v3160
        %v3186 = vpack.c.bf16 %v3163, %v3162
        %v3187 = vpack.c.bf16 %v3165, %v3164
        %v3188 = vpack.c.bf16 %v3167, %v3166
        %v3189 = vpack.c.bf16 %v3169, %v3168
        %v3190 = vpack.c.bf16 %v3171, %v3170
        %v3191 = vpack.c.bf16 %v3173, %v3172
        %v3192 = vpack.c.bf16 %v3175, %v3174
        %v3193 = vpack.c.bf16 %v3177, %v3176
        %v3194 = vld [vmem:[%s7] sm:$0xf]
        %v3195 = vld [vmem:[%s7 + $0x4] sm:$0xf]
        %v3196 = vld [vmem:[%s7 + $0x8] sm:$0xf]
        %v3197 = vld [vmem:[%s7 + $0xc] sm:$0xf]
        %v3198 = vld [vmem:[%s7 + $0x10] sm:$0xf]
        %v3199 = vld [vmem:[%s7 + $0x14] sm:$0xf]
        %v3200 = vld [vmem:[%s7 + $0x18] sm:$0xf]
        %v3201 = vld [vmem:[%s7 + $0x1c] sm:$0xf]
        %v3202 = vld [vmem:[%s7 + $0x20] sm:$0xf]
        %v3203 = vld [vmem:[%s7 + $0x24] sm:$0xf]
        %v3204 = vld [vmem:[%s7 + $0x28] sm:$0xf]
        %v3205 = vld [vmem:[%s7 + $0x2c] sm:$0xf]
        %v3206 = vld [vmem:[%s7 + $0x30] sm:$0xf]
        %v3207 = vld [vmem:[%s7 + $0x34] sm:$0xf]
        %v3208 = vld [vmem:[%s7 + $0x38] sm:$0xf]
        %v3209 = vld [vmem:[%s7 + $0x3c] sm:$0xf]
        %v3210 = vld [vmem:[%s8] sm:$0x1]
        %v3212 = vlaneseq
        %v3213 = vshrl.u32 %v3212, 7
        %v3214 = vsub.s32 0, %v3213
        %v3215 = vrot.slane %v3210, %v3214
        %v3233 = vunpack.c.l.b16 %v3194
        %v3234 = vunpack.c.l.b16 %v3195
        %v3235 = vunpack.c.l.b16 %v3196
        %v3236 = vunpack.c.l.b16 %v3197
        %v3237 = vunpack.c.l.b16 %v3198
        %v3238 = vunpack.c.l.b16 %v3199
        %v3239 = vunpack.c.l.b16 %v3200
        %v3240 = vunpack.c.l.b16 %v3201
        %v3241 = vunpack.c.l.b16 %v3202
        %v3242 = vunpack.c.l.b16 %v3203
        %v3243 = vunpack.c.l.b16 %v3204
        %v3244 = vunpack.c.l.b16 %v3205
        %v3245 = vunpack.c.l.b16 %v3206
        %v3246 = vunpack.c.l.b16 %v3207
        %v3247 = vunpack.c.l.b16 %v3208
        %v3248 = vunpack.c.l.b16 %v3209
        %v3249 = vpack.c.b16 %v3234, %v3233
        %v3250 = vpack.c.b16 %v3236, %v3235
        %v3251 = vpack.c.b16 %v3238, %v3237
        %v3252 = vpack.c.b16 %v3240, %v3239
        %v3253 = vpack.c.b16 %v3242, %v3241
        %v3254 = vpack.c.b16 %v3244, %v3243
        %v3255 = vpack.c.b16 %v3246, %v3245
        %v3256 = vpack.c.b16 %v3248, %v3247
        %3265 = vmatprep.subr.bf16.mxu0 0
        %3266 = vmatpush1.bf16.msra.mxu0 %v3256
        %3267 = vmatprep.subr.bf16.mxu0 0
        %3268 = vmatpush1.bf16.msra.mxu0 %v3255
        %3269 = vmatprep.subr.bf16.mxu0 0
        %3270 = vmatpush1.bf16.msra.mxu0 %v3254
        %3271 = vmatprep.subr.bf16.mxu0 0
        %3272 = vmatpush1.bf16.msra.mxu0 %v3253
        %3273 = vmatprep.subr.bf16.mxu0 0
        %3274 = vmatpush1.bf16.msra.mxu0 %v3252
        %3275 = vmatprep.subr.bf16.mxu0 0
        %3276 = vmatpush1.bf16.msra.mxu0 %v3251
        %3277 = vmatprep.subr.bf16.mxu0 0
        %3278 = vmatpush1.bf16.msra.mxu0 %v3250
        %3279 = vmatprep.subr.bf16.mxu0 0
        %3280 = vmatpush1.bf16.msra.mxu0 %v3249
        %3281 = vmatprep.subr.bf16.mxu0 0
        %3282 = vmatpush2.bf16.msra.mxu0 0
        %3283 = vmatprep.subr.bf16.mxu0 0
        %3284 = vmatpush2.bf16.msra.mxu0 0
        %3285 = vmatprep.subr.bf16.mxu0 0
        %3286 = vmatpush2.bf16.msra.mxu0 0
        %3287 = vmatprep.subr.bf16.mxu0 0
        %3288 = vmatpush2.bf16.msra.mxu0 0
        %3289 = vmatprep.subr.bf16.mxu0 0
        %3290 = vmatpush2.bf16.msra.mxu0 0
        %3291 = vmatprep.subr.bf16.mxu0 0
        %3292 = vmatpush2.bf16.msra.mxu0 0
        %3293 = vmatprep.subr.bf16.mxu0 0
        %3294 = vmatpush2.bf16.msra.mxu0 0
        %3295 = vmatprep.subr.bf16.mxu0 0
        %3296 = vmatpush2.bf16.msra.mxu0 0
        %3297 = vmatprep.mubr.bf16.mxu0 0
        %3298 = vmatmul.mubr.bf16.gmra.mxu0 %v3178
        %v3299 = vpop.f32.mrf.mxu0
        %v3300 = vadd.f32 %v3215, %v3299
        %v3301 = vpop.f32.mrf.mxu0
        %v3302 = vpop.f32.mrf.mxu0
        %v3303 = vadd.f32 %v3215, %v3302
        %v3304 = vpop.f32.mrf.mxu0
        %3305 = vmatprep.mubr.bf16.mxu0 0
        %3306 = vmatmul.mubr.bf16.gmra.mxu0 %v3179
        %v3307 = vpop.f32.mrf.mxu0
        %v3308 = vadd.f32 %v3215, %v3307
        %v3309 = vpop.f32.mrf.mxu0
        %v3310 = vpop.f32.mrf.mxu0
        %v3311 = vadd.f32 %v3215, %v3310
        %v3312 = vpop.f32.mrf.mxu0
        %3313 = vmatprep.mubr.bf16.mxu0 0
        %3314 = vmatmul.mubr.bf16.gmra.mxu0 %v3180
        %v3315 = vpop.f32.mrf.mxu0
        %v3316 = vadd.f32 %v3215, %v3315
        %v3317 = vpop.f32.mrf.mxu0
        %v3318 = vpop.f32.mrf.mxu0
        %v3319 = vadd.f32 %v3215, %v3318
        %v3320 = vpop.f32.mrf.mxu0
        %3321 = vmatprep.mubr.bf16.mxu0 0
        %3322 = vmatmul.mubr.bf16.gmra.mxu0 %v3181
        %v3323 = vpop.f32.mrf.mxu0
        %v3324 = vadd.f32 %v3215, %v3323
        %v3325 = vpop.f32.mrf.mxu0
        %v3326 = vpop.f32.mrf.mxu0
        %v3327 = vadd.f32 %v3215, %v3326
        %v3328 = vpop.f32.mrf.mxu0
        %3329 = vmatprep.mubr.bf16.mxu0 0
        %3330 = vmatmul.mubr.bf16.gmra.mxu0 %v3182
        %v3331 = vpop.f32.mrf.mxu0
        %v3332 = vadd.f32 %v3215, %v3331
        %v3333 = vpop.f32.mrf.mxu0
        %v3334 = vpop.f32.mrf.mxu0
        %v3335 = vadd.f32 %v3215, %v3334
        %v3336 = vpop.f32.mrf.mxu0
        %3337 = vmatprep.mubr.bf16.mxu0 0
        %3338 = vmatmul.mubr.bf16.gmra.mxu0 %v3183
        %v3339 = vpop.f32.mrf.mxu0
        %v3340 = vadd.f32 %v3215, %v3339
        %v3341 = vpop.f32.mrf.mxu0
        %v3342 = vpop.f32.mrf.mxu0
        %v3343 = vadd.f32 %v3215, %v3342
        %v3344 = vpop.f32.mrf.mxu0
        %3345 = vmatprep.mubr.bf16.mxu0 0
        %3346 = vmatmul.mubr.bf16.gmra.mxu0 %v3184
        %v3347 = vpop.f32.mrf.mxu0
        %v3348 = vadd.f32 %v3215, %v3347
        %v3349 = vpop.f32.mrf.mxu0
        %v3350 = vpop.f32.mrf.mxu0
        %v3351 = vadd.f32 %v3215, %v3350
        %v3352 = vpop.f32.mrf.mxu0
        %3353 = vmatprep.mubr.bf16.mxu0 0
        %3354 = vmatmul.mubr.bf16.gmra.mxu0 %v3185
        %v3355 = vpop.f32.mrf.mxu0
        %v3356 = vadd.f32 %v3215, %v3355
        %v3357 = vpop.f32.mrf.mxu0
        %v3358 = vpop.f32.mrf.mxu0
        %v3359 = vadd.f32 %v3215, %v3358
        %v3360 = vpop.f32.mrf.mxu0
        %3361 = vmatprep.mubr.bf16.mxu0 0
        %3362 = vmatmul.mubr.bf16.gmra.mxu0 %v3186
        %v3363 = vpop.f32.mrf.mxu0
        %v3364 = vadd.f32 %v3215, %v3363
        %v3365 = vpop.f32.mrf.mxu0
        %v3366 = vpop.f32.mrf.mxu0
        %v3367 = vadd.f32 %v3215, %v3366
        %v3368 = vpop.f32.mrf.mxu0
        %3369 = vmatprep.mubr.bf16.mxu0 0
        %3370 = vmatmul.mubr.bf16.gmra.mxu0 %v3187
        %v3371 = vpop.f32.mrf.mxu0
        %v3372 = vadd.f32 %v3215, %v3371
        %v3373 = vpop.f32.mrf.mxu0
        %v3374 = vpop.f32.mrf.mxu0
        %v3375 = vadd.f32 %v3215, %v3374
        %v3376 = vpop.f32.mrf.mxu0
        %3377 = vmatprep.mubr.bf16.mxu0 0
        %3378 = vmatmul.mubr.bf16.gmra.mxu0 %v3188
        %v3379 = vpop.f32.mrf.mxu0
        %v3380 = vadd.f32 %v3215, %v3379
        %v3381 = vpop.f32.mrf.mxu0
        %v3382 = vpop.f32.mrf.mxu0
        %v3383 = vadd.f32 %v3215, %v3382
        %v3384 = vpop.f32.mrf.mxu0
        %3385 = vmatprep.mubr.bf16.mxu0 0
        %3386 = vmatmul.mubr.bf16.gmra.mxu0 %v3189
        %v3387 = vpop.f32.mrf.mxu0
        %v3388 = vadd.f32 %v3215, %v3387
        %v3389 = vpop.f32.mrf.mxu0
        %v3390 = vpop.f32.mrf.mxu0
        %v3391 = vadd.f32 %v3215, %v3390
        %v3392 = vpop.f32.mrf.mxu0
        %3393 = vmatprep.mubr.bf16.mxu0 0
        %3394 = vmatmul.mubr.bf16.gmra.mxu0 %v3190
        %v3395 = vpop.f32.mrf.mxu0
        %v3396 = vadd.f32 %v3215, %v3395
        %v3397 = vpop.f32.mrf.mxu0
        %v3398 = vpop.f32.mrf.mxu0
        %v3399 = vadd.f32 %v3215, %v3398
        %v3400 = vpop.f32.mrf.mxu0
        %3401 = vmatprep.mubr.bf16.mxu0 0
        %3402 = vmatmul.mubr.bf16.gmra.mxu0 %v3191
        %v3403 = vpop.f32.mrf.mxu0
        %v3404 = vadd.f32 %v3215, %v3403
        %v3405 = vpop.f32.mrf.mxu0
        %v3406 = vpop.f32.mrf.mxu0
        %v3407 = vadd.f32 %v3215, %v3406
        %v3408 = vpop.f32.mrf.mxu0
        %3409 = vmatprep.mubr.bf16.mxu0 0
        %3410 = vmatmul.mubr.bf16.gmra.mxu0 %v3192
        %v3411 = vpop.f32.mrf.mxu0
        %v3412 = vadd.f32 %v3215, %v3411
        %v3413 = vpop.f32.mrf.mxu0
        %v3414 = vpop.f32.mrf.mxu0
        %v3415 = vadd.f32 %v3215, %v3414
        %v3416 = vpop.f32.mrf.mxu0
        %3417 = vmatprep.mubr.bf16.mxu0 0
        %3418 = vmatmul.mubr.bf16.gmra.mxu0 %v3193
        %v3419 = vpop.f32.mrf.mxu0
        %v3420 = vadd.f32 %v3215, %v3419
        %v3421 = vpop.f32.mrf.mxu0
        %v3422 = vpop.f32.mrf.mxu0
        %v3423 = vadd.f32 %v3215, %v3422
        %v3424 = vpop.f32.mrf.mxu0
        %3425 = vdwg.mxu0
        %v3426 = vld [vmem:[%s9] sm:$0x1]
        %v3428 = vlaneseq
        %v3429 = vshrl.u32 %v3428, 7
        %v3430 = vsub.s32 0, %v3429
        %v3431 = vrot.slane %v3426, %v3430
        %v3433 = vmul.f32 %v3431, %v3300
        %v3434 = vmul.f32 %v3431, %v3303
        %v3435 = vmul.f32 %v3431, %v3308
        %v3436 = vmul.f32 %v3431, %v3311
        %v3437 = vmul.f32 %v3431, %v3316
        %v3438 = vmul.f32 %v3431, %v3319
        %v3439 = vmul.f32 %v3431, %v3324
        %v3440 = vmul.f32 %v3431, %v3327
        %v3441 = vmul.f32 %v3431, %v3332
        %v3442 = vmul.f32 %v3431, %v3335
        %v3443 = vmul.f32 %v3431, %v3340
        %v3444 = vmul.f32 %v3431, %v3343
        %v3445 = vmul.f32 %v3431, %v3348
        %v3446 = vmul.f32 %v3431, %v3351
        %v3447 = vmul.f32 %v3431, %v3356
        %v3448 = vmul.f32 %v3431, %v3359
        %v3449 = vmul.f32 %v3431, %v3364
        %v3450 = vmul.f32 %v3431, %v3367
        %v3451 = vmul.f32 %v3431, %v3372
        %v3452 = vmul.f32 %v3431, %v3375
        %v3453 = vmul.f32 %v3431, %v3380
        %v3454 = vmul.f32 %v3431, %v3383
        %v3455 = vmul.f32 %v3431, %v3388
        %v3456 = vmul.f32 %v3431, %v3391
        %v3457 = vmul.f32 %v3431, %v3396
        %v3458 = vmul.f32 %v3431, %v3399
        %v3459 = vmul.f32 %v3431, %v3404
        %v3460 = vmul.f32 %v3431, %v3407
        %v3461 = vmul.f32 %v3431, %v3412
        %v3462 = vmul.f32 %v3431, %v3415
        %v3463 = vmul.f32 %v3431, %v3420
        %v3464 = vmul.f32 %v3431, %v3423
        %3465 = vst [vmem:[%s355] sm:$0xff] %v3433
        %3466 = vst [vmem:[%s355 + $0x8] sm:$0xff] %v3434
        %3467 = vst [vmem:[%s355 + $0x10] sm:$0xff] %v3435
        %3468 = vst [vmem:[%s355 + $0x18] sm:$0xff] %v3436
        %3469 = vst [vmem:[%s355 + $0x20] sm:$0xff] %v3437
        %3470 = vst [vmem:[%s355 + $0x28] sm:$0xff] %v3438
        %3471 = vst [vmem:[%s355 + $0x30] sm:$0xff] %v3439
        %3472 = vst [vmem:[%s355 + $0x38] sm:$0xff] %v3440
        %3473 = vst [vmem:[%s355 + $0x40] sm:$0xff] %v3441
        %3474 = vst [vmem:[%s355 + $0x48] sm:$0xff] %v3442
        %3475 = vst [vmem:[%s355 + $0x50] sm:$0xff] %v3443
        %3476 = vst [vmem:[%s355 + $0x58] sm:$0xff] %v3444
        %3477 = vst [vmem:[%s355 + $0x60] sm:$0xff] %v3445
        %3478 = vst [vmem:[%s355 + $0x68] sm:$0xff] %v3446
        %3479 = vst [vmem:[%s355 + $0x70] sm:$0xff] %v3447
        %3480 = vst [vmem:[%s355 + $0x78] sm:$0xff] %v3448
        %3481 = vst [vmem:[%s355 + $0x80] sm:$0xff] %v3449
        %3482 = vst [vmem:[%s355 + $0x88] sm:$0xff] %v3450
        %3483 = vst [vmem:[%s355 + $0x90] sm:$0xff] %v3451
        %3484 = vst [vmem:[%s355 + $0x98] sm:$0xff] %v3452
        %3485 = vst [vmem:[%s355 + $0xa0] sm:$0xff] %v3453
        %3486 = vst [vmem:[%s355 + $0xa8] sm:$0xff] %v3454
        %3487 = vst [vmem:[%s355 + $0xb0] sm:$0xff] %v3455
        %3488 = vst [vmem:[%s355 + $0xb8] sm:$0xff] %v3456
        %3489 = vst [vmem:[%s355 + $0xc0] sm:$0xff] %v3457
        %3490 = vst [vmem:[%s355 + $0xc8] sm:$0xff] %v3458
        %3491 = vst [vmem:[%s355 + $0xd0] sm:$0xff] %v3459
        %3492 = vst [vmem:[%s355 + $0xd8] sm:$0xff] %v3460
        %3493 = vst [vmem:[%s355 + $0xe0] sm:$0xff] %v3461
        %3494 = vst [vmem:[%s355 + $0xe8] sm:$0xff] %v3462
        %3495 = vst [vmem:[%s355 + $0xf0] sm:$0xff] %v3463
        %3496 = vst [vmem:[%s355 + $0xf8] sm:$0xff] %v3464
        %s3497 = sand.u32 %s247, 1
        %s3498 = scalar_lea.sflag [#allocation3], %s3497
        %s3499 = sand.u32 %s247, 1
        %s3500 = smul.addr %s3499, 256
        %s3501 = scalar_lea.vmem [#allocation2], %s3500
        // Predicated region
        $region61: #{tpu_custom_call.1} parent=59 // pred_check
          %p3502 = pneg %p257
        $region62: #{tpu_custom_call.1} parent=59 // pred_check_branch
          %3504 = sbr.rel (%p3502) target = $region64
        $region63: #{tpu_custom_call.1} parent=59 // pred_region
          %s3505 = smul.u32 32, %s24
          %s3507 = ssub.s32 4096, 4096
          %3508 = vsyncadd %s3498, %s3507
          %s3509 = smul.addr %s3505, 128
          %s3510 = scalar_lea.hbm %s10, %s3509
          %s3511 = sshll.u32 %s3501, 4
          %s3512 = int_to_ptr.vmem [resolvable:$true] %s3511
          %3517 = dma.vmem_to_hbm [thread:$0]  %s3512, 4096, %s3510, %s3498, 128, 128, 8
        $region64: #{tpu_custom_call.1} parent=59 // pred_fallthru
          _
      $region60: #{tpu_custom_call.1} parent=5 // pred_fallthru
        _
      %p3518 = scmp.le.s32.totalorder 2, %s19
      // Predicated region
      $region65: #{tpu_custom_call.1} parent=5 // pred_check
        %p3519 = pneg %p3518
      $region66: #{tpu_custom_call.1} parent=5 // pred_check_branch
        %3521 = sbr.rel (%p3519) target = $region68
      $region67: #{tpu_custom_call.1} parent=5 // pred_region
        %s3522 = ssub.s32 %s19, 2
        // Predicated region
        $region69: #{tpu_custom_call.1} parent=67 // pred_check
          %p3523 = pneg %p263
        $region70: #{tpu_custom_call.1} parent=67 // pred_check_branch
          %3525 = sbr.rel (%p3523) target = $region72
        $region71: #{tpu_custom_call.1} parent=67 // pred_region
          %s3526 = sand.u32 %s248, 1
          %s3527 = scalar_lea.sflag [#allocation3], %s3526
          %s3528 = sand.u32 %s248, 1
          %s3529 = smul.addr %s3528, 256
          %s3530 = scalar_lea.vmem [#allocation2], %s3529
          %3531 = dma.done %s3527, 4096
        $region72: #{tpu_custom_call.1} parent=67 // pred_fallthru
          _
      $region68: #{tpu_custom_call.1} parent=5 // pred_fallthru
        _
    $region6: #{tpu_custom_call.1} parent=1 // loop_footer
      %s23 = sadd.s32 1, %s19
    $region7: #{tpu_custom_call.1} parent=1 // loop_footer_branch
      %18 = sbr.rel target = $region3
    $region8: #{tpu_custom_call.1} parent=1 // loop_exit
      _
    %3532 = vsyncpa [#allocation3], 1
    %s3533 = scalar_lea.sflag [#allocation3], 1
    %3534 = vsyncpa %s3533, 1

</llo_original>
